<compile_context>
chip_gen: v7x
topology: tpu7x:2x2x1
jax: 0.10.0
libtpu: 0.0.40
codegen_flags: <defaults>
</compile_context>

<pallas_src>
import functools

import jax
import jax.numpy as jnp
from jax import lax
from jax.experimental import pallas as pl
from jax.experimental.pallas import tpu as pltpu


# ----------------------------- Pallas kernels ------------------------------

def _attn_kernel(front_ref, cross_ref, hat_ref,
                 wq_ref, bq_ref, wk_ref, bk_ref, wv_ref, bv_ref,
                 t_ref, s_ref):
    """CrossViewTransformer attention core for one batch element.

    front/cross/hat: (1, HW, C) f32 pixel rows (key / query / value sources).
    Outputs: T (1, HW, C) gathered value rows, S (1, 1, HW) max energies.
    """
    front = front_ref[0]            # key source   (front_x)
    cross = cross_ref[0]            # query source (cross_x)
    hat = hat_ref[0]                # value source (front_x_hat)

    q = jnp.dot(cross, wq_ref[...], preferred_element_type=jnp.float32) + bq_ref[...]
    k = jnp.dot(front, wk_ref[...], preferred_element_type=jnp.float32) + bk_ref[...]
    v = jnp.dot(hat, wv_ref[...], preferred_element_type=jnp.float32) + bv_ref[...]

    # energy[i, j] = <key at pixel i, query at pixel j>
    energy = lax.dot_general(k, q, (((1,), (1,)), ((), ())),
                             preferred_element_type=jnp.float32)          # (HW, HW)
    mx = jnp.max(energy, axis=0, keepdims=True)                           # (1, HW)
    row_ids = lax.broadcasted_iota(jnp.int32, energy.shape, 0)
    # First index (over i) attaining the max.
    # TODO(synk): torch.max tie-breaking on exact energy ties is backend-defined;
    # we deterministically pick the lowest index.
    first = jnp.min(jnp.where(energy == mx, row_ids, energy.shape[0]),
                    axis=0, keepdims=True)                                # (1, HW)
    onehot = (row_ids == first).astype(jnp.float32)                       # (HW_i, HW_j)
    # T[j, c] = v[argmax_i energy[i, j], c] == (onehot^T @ v)[j, c]
    t = lax.dot_general(onehot, v, (((0,), (0,)), ((), ())),
                        preferred_element_type=jnp.float32)               # (HW, C)

    t_ref[0] = t
    s_ref[0] = mx


def _fconv_kernel(xs_ref, w_ref, b_ref, cross_ref, s_ref, o_ref, *, rows_out, wt):
    """3x3 f_conv + `* S` + `+ cross_x` residual for one batch element.

    xs_ref:    (1, 3, (R+2)*wt, 2C) bf16  column-shifted, row-flattened copies
                                          of the zero-padded concat image.
    w_ref:     (9, 2C, C) bf16            3x3 taps of the conv weight (HWIO).
    b_ref:     (1, C) f32
    cross_ref: (1, R*wt, C) f32           residual term (cross_x rows).
    s_ref:     (1, R*wt, 1) f32           per-pixel attention scale S.
    o_ref:     (1, R*wt, C) f32           lane-dense flattened output.

    Tap (dy, dx) of all output rows is the contiguous, tile-aligned window
    xs_ref[0, dx, dy*wt : dy*wt + rows_out, :]  (wt is a multiple of 16).
    """
    acc = None
    for dy in range(3):
        for dx in range(3):
            lhs = xs_ref[0, dx, pl.ds(dy * wt, rows_out), :]
            part = jnp.dot(lhs, w_ref[3 * dy + dx],
                           preferred_element_type=jnp.float32)
            acc = part if acc is None else acc + part
    fr = acc + b_ref[...]
    o_ref[0] = cross_ref[0] + fr * s_ref[0]


# ----------------------------- kernel wrappers ------------------------------

def attention_pallas(front_rows, cross_rows, hat_rows, p):
    """Per-batch fused q/k/v projection + energy + max/argmax + value gather."""
    B, HW, C = front_rows.shape
    Cq = p["q_w"].shape[1]
    fb = lambda a, d: a.reshape(1, d).astype(jnp.float32)
    t, s = pl.pallas_call(
        _attn_kernel,
        out_shape=(jax.ShapeDtypeStruct((B, HW, C), jnp.float32),
                   jax.ShapeDtypeStruct((B, 1, HW), jnp.float32)),
        grid_spec=pltpu.PrefetchScalarGridSpec(
            num_scalar_prefetch=0, grid=(B,),
            in_specs=[
                pl.BlockSpec((1, HW, C), lambda b: (b, 0, 0)),
                pl.BlockSpec((1, HW, C), lambda b: (b, 0, 0)),
                pl.BlockSpec((1, HW, C), lambda b: (b, 0, 0)),
                pl.BlockSpec((C, Cq), lambda b: (0, 0)),
                pl.BlockSpec((1, Cq), lambda b: (0, 0)),
                pl.BlockSpec((C, Cq), lambda b: (0, 0)),
                pl.BlockSpec((1, Cq), lambda b: (0, 0)),
                pl.BlockSpec((C, C), lambda b: (0, 0)),
                pl.BlockSpec((1, C), lambda b: (0, 0)),
            ],
            out_specs=[pl.BlockSpec((1, HW, C), lambda b: (b, 0, 0)),
                       pl.BlockSpec((1, 1, HW), lambda b: (b, 0, 0))]),
        compiler_params=pltpu.CompilerParams(dimension_semantics=("parallel",)),
    )(front_rows.astype(jnp.float32),
      cross_rows.astype(jnp.float32),
      hat_rows.astype(jnp.float32),
      p["q_w"].astype(jnp.float32), fb(p["q_b"], Cq),
      p["k_w"].astype(jnp.float32), fb(p["k_b"], Cq),
      p["v_w"].astype(jnp.float32), fb(p["v_b"], C))
    return t, s


def fconv_scale_residual_pallas(cross_img, t_img, s_img, w_hwio, bias):
    """f_conv(concat(cross, T)) * S + cross, fused; images are (B, R, Ccol, ·)."""
    B, R, Ccol, C = cross_img.shape
    C2 = 2 * C
    # Columns rounded up to the bf16 sublane tile (16) so every in-kernel tap
    # window is tile aligned; extra columns are garbage and sliced off.
    wt = ((Ccol + 15) // 16) * 16
    rows_in = (R + 2) * wt
    rows_out = R * wt

    cat = jnp.concatenate([cross_img, t_img], axis=-1).astype(jnp.bfloat16)
    xp = jnp.pad(cat, ((0, 0), (1, 1), (1, 1), (0, 0)))           # conv zero pad = 1
    xp = jnp.pad(xp, ((0, 0), (0, 0), (0, wt - Ccol), (0, 0)))    # cols -> wt + 2
    # Three column-shifted copies with rows flattened: (B, 3, (R+2)*wt, 2C).
    xs = jnp.stack([xp[:, :, dx:dx + wt, :] for dx in range(3)], axis=1)
    xs = xs.reshape(B, 3, rows_in, C2)

    w9 = w_hwio.reshape(9, C2, C).astype(jnp.bfloat16)
    b2 = bias.reshape(1, C).astype(jnp.float32)
    crs = jnp.pad(cross_img, ((0, 0), (0, 0), (0, wt - Ccol), (0, 0)))
    crs = crs.reshape(B, rows_out, C).astype(jnp.float32)
    sss = jnp.pad(s_img, ((0, 0), (0, 0), (0, wt - Ccol), (0, 0)))
    sss = sss.reshape(B, rows_out, 1).astype(jnp.float32)

    out = pl.pallas_call(
        functools.partial(_fconv_kernel, rows_out=rows_out, wt=wt),
        out_shape=jax.ShapeDtypeStruct((B, rows_out, C), jnp.float32),
        grid_spec=pltpu.PrefetchScalarGridSpec(
            num_scalar_prefetch=0, grid=(B,),
            in_specs=[
                pl.BlockSpec((1, 3, rows_in, C2), lambda b: (b, 0, 0, 0)),
                pl.BlockSpec((9, C2, C), lambda b: (0, 0, 0)),
                pl.BlockSpec((1, C), lambda b: (0, 0)),
                pl.BlockSpec((1, rows_out, C), lambda b: (b, 0, 0)),
                pl.BlockSpec((1, rows_out, 1), lambda b: (b, 0, 0)),
            ],
            out_specs=pl.BlockSpec((1, rows_out, C), lambda b: (b, 0, 0))),
        compiler_params=pltpu.CompilerParams(dimension_semantics=("parallel",)),
    )(xs, w9, b2, crs, sss)
    out = out.reshape(B, R, wt, C)[:, :, :Ccol, :]
    return out


# --------------------------------- forward ----------------------------------

def forward_with_aux(params, front_x, cross_x, front_x_hat):
    """CrossViewTransformer.forward on NCHW (B, C, W, H) inputs; returns aux too."""
    B, C, W, H = front_x.shape
    HW = W * H
    rows = lambda a: jnp.transpose(a, (0, 2, 3, 1)).reshape(B, HW, C).astype(jnp.float32)
    cross_rows = rows(cross_x)
    T, S = attention_pallas(rows(front_x), cross_rows, rows(front_x_hat), params)
    out_img = fconv_scale_residual_pallas(
        cross_rows.reshape(B, W, H, C), T.reshape(B, W, H, C),
        S.reshape(B, W, H, 1), params["f_w"], params["f_b"])
    out = jnp.transpose(out_img, (0, 3, 1, 2))                  # back to NCHW
    return out, T, S


def cross_view_transformer(params, front_x, cross_x, front_x_hat):
    return forward_with_aux(params, front_x, cross_x, front_x_hat)[0]


# ------------------------------- parameters ---------------------------------

def init_params(in_dim=128, seed=0):
    key = jax.random.PRNGKey(seed)
    ks = jax.random.split(key, 8)
    cq = in_dim // 8

    def w(k, shape, fan_in):
        return jax.random.normal(k, shape, jnp.float32) / jnp.sqrt(float(fan_in))

    return {
        # 1x1 convs stored as (Cin, Cout) matmul weights.
        "q_w": w(ks[0], (in_dim, cq), in_dim),
        "q_b": 0.01 * jax.random.normal(ks[1], (cq,), jnp.float32),
        "k_w": w(ks[2], (in_dim, cq), in_dim),
        "k_b": 0.01 * jax.random.normal(ks[3], (cq,), jnp.float32),
        "v_w": w(ks[4], (in_dim, in_dim), in_dim),
        "v_b": 0.01 * jax.random.normal(ks[5], (in_dim,), jnp.float32),
        # f_conv stored HWIO (3, 3, 2C, C).
        "f_w": w(ks[6], (3, 3, 2 * in_dim, in_dim), 9 * 2 * in_dim),
        "f_b": 0.01 * jax.random.normal(ks[7], (in_dim,), jnp.float32),
    }


# --------------------------- pure-JAX references -----------------------------

def _ref_attention(params, front_x, cross_x, front_x_hat):
    """Reference value projection and max-energy map (f32, XLA)."""
    B, C, W, H = front_x.shape
    HW = W * H
    hi = lax.Precision.HIGHEST
    rows = lambda a: jnp.transpose(a, (0, 2, 3, 1)).reshape(B, HW, C)
    q = jnp.einsum("bpc,cd->bpd", rows(cross_x), params["q_w"], precision=hi) + params["q_b"]
    k = jnp.einsum("bpc,cd->bpd", rows(front_x), params["k_w"], precision=hi) + params["k_b"]
    v = jnp.einsum("bpc,cd->bpd", rows(front_x_hat), params["v_w"], precision=hi) + params["v_b"]
    energy = jnp.einsum("bic,bjc->bij", k, q, precision=hi)        # (B, HW_i, HW_j)
    return v, jnp.max(energy, axis=1)                              # (B, HW, C), (B, HW)


def _ref_fconv_stage(params, cross_x, T, S):
    """Reference f_conv / scale / residual stage, fed the kernel's own T and S."""
    B, C, W, H = cross_x.shape
    cross_img = jnp.transpose(cross_x, (0, 2, 3, 1))               # (B, W, H, C)
    cat = jnp.concatenate([cross_img, T.reshape(B, W, H, C)], axis=-1)
    fr = lax.conv_general_dilated(
        cat, params["f_w"], (1, 1), "SAME",
        dimension_numbers=("NHWC", "HWIO", "NHWC"),
        precision=lax.Precision.HIGHEST) + params["f_b"]
    out = cross_img + fr * S.reshape(B, W, H, 1)
    return jnp.transpose(out, (0, 3, 1, 2))


# ----------------------------------- main ------------------------------------

if __name__ == "__main__":
    B, C, W, H = 2, 128, 8, 8
    key = jax.random.PRNGKey(0)
    kf, kc, kh = jax.random.split(key, 3)
    front_x = jax.random.normal(kf, (B, C, W, H), jnp.float32)
    cross_x = jax.random.normal(kc, (B, C, W, H), jnp.float32)
    front_x_hat = jax.random.normal(kh, (B, C, W, H), jnp.float32)
    params = init_params(in_dim=C, seed=0)

    fwd = jax.jit(forward_with_aux)
    out, T, S = jax.block_until_ready(fwd(params, front_x, cross_x, front_x_hat))

    assert out.shape == (B, C, W, H)
    assert T.shape == (B, W * H, C) and S.shape == (B, 1, W * H)
    assert bool(jnp.all(jnp.isfinite(out)))

    # Correctness checks against pure-JAX references (robust to argmax ties).
    v_ref, S_ref = _ref_attention(params, front_x, cross_x, front_x_hat)
    # (a) max-energy map S matches (the max *value* is insensitive to tie order).
    s_err = float(jnp.max(jnp.abs(S.reshape(B, -1) - S_ref)))
    assert s_err <= 0.1 * float(jnp.max(jnp.abs(S_ref))) + 0.1, s_err
    # (b) every gathered row of T is (numerically) one of the value rows.
    d = jnp.max(jnp.abs(T[:, :, None, :] - v_ref[:, None, :, :]), axis=-1)
    t_err = float(jnp.max(jnp.min(d, axis=-1)))
    assert t_err <= 0.1, t_err
    # (c) fused f_conv + scale + residual matches an f32 XLA conv on the same T/S.
    ref_out = _ref_fconv_stage(params, cross_x, T, S)
    c_err = float(jnp.max(jnp.abs(out - ref_out)))
    assert c_err <= 0.05 * float(jnp.max(jnp.abs(ref_out))) + 0.2, c_err

    print("KERNEL_OK")
</pallas_src>

<mosaic_0001>
module attributes {stable_mosaic.version = 11 : i64} {
  func.func @_attn_kernel(%arg0: i32, %arg1: memref<1x64x128xf32, #tpu.memory_space<vmem>>, %arg2: memref<1x64x128xf32, #tpu.memory_space<vmem>>, %arg3: memref<1x64x128xf32, #tpu.memory_space<vmem>>, %arg4: memref<128x16xf32, #tpu.memory_space<vmem>>, %arg5: memref<1x16xf32, #tpu.memory_space<vmem>>, %arg6: memref<128x16xf32, #tpu.memory_space<vmem>>, %arg7: memref<1x16xf32, #tpu.memory_space<vmem>>, %arg8: memref<128x128xf32, #tpu.memory_space<vmem>>, %arg9: memref<1x128xf32, #tpu.memory_space<vmem>>, %arg10: memref<1x64x128xf32, #tpu.memory_space<vmem>>, %arg11: memref<1x1x64xf32, #tpu.memory_space<vmem>>) attributes {dimension_semantics = [#tpu.dimension_semantics<parallel>], iteration_bounds = array<i64: 2>, scalar_prefetch = 0 : i64, scratch_operands = 0 : i64, tpu.core_type = #tpu.core_type<tc>, window_params = [{transform_indices = @transform_0, window_bounds = array<i64: 1, 64, 128>}, {transform_indices = @transform_1, window_bounds = array<i64: 1, 64, 128>}, {transform_indices = @transform_2, window_bounds = array<i64: 1, 64, 128>}, {pipeline_mode = #tpu.pipeline_mode<synchronous>, transform_indices = @transform_3, window_bounds = array<i64: 128, 16>}, {pipeline_mode = #tpu.pipeline_mode<synchronous>, transform_indices = @transform_4, window_bounds = array<i64: 1, 16>}, {pipeline_mode = #tpu.pipeline_mode<synchronous>, transform_indices = @transform_5, window_bounds = array<i64: 128, 16>}, {pipeline_mode = #tpu.pipeline_mode<synchronous>, transform_indices = @transform_6, window_bounds = array<i64: 1, 16>}, {pipeline_mode = #tpu.pipeline_mode<synchronous>, transform_indices = @transform_7, window_bounds = array<i64: 128, 128>}, {pipeline_mode = #tpu.pipeline_mode<synchronous>, transform_indices = @transform_8, window_bounds = array<i64: 1, 128>}, {transform_indices = @transform_9, window_bounds = array<i64: 1, 64, 128>}, {transform_indices = @transform_10, window_bounds = array<i64: 1, 1, 64>}]} {
    %c0 = arith.constant 0 : index
    %c0_0 = arith.constant 0 : index
    %c0_1 = arith.constant 0 : index
    %0 = vector.load %arg1[%c0, %c0_0, %c0_1] : memref<1x64x128xf32, #tpu.memory_space<vmem>>, vector<1x64x128xf32>
    %1 = vector.shape_cast %0 : vector<1x64x128xf32> to vector<64x128xf32>
    %c0_2 = arith.constant 0 : index
    %c0_3 = arith.constant 0 : index
    %c0_4 = arith.constant 0 : index
    %2 = vector.load %arg2[%c0_2, %c0_3, %c0_4] : memref<1x64x128xf32, #tpu.memory_space<vmem>>, vector<1x64x128xf32>
    %3 = vector.shape_cast %2 : vector<1x64x128xf32> to vector<64x128xf32>
    %c0_5 = arith.constant 0 : index
    %c0_6 = arith.constant 0 : index
    %c0_7 = arith.constant 0 : index
    %4 = vector.load %arg3[%c0_5, %c0_6, %c0_7] : memref<1x64x128xf32, #tpu.memory_space<vmem>>, vector<1x64x128xf32>
    %5 = vector.shape_cast %4 : vector<1x64x128xf32> to vector<64x128xf32>
    %c0_8 = arith.constant 0 : index
    %c0_9 = arith.constant 0 : index
    %6 = vector.load %arg4[%c0_8, %c0_9] : memref<128x16xf32, #tpu.memory_space<vmem>>, vector<128x16xf32>
    %cst = arith.constant dense<0.000000e+00> : vector<64x16xf32>
    %7 = tpu.matmul %3, %6, %cst {dimension_numbers = #tpu.dot_dimension_numbers<[1], [0], [0], [1], [0, 0, 1, 1], [], []>} : vector<64x128xf32>, vector<128x16xf32>, vector<64x16xf32> -> vector<64x16xf32>
    %c0_10 = arith.constant 0 : index
    %c0_11 = arith.constant 0 : index
    %8 = vector.load %arg5[%c0_10, %c0_11] : memref<1x16xf32, #tpu.memory_space<vmem>>, vector<1x16xf32>
    %9 = vector.broadcast %8 : vector<1x16xf32> to vector<64x16xf32>
    %10 = arith.addf %7, %9 : vector<64x16xf32>
    %c0_12 = arith.constant 0 : index
    %c0_13 = arith.constant 0 : index
    %11 = vector.load %arg6[%c0_12, %c0_13] : memref<128x16xf32, #tpu.memory_space<vmem>>, vector<128x16xf32>
    %cst_14 = arith.constant dense<0.000000e+00> : vector<64x16xf32>
    %12 = tpu.matmul %1, %11, %cst_14 {dimension_numbers = #tpu.dot_dimension_numbers<[1], [0], [0], [1], [0, 0, 1, 1], [], []>} : vector<64x128xf32>, vector<128x16xf32>, vector<64x16xf32> -> vector<64x16xf32>
    %c0_15 = arith.constant 0 : index
    %c0_16 = arith.constant 0 : index
    %13 = vector.load %arg7[%c0_15, %c0_16] : memref<1x16xf32, #tpu.memory_space<vmem>>, vector<1x16xf32>
    %14 = vector.broadcast %13 : vector<1x16xf32> to vector<64x16xf32>
    %15 = arith.addf %12, %14 : vector<64x16xf32>
    %c0_17 = arith.constant 0 : index
    %c0_18 = arith.constant 0 : index
    %16 = vector.load %arg8[%c0_17, %c0_18] : memref<128x128xf32, #tpu.memory_space<vmem>>, vector<128x128xf32>
    %cst_19 = arith.constant dense<0.000000e+00> : vector<64x128xf32>
    %17 = tpu.matmul %5, %16, %cst_19 {dimension_numbers = #tpu.dot_dimension_numbers<[1], [0], [0], [1], [0, 0, 1, 1], [], []>} : vector<64x128xf32>, vector<128x128xf32>, vector<64x128xf32> -> vector<64x128xf32>
    %c0_20 = arith.constant 0 : index
    %c0_21 = arith.constant 0 : index
    %18 = vector.load %arg9[%c0_20, %c0_21] : memref<1x128xf32, #tpu.memory_space<vmem>>, vector<1x128xf32>
    %19 = vector.broadcast %18 : vector<1x128xf32> to vector<64x128xf32>
    %20 = arith.addf %17, %19 : vector<64x128xf32>
    %cst_22 = arith.constant dense<0.000000e+00> : vector<64x64xf32>
    %21 = tpu.matmul %15, %10, %cst_22 {dimension_numbers = #tpu.dot_dimension_numbers<[1], [1], [0], [0], [0, 0, 1, 0], [], []>} : vector<64x16xf32>, vector<64x16xf32>, vector<64x64xf32> -> vector<64x64xf32>
    %cst_23 = arith.constant dense<0xFF800000> : vector<64xf32>
    %22 = vector.multi_reduction <maximumf>, %21, %cst_23 [0] : vector<64x64xf32> to vector<64xf32>
    %23 = vector.shape_cast %22 : vector<64xf32> to vector<1x64xf32>
    %24 = tpu.iota {dimensions = array<i32: 0>} : vector<64x64xi32>
    %25 = vector.broadcast %23 : vector<1x64xf32> to vector<64x64xf32>
    %26 = arith.cmpf oeq, %21, %25 : vector<64x64xf32>
    %c64_i32 = arith.constant 64 : i32
    %27 = vector.broadcast %c64_i32 : i32 to vector<64x64xi32>
    %28 = arith.select %26, %24, %27 : vector<64x64xi1>, vector<64x64xi32>
    %cst_24 = arith.constant dense<2147483647> : vector<64xi32>
    %29 = vector.multi_reduction <minsi>, %28, %cst_24 [0] : vector<64x64xi32> to vector<64xi32>
    %30 = vector.shape_cast %29 : vector<64xi32> to vector<1x64xi32>
    %31 = vector.broadcast %30 : vector<1x64xi32> to vector<64x64xi32>
    %32 = arith.cmpi eq, %24, %31 : vector<64x64xi32>
    %33 = arith.extui %32 : vector<64x64xi1> to vector<64x64xi32>
    %34 = arith.sitofp %33 : vector<64x64xi32> to vector<64x64xf32>
    %cst_25 = arith.constant dense<0.000000e+00> : vector<64x128xf32>
    %35 = tpu.matmul %34, %20, %cst_25 {dimension_numbers = #tpu.dot_dimension_numbers<[0], [0], [1], [1], [0, 1, 1, 1], [], []>} : vector<64x64xf32>, vector<64x128xf32>, vector<64x128xf32> -> vector<64x128xf32>
    %c0_26 = arith.constant 0 : index
    %c0_27 = arith.constant 0 : index
    %c0_28 = arith.constant 0 : index
    %36 = vector.load %arg10[%c0_26, %c0_27, %c0_28] : memref<1x64x128xf32, #tpu.memory_space<vmem>>, vector<1x64x128xf32>
    %37 = vector.shape_cast %36 : vector<1x64x128xf32> to vector<64x128xf32>
    %38 = vector.shape_cast %35 : vector<64x128xf32> to vector<1x64x128xf32>
    tpu.vector_store %arg10[%c0_26, %c0_27, %c0_28], %38 {strides = array<i32>} : memref<1x64x128xf32, #tpu.memory_space<vmem>>, vector<1x64x128xf32>,
    %c0_29 = arith.constant 0 : index
    %c0_30 = arith.constant 0 : index
    %c0_31 = arith.constant 0 : index
    %39 = vector.load %arg11[%c0_29, %c0_30, %c0_31] : memref<1x1x64xf32, #tpu.memory_space<vmem>>, vector<1x1x64xf32>
    %40 = vector.shape_cast %39 : vector<1x1x64xf32> to vector<1x64xf32>
    %41 = vector.shape_cast %23 : vector<1x64xf32> to vector<1x1x64xf32>
    tpu.vector_store %arg11[%c0_29, %c0_30, %c0_31], %41 {strides = array<i32>} : memref<1x1x64xf32, #tpu.memory_space<vmem>>, vector<1x1x64xf32>,
    return
  }
  func.func @transform_0(%arg0: i32) -> (i32, i32, i32) {
    %c0_i32 = arith.constant 0 : i32
    %c0_i32_0 = arith.constant 0 : i32
    %c0_i32_1 = arith.constant 0 : i32
    return %arg0, %c0_i32, %c0_i32_0 : i32, i32, i32
  }
  func.func @transform_1(%arg0: i32) -> (i32, i32, i32) {
    %c0_i32 = arith.constant 0 : i32
    %c0_i32_0 = arith.constant 0 : i32
    %c0_i32_1 = arith.constant 0 : i32
    return %arg0, %c0_i32, %c0_i32_0 : i32, i32, i32
  }
  func.func @transform_2(%arg0: i32) -> (i32, i32, i32) {
    %c0_i32 = arith.constant 0 : i32
    %c0_i32_0 = arith.constant 0 : i32
    %c0_i32_1 = arith.constant 0 : i32
    return %arg0, %c0_i32, %c0_i32_0 : i32, i32, i32
  }
  func.func @transform_3(%arg0: i32) -> (i32, i32) {
    %c0_i32 = arith.constant 0 : i32
    %c0_i32_0 = arith.constant 0 : i32
    %c0_i32_1 = arith.constant 0 : i32
    return %c0_i32, %c0_i32_0 : i32, i32
  }
  func.func @transform_4(%arg0: i32) -> (i32, i32) {
    %c0_i32 = arith.constant 0 : i32
    %c0_i32_0 = arith.constant 0 : i32
    %c0_i32_1 = arith.constant 0 : i32
    return %c0_i32, %c0_i32_0 : i32, i32
  }
  func.func @transform_5(%arg0: i32) -> (i32, i32) {
    %c0_i32 = arith.constant 0 : i32
    %c0_i32_0 = arith.constant 0 : i32
    %c0_i32_1 = arith.constant 0 : i32
    return %c0_i32, %c0_i32_0 : i32, i32
  }
  func.func @transform_6(%arg0: i32) -> (i32, i32) {
    %c0_i32 = arith.constant 0 : i32
    %c0_i32_0 = arith.constant 0 : i32
    %c0_i32_1 = arith.constant 0 : i32
    return %c0_i32, %c0_i32_0 : i32, i32
  }
  func.func @transform_7(%arg0: i32) -> (i32, i32) {
    %c0_i32 = arith.constant 0 : i32
    %c0_i32_0 = arith.constant 0 : i32
    %c0_i32_1 = arith.constant 0 : i32
    return %c0_i32, %c0_i32_0 : i32, i32
  }
  func.func @transform_8(%arg0: i32) -> (i32, i32) {
    %c0_i32 = arith.constant 0 : i32
    %c0_i32_0 = arith.constant 0 : i32
    %c0_i32_1 = arith.constant 0 : i32
    return %c0_i32, %c0_i32_0 : i32, i32
  }
  func.func @transform_9(%arg0: i32) -> (i32, i32, i32) {
    %c0_i32 = arith.constant 0 : i32
    %c0_i32_0 = arith.constant 0 : i32
    %c0_i32_1 = arith.constant 0 : i32
    return %arg0, %c0_i32, %c0_i32_0 : i32, i32, i32
  }
  func.func @transform_10(%arg0: i32) -> (i32, i32, i32) {
    %c0_i32 = arith.constant 0 : i32
    %c0_i32_0 = arith.constant 0 : i32
    %c0_i32_1 = arith.constant 0 : i32
    return %arg0, %c0_i32, %c0_i32_0 : i32, i32, i32
  }
}

module attributes {stable_mosaic.version = 11 : i64} {
  func.func @_fconv_kernel(%arg0: i32, %arg1: memref<1x3x160x256xbf16, #tpu.memory_space<vmem>>, %arg2: memref<9x256x128xbf16, #tpu.memory_space<vmem>>, %arg3: memref<1x128xf32, #tpu.memory_space<vmem>>, %arg4: memref<1x128x128xf32, #tpu.memory_space<vmem>>, %arg5: memref<1x128x1xf32, #tpu.memory_space<vmem>>, %arg6: memref<1x128x128xf32, #tpu.memory_space<vmem>>) attributes {dimension_semantics = [#tpu.dimension_semantics<parallel>], iteration_bounds = array<i64: 2>, scalar_prefetch = 0 : i64, scratch_operands = 0 : i64, tpu.core_type = #tpu.core_type<tc>, window_params = [{transform_indices = @transform_0, window_bounds = array<i64: 1, 3, 160, 256>}, {pipeline_mode = #tpu.pipeline_mode<synchronous>, transform_indices = @transform_1, window_bounds = array<i64: 9, 256, 128>}, {pipeline_mode = #tpu.pipeline_mode<synchronous>, transform_indices = @transform_2, window_bounds = array<i64: 1, 128>}, {transform_indices = @transform_3, window_bounds = array<i64: 1, 128, 128>}, {transform_indices = @transform_4, window_bounds = array<i64: 1, 128, 1>}, {transform_indices = @transform_5, window_bounds = array<i64: 1, 128, 128>}]} {
    %c0 = arith.constant 0 : index
    %c0_0 = arith.constant 0 : index
    %c0_1 = arith.constant 0 : index
    %c0_2 = arith.constant 0 : index
    %0 = vector.load %arg1[%c0, %c0_0, %c0_1, %c0_2] : memref<1x3x160x256xbf16, #tpu.memory_space<vmem>>, vector<1x1x128x256xbf16>
    %1 = vector.shape_cast %0 : vector<1x1x128x256xbf16> to vector<128x256xbf16>
    %c0_3 = arith.constant 0 : index
    %c0_4 = arith.constant 0 : index
    %c0_5 = arith.constant 0 : index
    %2 = vector.load %arg2[%c0_3, %c0_4, %c0_5] : memref<9x256x128xbf16, #tpu.memory_space<vmem>>, vector<1x256x128xbf16>
    %3 = vector.shape_cast %2 : vector<1x256x128xbf16> to vector<256x128xbf16>
    %cst = arith.constant dense<0.000000e+00> : vector<128x128xf32>
    %4 = tpu.matmul %1, %3, %cst {dimension_numbers = #tpu.dot_dimension_numbers<[1], [0], [0], [1], [0, 0, 1, 1], [], []>} : vector<128x256xbf16>, vector<256x128xbf16>, vector<128x128xf32> -> vector<128x128xf32>
    %c0_6 = arith.constant 0 : index
    %c1 = arith.constant 1 : index
    %c0_7 = arith.constant 0 : index
    %c0_8 = arith.constant 0 : index
    %5 = vector.load %arg1[%c0_6, %c1, %c0_7, %c0_8] : memref<1x3x160x256xbf16, #tpu.memory_space<vmem>>, vector<1x1x128x256xbf16>
    %6 = vector.shape_cast %5 : vector<1x1x128x256xbf16> to vector<128x256xbf16>
    %c1_9 = arith.constant 1 : index
    %c0_10 = arith.constant 0 : index
    %c0_11 = arith.constant 0 : index
    %7 = vector.load %arg2[%c1_9, %c0_10, %c0_11] : memref<9x256x128xbf16, #tpu.memory_space<vmem>>, vector<1x256x128xbf16>
    %8 = vector.shape_cast %7 : vector<1x256x128xbf16> to vector<256x128xbf16>
    %cst_12 = arith.constant dense<0.000000e+00> : vector<128x128xf32>
    %9 = tpu.matmul %6, %8, %cst_12 {dimension_numbers = #tpu.dot_dimension_numbers<[1], [0], [0], [1], [0, 0, 1, 1], [], []>} : vector<128x256xbf16>, vector<256x128xbf16>, vector<128x128xf32> -> vector<128x128xf32>
    %10 = arith.addf %4, %9 : vector<128x128xf32>
    %c0_13 = arith.constant 0 : index
    %c2 = arith.constant 2 : index
    %c0_14 = arith.constant 0 : index
    %c0_15 = arith.constant 0 : index
    %11 = vector.load %arg1[%c0_13, %c2, %c0_14, %c0_15] : memref<1x3x160x256xbf16, #tpu.memory_space<vmem>>, vector<1x1x128x256xbf16>
    %12 = vector.shape_cast %11 : vector<1x1x128x256xbf16> to vector<128x256xbf16>
    %c2_16 = arith.constant 2 : index
    %c0_17 = arith.constant 0 : index
    %c0_18 = arith.constant 0 : index
    %13 = vector.load %arg2[%c2_16, %c0_17, %c0_18] : memref<9x256x128xbf16, #tpu.memory_space<vmem>>, vector<1x256x128xbf16>
    %14 = vector.shape_cast %13 : vector<1x256x128xbf16> to vector<256x128xbf16>
    %cst_19 = arith.constant dense<0.000000e+00> : vector<128x128xf32>
    %15 = tpu.matmul %12, %14, %cst_19 {dimension_numbers = #tpu.dot_dimension_numbers<[1], [0], [0], [1], [0, 0, 1, 1], [], []>} : vector<128x256xbf16>, vector<256x128xbf16>, vector<128x128xf32> -> vector<128x128xf32>
    %16 = arith.addf %10, %15 : vector<128x128xf32>
    %c0_20 = arith.constant 0 : index
    %c0_21 = arith.constant 0 : index
    %c16 = arith.constant 16 : index
    %c0_22 = arith.constant 0 : index
    %17 = vector.load %arg1[%c0_20, %c0_21, %c16, %c0_22] : memref<1x3x160x256xbf16, #tpu.memory_space<vmem>>, vector<1x1x128x256xbf16>
    %18 = vector.shape_cast %17 : vector<1x1x128x256xbf16> to vector<128x256xbf16>
    %c3 = arith.constant 3 : index
    %c0_23 = arith.constant 0 : index
    %c0_24 = arith.constant 0 : index
    %19 = vector.load %arg2[%c3, %c0_23, %c0_24] : memref<9x256x128xbf16, #tpu.memory_space<vmem>>, vector<1x256x128xbf16>
    %20 = vector.shape_cast %19 : vector<1x256x128xbf16> to vector<256x128xbf16>
    %cst_25 = arith.constant dense<0.000000e+00> : vector<128x128xf32>
    %21 = tpu.matmul %18, %20, %cst_25 {dimension_numbers = #tpu.dot_dimension_numbers<[1], [0], [0], [1], [0, 0, 1, 1], [], []>} : vector<128x256xbf16>, vector<256x128xbf16>, vector<128x128xf32> -> vector<128x128xf32>
    %22 = arith.addf %16, %21 : vector<128x128xf32>
    %c0_26 = arith.constant 0 : index
    %c1_27 = arith.constant 1 : index
    %c16_28 = arith.constant 16 : index
    %c0_29 = arith.constant 0 : index
    %23 = vector.load %arg1[%c0_26, %c1_27, %c16_28, %c0_29] : memref<1x3x160x256xbf16, #tpu.memory_space<vmem>>, vector<1x1x128x256xbf16>
    %24 = vector.shape_cast %23 : vector<1x1x128x256xbf16> to vector<128x256xbf16>
    %c4 = arith.constant 4 : index
    %c0_30 = arith.constant 0 : index
    %c0_31 = arith.constant 0 : index
    %25 = vector.load %arg2[%c4, %c0_30, %c0_31] : memref<9x256x128xbf16, #tpu.memory_space<vmem>>, vector<1x256x128xbf16>
    %26 = vector.shape_cast %25 : vector<1x256x128xbf16> to vector<256x128xbf16>
    %cst_32 = arith.constant dense<0.000000e+00> : vector<128x128xf32>
    %27 = tpu.matmul %24, %26, %cst_32 {dimension_numbers = #tpu.dot_dimension_numbers<[1], [0], [0], [1], [0, 0, 1, 1], [], []>} : vector<128x256xbf16>, vector<256x128xbf16>, vector<128x128xf32> -> vector<128x128xf32>
    %28 = arith.addf %22, %27 : vector<128x128xf32>
    %c0_33 = arith.constant 0 : index
    %c2_34 = arith.constant 2 : index
    %c16_35 = arith.constant 16 : index
    %c0_36 = arith.constant 0 : index
    %29 = vector.load %arg1[%c0_33, %c2_34, %c16_35, %c0_36] : memref<1x3x160x256xbf16, #tpu.memory_space<vmem>>, vector<1x1x128x256xbf16>
    %30 = vector.shape_cast %29 : vector<1x1x128x256xbf16> to vector<128x256xbf16>
    %c5 = arith.constant 5 : index
    %c0_37 = arith.constant 0 : index
    %c0_38 = arith.constant 0 : index
    %31 = vector.load %arg2[%c5, %c0_37, %c0_38] : memref<9x256x128xbf16, #tpu.memory_space<vmem>>, vector<1x256x128xbf16>
    %32 = vector.shape_cast %31 : vector<1x256x128xbf16> to vector<256x128xbf16>
    %cst_39 = arith.constant dense<0.000000e+00> : vector<128x128xf32>
    %33 = tpu.matmul %30, %32, %cst_39 {dimension_numbers = #tpu.dot_dimension_numbers<[1], [0], [0], [1], [0, 0, 1, 1], [], []>} : vector<128x256xbf16>, vector<256x128xbf16>, vector<128x128xf32> -> vector<128x128xf32>
    %34 = arith.addf %28, %33 : vector<128x128xf32>
    %c0_40 = arith.constant 0 : index
    %c0_41 = arith.constant 0 : index
    %c32 = arith.constant 32 : index
    %c0_42 = arith.constant 0 : index
    %35 = vector.load %arg1[%c0_40, %c0_41, %c32, %c0_42] : memref<1x3x160x256xbf16, #tpu.memory_space<vmem>>, vector<1x1x128x256xbf16>
    %36 = vector.shape_cast %35 : vector<1x1x128x256xbf16> to vector<128x256xbf16>
    %c6 = arith.constant 6 : index
    %c0_43 = arith.constant 0 : index
    %c0_44 = arith.constant 0 : index
    %37 = vector.load %arg2[%c6, %c0_43, %c0_44] : memref<9x256x128xbf16, #tpu.memory_space<vmem>>, vector<1x256x128xbf16>
    %38 = vector.shape_cast %37 : vector<1x256x128xbf16> to vector<256x128xbf16>
    %cst_45 = arith.constant dense<0.000000e+00> : vector<128x128xf32>
    %39 = tpu.matmul %36, %38, %cst_45 {dimension_numbers = #tpu.dot_dimension_numbers<[1], [0], [0], [1], [0, 0, 1, 1], [], []>} : vector<128x256xbf16>, vector<256x128xbf16>, vector<128x128xf32> -> vector<128x128xf32>
    %40 = arith.addf %34, %39 : vector<128x128xf32>
    %c0_46 = arith.constant 0 : index
    %c1_47 = arith.constant 1 : index
    %c32_48 = arith.constant 32 : index
    %c0_49 = arith.constant 0 : index
    %41 = vector.load %arg1[%c0_46, %c1_47, %c32_48, %c0_49] : memref<1x3x160x256xbf16, #tpu.memory_space<vmem>>, vector<1x1x128x256xbf16>
    %42 = vector.shape_cast %41 : vector<1x1x128x256xbf16> to vector<128x256xbf16>
    %c7 = arith.constant 7 : index
    %c0_50 = arith.constant 0 : index
    %c0_51 = arith.constant 0 : index
    %43 = vector.load %arg2[%c7, %c0_50, %c0_51] : memref<9x256x128xbf16, #tpu.memory_space<vmem>>, vector<1x256x128xbf16>
    %44 = vector.shape_cast %43 : vector<1x256x128xbf16> to vector<256x128xbf16>
    %cst_52 = arith.constant dense<0.000000e+00> : vector<128x128xf32>
    %45 = tpu.matmul %42, %44, %cst_52 {dimension_numbers = #tpu.dot_dimension_numbers<[1], [0], [0], [1], [0, 0, 1, 1], [], []>} : vector<128x256xbf16>, vector<256x128xbf16>, vector<128x128xf32> -> vector<128x128xf32>
    %46 = arith.addf %40, %45 : vector<128x128xf32>
    %c0_53 = arith.constant 0 : index
    %c2_54 = arith.constant 2 : index
    %c32_55 = arith.constant 32 : index
    %c0_56 = arith.constant 0 : index
    %47 = vector.load %arg1[%c0_53, %c2_54, %c32_55, %c0_56] : memref<1x3x160x256xbf16, #tpu.memory_space<vmem>>, vector<1x1x128x256xbf16>
    %48 = vector.shape_cast %47 : vector<1x1x128x256xbf16> to vector<128x256xbf16>
    %c8 = arith.constant 8 : index
    %c0_57 = arith.constant 0 : index
    %c0_58 = arith.constant 0 : index
    %49 = vector.load %arg2[%c8, %c0_57, %c0_58] : memref<9x256x128xbf16, #tpu.memory_space<vmem>>, vector<1x256x128xbf16>
    %50 = vector.shape_cast %49 : vector<1x256x128xbf16> to vector<256x128xbf16>
    %cst_59 = arith.constant dense<0.000000e+00> : vector<128x128xf32>
    %51 = tpu.matmul %48, %50, %cst_59 {dimension_numbers = #tpu.dot_dimension_numbers<[1], [0], [0], [1], [0, 0, 1, 1], [], []>} : vector<128x256xbf16>, vector<256x128xbf16>, vector<128x128xf32> -> vector<128x128xf32>
    %52 = arith.addf %46, %51 : vector<128x128xf32>
    %c0_60 = arith.constant 0 : index
    %c0_61 = arith.constant 0 : index
    %53 = vector.load %arg3[%c0_60, %c0_61] : memref<1x128xf32, #tpu.memory_space<vmem>>, vector<1x128xf32>
    %54 = vector.broadcast %53 : vector<1x128xf32> to vector<128x128xf32>
    %55 = arith.addf %52, %54 : vector<128x128xf32>
    %c0_62 = arith.constant 0 : index
    %c0_63 = arith.constant 0 : index
    %c0_64 = arith.constant 0 : index
    %56 = vector.load %arg4[%c0_62, %c0_63, %c0_64] : memref<1x128x128xf32, #tpu.memory_space<vmem>>, vector<1x128x128xf32>
    %57 = vector.shape_cast %56 : vector<1x128x128xf32> to vector<128x128xf32>
    %c0_65 = arith.constant 0 : index
    %c0_66 = arith.constant 0 : index
    %c0_67 = arith.constant 0 : index
    %58 = vector.load %arg5[%c0_65, %c0_66, %c0_67] : memref<1x128x1xf32, #tpu.memory_space<vmem>>, vector<1x128x1xf32>
    %59 = vector.shape_cast %58 : vector<1x128x1xf32> to vector<128x1xf32>
    %60 = vector.broadcast %59 : vector<128x1xf32> to vector<128x128xf32>
    %61 = arith.mulf %55, %60 : vector<128x128xf32>
    %62 = arith.addf %57, %61 : vector<128x128xf32>
    %c0_68 = arith.constant 0 : index
    %c0_69 = arith.constant 0 : index
    %c0_70 = arith.constant 0 : index
    %63 = vector.load %arg6[%c0_68, %c0_69, %c0_70] : memref<1x128x128xf32, #tpu.memory_space<vmem>>, vector<1x128x128xf32>
    %64 = vector.shape_cast %63 : vector<1x128x128xf32> to vector<128x128xf32>
    %65 = vector.shape_cast %62 : vector<128x128xf32> to vector<1x128x128xf32>
    tpu.vector_store %arg6[%c0_68, %c0_69, %c0_70], %65 {strides = array<i32>} : memref<1x128x128xf32, #tpu.memory_space<vmem>>, vector<1x128x128xf32>,
    return
  }
  func.func @transform_0(%arg0: i32) -> (i32, i32, i32, i32) {
    %c0_i32 = arith.constant 0 : i32
    %c0_i32_0 = arith.constant 0 : i32
    %c0_i32_1 = arith.constant 0 : i32
    %c0_i32_2 = arith.constant 0 : i32
    return %arg0, %c0_i32, %c0_i32_0, %c0_i32_1 : i32, i32, i32, i32
  }
  func.func @transform_1(%arg0: i32) -> (i32, i32, i32) {
    %c0_i32 = arith.constant 0 : i32
    %c0_i32_0 = arith.constant 0 : i32
    %c0_i32_1 = arith.constant 0 : i32
    %c0_i32_2 = arith.constant 0 : i32
    return %c0_i32, %c0_i32_0, %c0_i32_1 : i32, i32, i32
  }
  func.func @transform_2(%arg0: i32) -> (i32, i32) {
    %c0_i32 = arith.constant 0 : i32
    %c0_i32_0 = arith.constant 0 : i32
    %c0_i32_1 = arith.constant 0 : i32
    return %c0_i32, %c0_i32_0 : i32, i32
  }
  func.func @transform_3(%arg0: i32) -> (i32, i32, i32) {
    %c0_i32 = arith.constant 0 : i32
    %c0_i32_0 = arith.constant 0 : i32
    %c0_i32_1 = arith.constant 0 : i32
    return %arg0, %c0_i32, %c0_i32_0 : i32, i32, i32
  }
  func.func @transform_4(%arg0: i32) -> (i32, i32, i32) {
    %c0_i32 = arith.constant 0 : i32
    %c0_i32_0 = arith.constant 0 : i32
    %c0_i32_1 = arith.constant 0 : i32
    return %arg0, %c0_i32, %c0_i32_0 : i32, i32, i32
  }
  func.func @transform_5(%arg0: i32) -> (i32, i32, i32) {
    %c0_i32 = arith.constant 0 : i32
    %c0_i32_0 = arith.constant 0 : i32
    %c0_i32_1 = arith.constant 0 : i32
    return %arg0, %c0_i32, %c0_i32_0 : i32, i32, i32
  }
}

</mosaic_0001>

<llo_original>
// kernel: forward_with_aux.2
$region0: #{forward_with_aux.2}
  #allocation0 [shape = 'u32[]', space=smem, size = 0x4, offset = 0x4, fixed_abs, tag = 'smem constant byte address 0x4 - core index']
  #allocation1 [shape = 'u32[144,128]{1,0:T(1,128)}', space=vmem, size = 0x12000, scoped, tag = 'internal scratch']
  %s0 = inlined_call_operand.hbm [shape: f32[2,64,128], index: 0, kind: input, shape index: {}]
  %s1 = inlined_call_operand.hbm [shape: f32[2,64,128], index: 1, kind: input, shape index: {}]
  %s2 = inlined_call_operand.hbm [shape: f32[2,64,128], index: 2, kind: input, shape index: {}]
  %s3 = inlined_call_operand.vmem [shape: f32[128,16], index: 3, kind: input, shape index: {}]
  %s4 = inlined_call_operand.hbm [shape: f32[1,16], index: 4, kind: input, shape index: {}]
  %s5 = inlined_call_operand.vmem [shape: f32[128,16], index: 5, kind: input, shape index: {}]
  %s6 = inlined_call_operand.hbm [shape: f32[1,16], index: 6, kind: input, shape index: {}]
  %s7 = inlined_call_operand.hbm [shape: f32[128,128], index: 7, kind: input, shape index: {}]
  %s8 = inlined_call_operand.hbm [shape: f32[1,128], index: 8, kind: input, shape index: {}]
  %s9 = inlined_call_operand.vmem [shape: f32[2,64,128], index: 9, kind: output, shape index: {0}]
  %s10 = inlined_call_operand.vmem [shape: f32[2,1,64], index: 10, kind: output, shape index: {1}]
  %11 = xla_tuple %s9, %s10
  %s12 = sld [smem:[#allocation0]]
  $region105: #{forward_with_aux.2} parent=0
    _
  %s14 = ssub.s32 1, %s12
  %s15 = scalar_select 0, %s14, %s12
  $region1: #{forward_with_aux.2} parent=0
    #allocation2 [shape = 'u8[65536]{0}', space=vmem, size = 0x10000, scoped, tag = 'input window, operand 0']
    #allocation3 [shape = 's32[2]{0}', space=sflag, size = 0x8, scoped, tag = 'scoped memory for forward_with_aux.2']
    #allocation4 [shape = 'u8[65536]{0}', space=vmem, size = 0x10000, scoped, tag = 'input window, operand 1']
    #allocation5 [shape = 's32[2]{0}', space=sflag, size = 0x8, scoped, tag = 'scoped memory for forward_with_aux.2']
    #allocation6 [shape = 'u8[65536]{0}', space=vmem, size = 0x10000, scoped, tag = 'input window, operand 2']
    #allocation7 [shape = 'u8[512]{0}', space=vmem, size = 0x400, scoped, tag = 'input window, operand 4, single buffered']
    #allocation8 [shape = 's32[1]{0}', space=sflag, size = 0x4, scoped, tag = 'scoped memory for forward_with_aux.2']
    #allocation9 [shape = 'u8[512]{0}', space=vmem, size = 0x400, scoped, tag = 'input window, operand 6, single buffered']
    #allocation10 [shape = 'u8[65536]{0}', space=vmem, size = 0x10000, scoped, tag = 'input window, operand 7, single buffered']
    #allocation11 [shape = 's32[1]{0}', space=sflag, size = 0x4, scoped, tag = 'scoped memory for forward_with_aux.2']
    #allocation12 [shape = 'u8[512]{0}', space=vmem, size = 0x400, scoped, tag = 'input window, operand 8, single buffered']
    %16 = vsyncpa [#allocation3], 0
    %s17 = scalar_lea.sflag [#allocation3], 1
    %18 = vsyncpa %s17, 0
    %19 = vsyncpa [#allocation5], 0
    %s20 = scalar_lea.sflag [#allocation5], 1
    %21 = vsyncpa %s20, 0
    %22 = vsyncpa [#allocation8], 0
    %23 = vsyncpa [#allocation11], 0
    loop: start=0, step=1, limit=4
    $region2: #{forward_with_aux.2} parent=1 // loop_pre_header
      _
    $region3: #{forward_with_aux.2} parent=1 // loop_header
      %s25 = sphi 0, %s29
      %p26 = scmp.ge.s32.totalorder %s25, 4
      %s35 = sphi 0, %s37
      %s38 = sphi 0, %s35
      %s39 = sphi 0, %s38
      %s55 = sphi 0, %s39
      %s61 = sphi 0, %s63
      %s64 = sphi 0, %s61
      %s65 = sphi 0, %s64
      %s81 = sphi 0, %s65
      %s87 = sphi 0, %s89
      %s90 = sphi 0, %s87
      %s91 = sphi 0, %s90
      %s107 = sphi 0, %s91
      %s111 = sphi 0, %s111
      %s113 = sphi 0, %s111
      %s114 = sphi 0, %s113
      %s128 = sphi 0, %s114
      %s132 = sphi 0, %s132
      %s134 = sphi 0, %s132
      %s135 = sphi 0, %s134
      %s149 = sphi 0, %s135
      %s153 = sphi 0, %s153
      %s155 = sphi 0, %s153
      %s156 = sphi 0, %s155
      %s170 = sphi 0, %s156
      %s174 = sphi 0, %s174
      %s176 = sphi 0, %s174
      %s177 = sphi 0, %s176
      %s191 = sphi 0, %s177
      %s195 = sphi 0, %s195
      %s197 = sphi 0, %s195
      %s198 = sphi 0, %s197
      %s212 = sphi 0, %s198
      %s216 = sphi 0, %s216
      %s218 = sphi 0, %s216
      %s219 = sphi 0, %s218
      %s233 = sphi 0, %s219
      %s239 = sphi 0, %s241
      %s242 = sphi 0, %s239
      %s243 = sphi 0, %s242
      %s259 = sphi 0, %s243
      %s265 = sphi 0, %s267
      %s268 = sphi 0, %s265
      %s269 = sphi 0, %s268
      %s285 = sphi 0, %s269
    $region4: #{forward_with_aux.2} parent=1 // loop_header_branch
      %28 = sbr.rel (%p26) target = $region8
    $region5: #{forward_with_aux.2} parent=1 // loop_body
      %s30 = ssub.s32 %s25, 1
      %s31 = ssub.s32 %s25, 2
      %s32 = sadd.s32 %s25, 1
      %s33 = ssub.s32 %s25, %s32
      %p34 = scmp.eq.s32.totalorder %s33, 0
      %s36 = sadd.s32 %s35, 1
      %s37 = scalar_select %p34, %s35, %s36
      %p40 = pneg %p34
      %p41 = scmp.eq.s32.totalorder %s25, 1
      %p42 = por %p40, %p41
      %p43 = scmp.ne.s32.totalorder %s35, %s38
      %p44 = scmp.eq.s32.totalorder %s25, 0
      %p45 = por %p43, %p44
      %p46 = scmp.ne.s32.totalorder %s35, %s38
      %p47 = scmp.eq.s32.totalorder %s30, 1
      %p48 = por %p46, %p47
      %p49 = scmp.ne.s32.totalorder %s38, %s39
      %p50 = scmp.eq.s32.totalorder %s30, 0
      %p51 = por %p49, %p50
      %p52 = scmp.ne.s32.totalorder %s38, %s39
      %p53 = scmp.eq.s32.totalorder %s31, 1
      %p54 = por %p52, %p53
      %p56 = scmp.ne.s32.totalorder %s39, %s55
      %p57 = scmp.eq.s32.totalorder %s31, 0
      %p58 = por %p56, %p57
      %s59 = ssub.s32 %s25, %s32
      %p60 = scmp.eq.s32.totalorder %s59, 0
      %s62 = sadd.s32 %s61, 1
      %s63 = scalar_select %p60, %s61, %s62
      %p66 = pneg %p60
      %p67 = scmp.eq.s32.totalorder %s25, 1
      %p68 = por %p66, %p67
      %p69 = scmp.ne.s32.totalorder %s61, %s64
      %p70 = scmp.eq.s32.totalorder %s25, 0
      %p71 = por %p69, %p70
      %p72 = scmp.ne.s32.totalorder %s61, %s64
      %p73 = scmp.eq.s32.totalorder %s30, 1
      %p74 = por %p72, %p73
      %p75 = scmp.ne.s32.totalorder %s64, %s65
      %p76 = scmp.eq.s32.totalorder %s30, 0
      %p77 = por %p75, %p76
      %p78 = scmp.ne.s32.totalorder %s64, %s65
      %p79 = scmp.eq.s32.totalorder %s31, 1
      %p80 = por %p78, %p79
      %p82 = scmp.ne.s32.totalorder %s65, %s81
      %p83 = scmp.eq.s32.totalorder %s31, 0
      %p84 = por %p82, %p83
      %s85 = ssub.s32 %s25, %s32
      %p86 = scmp.eq.s32.totalorder %s85, 0
      %s88 = sadd.s32 %s87, 1
      %s89 = scalar_select %p86, %s87, %s88
      %p92 = pneg %p86
      %p93 = scmp.eq.s32.totalorder %s25, 1
      %p94 = por %p92, %p93
      %p95 = scmp.ne.s32.totalorder %s87, %s90
      %p96 = scmp.eq.s32.totalorder %s25, 0
      %p97 = por %p95, %p96
      %p98 = scmp.ne.s32.totalorder %s87, %s90
      %p99 = scmp.eq.s32.totalorder %s30, 1
      %p100 = por %p98, %p99
      %p101 = scmp.ne.s32.totalorder %s90, %s91
      %p102 = scmp.eq.s32.totalorder %s30, 0
      %p103 = por %p101, %p102
      %p104 = scmp.ne.s32.totalorder %s90, %s91
      %p105 = scmp.eq.s32.totalorder %s31, 1
      %p106 = por %p104, %p105
      %p108 = scmp.ne.s32.totalorder %s91, %s107
      %p109 = scmp.eq.s32.totalorder %s31, 0
      %p110 = por %p108, %p109
      %s112 = sadd.s32 %s111, 1
      %p115 = scmp.eq.s32.totalorder %s25, 1
      %p116 = scmp.ne.s32.totalorder %s111, %s113
      %p117 = scmp.eq.s32.totalorder %s25, 0
      %p118 = por %p116, %p117
      %p119 = scmp.ne.s32.totalorder %s111, %s113
      %p120 = scmp.eq.s32.totalorder %s30, 1
      %p121 = por %p119, %p120
      %p122 = scmp.ne.s32.totalorder %s113, %s114
      %p123 = scmp.eq.s32.totalorder %s30, 0
      %p124 = por %p122, %p123
      %p125 = scmp.ne.s32.totalorder %s113, %s114
      %p126 = scmp.eq.s32.totalorder %s31, 1
      %p127 = por %p125, %p126
      %p129 = scmp.ne.s32.totalorder %s114, %s128
      %p130 = scmp.eq.s32.totalorder %s31, 0
      %p131 = por %p129, %p130
      %s133 = sadd.s32 %s132, 1
      %p136 = scmp.eq.s32.totalorder %s25, 1
      %p137 = scmp.ne.s32.totalorder %s132, %s134
      %p138 = scmp.eq.s32.totalorder %s25, 0
      %p139 = por %p137, %p138
      %p140 = scmp.ne.s32.totalorder %s132, %s134
      %p141 = scmp.eq.s32.totalorder %s30, 1
      %p142 = por %p140, %p141
      %p143 = scmp.ne.s32.totalorder %s134, %s135
      %p144 = scmp.eq.s32.totalorder %s30, 0
      %p145 = por %p143, %p144
      %p146 = scmp.ne.s32.totalorder %s134, %s135
      %p147 = scmp.eq.s32.totalorder %s31, 1
      %p148 = por %p146, %p147
      %p150 = scmp.ne.s32.totalorder %s135, %s149
      %p151 = scmp.eq.s32.totalorder %s31, 0
      %p152 = por %p150, %p151
      %s154 = sadd.s32 %s153, 1
      %p157 = scmp.eq.s32.totalorder %s25, 1
      %p158 = scmp.ne.s32.totalorder %s153, %s155
      %p159 = scmp.eq.s32.totalorder %s25, 0
      %p160 = por %p158, %p159
      %p161 = scmp.ne.s32.totalorder %s153, %s155
      %p162 = scmp.eq.s32.totalorder %s30, 1
      %p163 = por %p161, %p162
      %p164 = scmp.ne.s32.totalorder %s155, %s156
      %p165 = scmp.eq.s32.totalorder %s30, 0
      %p166 = por %p164, %p165
      %p167 = scmp.ne.s32.totalorder %s155, %s156
      %p168 = scmp.eq.s32.totalorder %s31, 1
      %p169 = por %p167, %p168
      %p171 = scmp.ne.s32.totalorder %s156, %s170
      %p172 = scmp.eq.s32.totalorder %s31, 0
      %p173 = por %p171, %p172
      %s175 = sadd.s32 %s174, 1
      %p178 = scmp.eq.s32.totalorder %s25, 1
      %p179 = scmp.ne.s32.totalorder %s174, %s176
      %p180 = scmp.eq.s32.totalorder %s25, 0
      %p181 = por %p179, %p180
      %p182 = scmp.ne.s32.totalorder %s174, %s176
      %p183 = scmp.eq.s32.totalorder %s30, 1
      %p184 = por %p182, %p183
      %p185 = scmp.ne.s32.totalorder %s176, %s177
      %p186 = scmp.eq.s32.totalorder %s30, 0
      %p187 = por %p185, %p186
      %p188 = scmp.ne.s32.totalorder %s176, %s177
      %p189 = scmp.eq.s32.totalorder %s31, 1
      %p190 = por %p188, %p189
      %p192 = scmp.ne.s32.totalorder %s177, %s191
      %p193 = scmp.eq.s32.totalorder %s31, 0
      %p194 = por %p192, %p193
      %s196 = sadd.s32 %s195, 1
      %p199 = scmp.eq.s32.totalorder %s25, 1
      %p200 = scmp.ne.s32.totalorder %s195, %s197
      %p201 = scmp.eq.s32.totalorder %s25, 0
      %p202 = por %p200, %p201
      %p203 = scmp.ne.s32.totalorder %s195, %s197
      %p204 = scmp.eq.s32.totalorder %s30, 1
      %p205 = por %p203, %p204
      %p206 = scmp.ne.s32.totalorder %s197, %s198
      %p207 = scmp.eq.s32.totalorder %s30, 0
      %p208 = por %p206, %p207
      %p209 = scmp.ne.s32.totalorder %s197, %s198
      %p210 = scmp.eq.s32.totalorder %s31, 1
      %p211 = por %p209, %p210
      %p213 = scmp.ne.s32.totalorder %s198, %s212
      %p214 = scmp.eq.s32.totalorder %s31, 0
      %p215 = por %p213, %p214
      %s217 = sadd.s32 %s216, 1
      %p220 = scmp.eq.s32.totalorder %s25, 1
      %p221 = scmp.ne.s32.totalorder %s216, %s218
      %p222 = scmp.eq.s32.totalorder %s25, 0
      %p223 = por %p221, %p222
      %p224 = scmp.ne.s32.totalorder %s216, %s218
      %p225 = scmp.eq.s32.totalorder %s30, 1
      %p226 = por %p224, %p225
      %p227 = scmp.ne.s32.totalorder %s218, %s219
      %p228 = scmp.eq.s32.totalorder %s30, 0
      %p229 = por %p227, %p228
      %p230 = scmp.ne.s32.totalorder %s218, %s219
      %p231 = scmp.eq.s32.totalorder %s31, 1
      %p232 = por %p230, %p231
      %p234 = scmp.ne.s32.totalorder %s219, %s233
      %p235 = scmp.eq.s32.totalorder %s31, 0
      %p236 = por %p234, %p235
      %s237 = ssub.s32 %s25, %s32
      %p238 = scmp.eq.s32.totalorder %s237, 0
      %s240 = sadd.s32 %s239, 1
      %s241 = scalar_select %p238, %s239, %s240
      %p244 = pneg %p238
      %p245 = scmp.eq.s32.totalorder %s25, 1
      %p246 = por %p244, %p245
      %p247 = scmp.ne.s32.totalorder %s239, %s242
      %p248 = scmp.eq.s32.totalorder %s25, 0
      %p249 = por %p247, %p248
      %p250 = scmp.ne.s32.totalorder %s239, %s242
      %p251 = scmp.eq.s32.totalorder %s30, 1
      %p252 = por %p250, %p251
      %p253 = scmp.ne.s32.totalorder %s242, %s243
      %p254 = scmp.eq.s32.totalorder %s30, 0
      %p255 = por %p253, %p254
      %p256 = scmp.ne.s32.totalorder %s242, %s243
      %p257 = scmp.eq.s32.totalorder %s31, 1
      %p258 = por %p256, %p257
      %p260 = scmp.ne.s32.totalorder %s243, %s259
      %p261 = scmp.eq.s32.totalorder %s31, 0
      %p262 = por %p260, %p261
      %s263 = ssub.s32 %s25, %s32
      %p264 = scmp.eq.s32.totalorder %s263, 0
      %s266 = sadd.s32 %s265, 1
      %s267 = scalar_select %p264, %s265, %s266
      %p270 = pneg %p264
      %p271 = scmp.eq.s32.totalorder %s25, 1
      %p272 = por %p270, %p271
      %p273 = scmp.ne.s32.totalorder %s265, %s268
      %p274 = scmp.eq.s32.totalorder %s25, 0
      %p275 = por %p273, %p274
      %p276 = scmp.ne.s32.totalorder %s265, %s268
      %p277 = scmp.eq.s32.totalorder %s30, 1
      %p278 = por %p276, %p277
      %p279 = scmp.ne.s32.totalorder %s268, %s269
      %p280 = scmp.eq.s32.totalorder %s30, 0
      %p281 = por %p279, %p280
      %p282 = scmp.ne.s32.totalorder %s268, %s269
      %p283 = scmp.eq.s32.totalorder %s31, 1
      %p284 = por %p282, %p283
      %p286 = scmp.ne.s32.totalorder %s269, %s285
      %p287 = scmp.eq.s32.totalorder %s31, 0
      %p288 = por %p286, %p287
      %p289 = scmp.le.s32.totalorder 1, %s25
      %p290 = scmp.lt.s32.totalorder %s25, 3
      %p291 = pnand %p289, %p290
      %p292 = pneg %p291
      // Predicated region
      $region9: #{forward_with_aux.2} parent=5 // pred_check
        _
      $region10: #{forward_with_aux.2} parent=5 // pred_check_branch
        %294 = sbr.rel (%p291) target = $region12
      $region11: #{forward_with_aux.2} parent=5 // pred_region
        %s295 = ssub.s32 %s25, 1
        // Predicated region
        $region13: #{forward_with_aux.2} parent=11 // pred_check
          %p296 = pneg %p124
        $region14: #{forward_with_aux.2} parent=11 // pred_check_branch
          %298 = sbr.rel (%p296) target = $region16
        $region15: #{forward_with_aux.2} parent=11 // pred_region
          _
        $region16: #{forward_with_aux.2} parent=11 // pred_fallthru
          _
        // Predicated region
        $region17: #{forward_with_aux.2} parent=11 // pred_check
          %p299 = pneg %p145
        $region18: #{forward_with_aux.2} parent=11 // pred_check_branch
          %301 = sbr.rel (%p299) target = $region20
        $region19: #{forward_with_aux.2} parent=11 // pred_region
          %s303 = ssub.s32 16, 16
          %304 = vsyncadd [#allocation8], %s303
          %s306 = sshll.u32 [#allocation7], 4
          %s307 = int_to_ptr.vmem [resolvable:$true] %s306
          %309 = dma.hbm_to_vmem [thread:$0]  %s4, 16, %s307, [#allocation8]
        $region20: #{forward_with_aux.2} parent=11 // pred_fallthru
          _
        // Predicated region
        $region21: #{forward_with_aux.2} parent=11 // pred_check
          %p310 = pneg %p166
        $region22: #{forward_with_aux.2} parent=11 // pred_check_branch
          %312 = sbr.rel (%p310) target = $region24
        $region23: #{forward_with_aux.2} parent=11 // pred_region
          _
        $region24: #{forward_with_aux.2} parent=11 // pred_fallthru
          _
        // Predicated region
        $region25: #{forward_with_aux.2} parent=11 // pred_check
          %p313 = pneg %p187
        $region26: #{forward_with_aux.2} parent=11 // pred_check_branch
          %315 = sbr.rel (%p313) target = $region28
        $region27: #{forward_with_aux.2} parent=11 // pred_region
          %s317 = ssub.s32 16, 16
          %318 = vsyncadd [#allocation8], %s317
          %s320 = sshll.u32 [#allocation9], 4
          %s321 = int_to_ptr.vmem [resolvable:$true] %s320
          %323 = dma.hbm_to_vmem [thread:$0]  %s6, 16, %s321, [#allocation8]
        $region28: #{forward_with_aux.2} parent=11 // pred_fallthru
          _
        // Predicated region
        $region29: #{forward_with_aux.2} parent=11 // pred_check
          %p324 = pneg %p208
        $region30: #{forward_with_aux.2} parent=11 // pred_check_branch
          %326 = sbr.rel (%p324) target = $region32
        $region31: #{forward_with_aux.2} parent=11 // pred_region
          %s328 = ssub.s32 2048, 2048
          %329 = vsyncadd [#allocation11], %s328
          %s330 = sshll.u32 [#allocation10], 4
          %s331 = int_to_ptr.vmem [resolvable:$true] %s330
          %336 = dma.hbm_to_vmem [thread:$0]  %s7, 2048, %s331, [#allocation11], 128, 128, 8
        $region32: #{forward_with_aux.2} parent=11 // pred_fallthru
          _
        // Predicated region
        $region33: #{forward_with_aux.2} parent=11 // pred_check
          %p337 = pneg %p229
        $region34: #{forward_with_aux.2} parent=11 // pred_check_branch
          %339 = sbr.rel (%p337) target = $region36
        $region35: #{forward_with_aux.2} parent=11 // pred_region
          %s341 = ssub.s32 16, 16
          %342 = vsyncadd [#allocation11], %s341
          %s344 = sshll.u32 [#allocation12], 4
          %s345 = int_to_ptr.vmem [resolvable:$true] %s344
          %347 = dma.hbm_to_vmem [thread:$0]  %s8, 16, %s345, [#allocation11]
        $region36: #{forward_with_aux.2} parent=11 // pred_fallthru
          _
      $region12: #{forward_with_aux.2} parent=5 // pred_fallthru
        _
      %p348 = scmp.lt.s32.totalorder %s25, 2
      // Predicated region
      $region37: #{forward_with_aux.2} parent=5 // pred_check
        %p349 = pneg %p348
      $region38: #{forward_with_aux.2} parent=5 // pred_check_branch
        %351 = sbr.rel (%p349) target = $region40
      $region39: #{forward_with_aux.2} parent=5 // pred_region
        // Predicated region
        $region41: #{forward_with_aux.2} parent=39 // pred_check
          %p352 = pneg %p45
        $region42: #{forward_with_aux.2} parent=39 // pred_check_branch
          %354 = sbr.rel (%p352) target = $region44
        $region43: #{forward_with_aux.2} parent=39 // pred_region
          %s355 = sand.u32 %s35, 1
          %s356 = scalar_lea.sflag [#allocation3], %s355
          %s357 = sand.u32 %s35, 1
          %s358 = smul.addr %s357, 64
          %s359 = scalar_lea.vmem [#allocation2], %s358
          %s361 = ssub.s32 1024, 1024
          %362 = vsyncadd %s356, %s361
          %s363 = smul.addr %s25, 8
          %s364 = smul.addr %s363, 128
          %s365 = scalar_lea.hbm %s0, %s364
          %s366 = sshll.u32 %s359, 4
          %s367 = int_to_ptr.vmem [resolvable:$true] %s366
          %372 = dma.hbm_to_vmem [thread:$0]  %s365, 1024, %s367, %s356, 128, 128, 8
        $region44: #{forward_with_aux.2} parent=39 // pred_fallthru
          _
        // Predicated region
        $region45: #{forward_with_aux.2} parent=39 // pred_check
          %p373 = pneg %p71
        $region46: #{forward_with_aux.2} parent=39 // pred_check_branch
          %375 = sbr.rel (%p373) target = $region48
        $region47: #{forward_with_aux.2} parent=39 // pred_region
          %s376 = sand.u32 %s25, 1
          %s377 = scalar_lea.sflag [#allocation5], %s376
          %s378 = sand.u32 %s61, 1
          %s379 = smul.addr %s378, 64
          %s380 = scalar_lea.vmem [#allocation4], %s379
          %s382 = ssub.s32 1024, 1024
          %383 = vsyncadd %s377, %s382
          %s384 = smul.addr %s25, 8
          %s385 = smul.addr %s384, 128
          %s386 = scalar_lea.hbm %s1, %s385
          %s387 = sshll.u32 %s380, 4
          %s388 = int_to_ptr.vmem [resolvable:$true] %s387
          %393 = dma.hbm_to_vmem [thread:$0]  %s386, 1024, %s388, %s377, 128, 128, 8
        $region48: #{forward_with_aux.2} parent=39 // pred_fallthru
          _
        // Predicated region
        $region49: #{forward_with_aux.2} parent=39 // pred_check
          %p394 = pneg %p97
        $region50: #{forward_with_aux.2} parent=39 // pred_check_branch
          %396 = sbr.rel (%p394) target = $region52
        $region51: #{forward_with_aux.2} parent=39 // pred_region
          %s397 = sand.u32 %s25, 1
          %s398 = scalar_lea.sflag [#allocation5], %s397
          %s399 = sand.u32 %s87, 1
          %s400 = smul.addr %s399, 64
          %s401 = scalar_lea.vmem [#allocation6], %s400
          %s403 = ssub.s32 1024, 1024
          %404 = vsyncadd %s398, %s403
          %s405 = smul.addr %s25, 8
          %s406 = smul.addr %s405, 128
          %s407 = scalar_lea.hbm %s2, %s406
          %s408 = sshll.u32 %s401, 4
          %s409 = int_to_ptr.vmem [resolvable:$true] %s408
          %414 = dma.hbm_to_vmem [thread:$0]  %s407, 1024, %s409, %s398, 128, 128, 8
        $region52: #{forward_with_aux.2} parent=39 // pred_fallthru
          _
      $region40: #{forward_with_aux.2} parent=5 // pred_fallthru
        _
      %p415 = scmp.le.s32.totalorder 1, %s25
      %p416 = scmp.lt.s32.totalorder %s25, 3
      %p417 = pnand %p415, %p416
      %p418 = pneg %p417
      // Predicated region
      $region53: #{forward_with_aux.2} parent=5 // pred_check
        _
      $region54: #{forward_with_aux.2} parent=5 // pred_check_branch
        %420 = sbr.rel (%p417) target = $region56
      $region55: #{forward_with_aux.2} parent=5 // pred_region
        %s421 = ssub.s32 %s25, 1
        %s422 = sand.u32 %s38, 1
        %s423 = scalar_lea.sflag [#allocation3], %s422
        %s424 = sand.u32 %s38, 1
        %s425 = smul.addr %s424, 64
        %s426 = scalar_lea.vmem [#allocation2], %s425
        // Predicated region
        $region57: #{forward_with_aux.2} parent=55 // pred_check
          %p427 = pneg %p51
        $region58: #{forward_with_aux.2} parent=55 // pred_check_branch
          %429 = sbr.rel (%p427) target = $region60
        $region59: #{forward_with_aux.2} parent=55 // pred_region
          %430 = dma.done %s423, 1024
        $region60: #{forward_with_aux.2} parent=55 // pred_fallthru
          _
        %s431 = sand.u32 %s30, 1
        %s432 = scalar_lea.sflag [#allocation5], %s431
        %s433 = sand.u32 %s64, 1
        %s434 = smul.addr %s433, 64
        %s435 = scalar_lea.vmem [#allocation4], %s434
        // Predicated region
        $region61: #{forward_with_aux.2} parent=55 // pred_check
          %p436 = pneg %p77
        $region62: #{forward_with_aux.2} parent=55 // pred_check_branch
          %438 = sbr.rel (%p436) target = $region64
        $region63: #{forward_with_aux.2} parent=55 // pred_region
          %439 = dma.done %s432, 1024
        $region64: #{forward_with_aux.2} parent=55 // pred_fallthru
          _
        %s440 = sand.u32 %s30, 1
        %s441 = scalar_lea.sflag [#allocation5], %s440
        %s442 = sand.u32 %s90, 1
        %s443 = smul.addr %s442, 64
        %s444 = scalar_lea.vmem [#allocation6], %s443
        // Predicated region
        $region65: #{forward_with_aux.2} parent=55 // pred_check
          %p445 = pneg %p103
        $region66: #{forward_with_aux.2} parent=55 // pred_check_branch
          %447 = sbr.rel (%p445) target = $region68
        $region67: #{forward_with_aux.2} parent=55 // pred_region
          %448 = dma.done %s441, 1024
        $region68: #{forward_with_aux.2} parent=55 // pred_fallthru
          _
        // Predicated region
        $region69: #{forward_with_aux.2} parent=55 // pred_check
          %p449 = pneg %p145
        $region70: #{forward_with_aux.2} parent=55 // pred_check_branch
          %451 = sbr.rel (%p449) target = $region72
        $region71: #{forward_with_aux.2} parent=55 // pred_region
          %452 = dma.done [#allocation8], 16
        $region72: #{forward_with_aux.2} parent=55 // pred_fallthru
          _
        // Predicated region
        $region73: #{forward_with_aux.2} parent=55 // pred_check
          %p453 = pneg %p187
        $region74: #{forward_with_aux.2} parent=55 // pred_check_branch
          %455 = sbr.rel (%p453) target = $region76
        $region75: #{forward_with_aux.2} parent=55 // pred_region
          %456 = dma.done [#allocation8], 16
        $region76: #{forward_with_aux.2} parent=55 // pred_fallthru
          _
        // Predicated region
        $region77: #{forward_with_aux.2} parent=55 // pred_check
          %p457 = pneg %p208
        $region78: #{forward_with_aux.2} parent=55 // pred_check_branch
          %459 = sbr.rel (%p457) target = $region80
        $region79: #{forward_with_aux.2} parent=55 // pred_region
          %460 = dma.done [#allocation11], 2048
        $region80: #{forward_with_aux.2} parent=55 // pred_fallthru
          _
        // Predicated region
        $region81: #{forward_with_aux.2} parent=55 // pred_check
          %p461 = pneg %p229
        $region82: #{forward_with_aux.2} parent=55 // pred_check_branch
          %463 = sbr.rel (%p461) target = $region84
        $region83: #{forward_with_aux.2} parent=55 // pred_region
          %464 = dma.done [#allocation11], 16
        $region84: #{forward_with_aux.2} parent=55 // pred_fallthru
          _
        %s465 = sand.u32 %s38, 1
        %s466 = scalar_lea.sflag [#allocation3], %s465
        %s467 = sand.u32 %s38, 1
        %s468 = smul.addr %s467, 64
        %s469 = scalar_lea.vmem [#allocation2], %s468
        %p470 = pneg %p51
        %p471 = pneg %p48
        %s472 = sand.u32 %s30, 1
        %s473 = scalar_lea.sflag [#allocation5], %s472
        %s474 = sand.u32 %s64, 1
        %s475 = smul.addr %s474, 64
        %s476 = scalar_lea.vmem [#allocation4], %s475
        %p477 = pneg %p77
        %p478 = pneg %p74
        %s479 = sand.u32 %s30, 1
        %s480 = scalar_lea.sflag [#allocation5], %s479
        %s481 = sand.u32 %s90, 1
        %s482 = smul.addr %s481, 64
        %s483 = scalar_lea.vmem [#allocation6], %s482
        %p484 = pneg %p103
        %p485 = pneg %p100
        %p486 = pneg %p124
        %p487 = pneg %p121
        %p488 = pneg %p145
        %p489 = pneg %p142
        %p490 = pneg %p166
        %p491 = pneg %p163
        %p492 = pneg %p187
        %p493 = pneg %p184
        %p494 = pneg %p208
        %p495 = pneg %p205
        %p496 = pneg %p229
        %p497 = pneg %p226
        %p498 = pneg %p255
        %p499 = pneg %p252
        %p500 = scmp.lt.s32.totalorder %s30, 1
        %s501 = scalar_select %p500, %s30, 1
        %s502 = smul.addr %s501, 8
        %s503 = smul.addr %s502, 8
        %s504 = scalar_lea.vmem %s9, %s503
        %p505 = pneg %p281
        %p506 = pneg %p278
        %p507 = scmp.lt.s32.totalorder %s30, 1
        %s508 = scalar_select %p507, %s30, 1
        %s509 = scalar_lea.vmem %s10, %s508
        %p510 = scmp.lt.s32.totalorder %s30, 1
        %s511 = scalar_select %p510, %s30, 1
        %s512 = smul.addr %s511, 8
        %s513 = smul.addr %s512, 8
        %s514 = scalar_lea.vmem %s9, %s513
        %p515 = scmp.lt.s32.totalorder %s30, 1
        %s516 = scalar_select %p515, %s30, 1
        %s517 = scalar_lea.vmem %s10, %s516
        %v518 = vld [vmem:[%s426] sm:$0xff]
        %v519 = vld [vmem:[%s426 + $0x8] sm:$0xff]
        %v520 = vld [vmem:[%s426 + $0x10] sm:$0xff]
        %v521 = vld [vmem:[%s426 + $0x18] sm:$0xff]
        %v522 = vld [vmem:[%s426 + $0x20] sm:$0xff]
        %v523 = vld [vmem:[%s426 + $0x28] sm:$0xff]
        %v524 = vld [vmem:[%s426 + $0x30] sm:$0xff]
        %v525 = vld [vmem:[%s426 + $0x38] sm:$0xff]
        %v526 = vld [vmem:[%s435] sm:$0xff]
        %v527 = vld [vmem:[%s435 + $0x8] sm:$0xff]
        %v528 = vld [vmem:[%s435 + $0x10] sm:$0xff]
        %v529 = vld [vmem:[%s435 + $0x18] sm:$0xff]
        %v530 = vld [vmem:[%s435 + $0x20] sm:$0xff]
        %v531 = vld [vmem:[%s435 + $0x28] sm:$0xff]
        %v532 = vld [vmem:[%s435 + $0x30] sm:$0xff]
        %v533 = vld [vmem:[%s435 + $0x38] sm:$0xff]
        %v534 = vld [vmem:[%s444] sm:$0xff]
        %v535 = vld [vmem:[%s444 + $0x8] sm:$0xff]
        %v536 = vld [vmem:[%s444 + $0x10] sm:$0xff]
        %v537 = vld [vmem:[%s444 + $0x18] sm:$0xff]
        %v538 = vld [vmem:[%s444 + $0x20] sm:$0xff]
        %v539 = vld [vmem:[%s444 + $0x28] sm:$0xff]
        %v540 = vld [vmem:[%s444 + $0x30] sm:$0xff]
        %v541 = vld [vmem:[%s444 + $0x38] sm:$0xff]
        %v542 = vld [vmem:[%s3] sm:$0xff]
        %v543 = vld [vmem:[%s3 + $0x8] sm:$0xff]
        %v544 = vld [vmem:[%s3 + $0x10] sm:$0xff]
        %v545 = vld [vmem:[%s3 + $0x18] sm:$0xff]
        %v546 = vld [vmem:[%s3 + $0x20] sm:$0xff]
        %v547 = vld [vmem:[%s3 + $0x28] sm:$0xff]
        %v548 = vld [vmem:[%s3 + $0x30] sm:$0xff]
        %v549 = vld [vmem:[%s3 + $0x38] sm:$0xff]
        %v550 = vld [vmem:[%s3 + $0x40] sm:$0xff]
        %v551 = vld [vmem:[%s3 + $0x48] sm:$0xff]
        %v552 = vld [vmem:[%s3 + $0x50] sm:$0xff]
        %v553 = vld [vmem:[%s3 + $0x58] sm:$0xff]
        %v554 = vld [vmem:[%s3 + $0x60] sm:$0xff]
        %v555 = vld [vmem:[%s3 + $0x68] sm:$0xff]
        %v556 = vld [vmem:[%s3 + $0x70] sm:$0xff]
        %v557 = vld [vmem:[%s3 + $0x78] sm:$0xff]
        %v558 = vld [vmem:[#allocation7] sm:$0x1]
        %v560 = vlaneseq
        %v561 = vshrl.u32 %v560, 7
        %v562 = vsub.s32 0, %v561
        %v563 = vrot.slane %v558, %v562
        %565 = vmatprep.subr.mxu0 0.0
        %566 = vmatpush1.msra.mxu0 %v542
        %567 = vmatprep.subr.mxu0 0.0
        %568 = vmatpush1.msra.mxu0 %v543
        %569 = vmatprep.subr.mxu0 0.0
        %570 = vmatpush1.msra.mxu0 %v544
        %571 = vmatprep.subr.mxu0 0.0
        %572 = vmatpush1.msra.mxu0 %v545
        %573 = vmatprep.subr.mxu0 0.0
        %574 = vmatpush1.msra.mxu0 %v546
        %575 = vmatprep.subr.mxu0 0.0
        %576 = vmatpush1.msra.mxu0 %v547
        %577 = vmatprep.subr.mxu0 0.0
        %578 = vmatpush1.msra.mxu0 %v548
        %579 = vmatprep.subr.mxu0 0.0
        %580 = vmatpush1.msra.mxu0 %v549
        %581 = vmatprep.subr.mxu0 0.0
        %582 = vmatpush1.msra.mxu0 %v550
        %583 = vmatprep.subr.mxu0 0.0
        %584 = vmatpush1.msra.mxu0 %v551
        %585 = vmatprep.subr.mxu0 0.0
        %586 = vmatpush1.msra.mxu0 %v552
        %587 = vmatprep.subr.mxu0 0.0
        %588 = vmatpush1.msra.mxu0 %v553
        %589 = vmatprep.subr.mxu0 0.0
        %590 = vmatpush1.msra.mxu0 %v554
        %591 = vmatprep.subr.mxu0 0.0
        %592 = vmatpush1.msra.mxu0 %v555
        %593 = vmatprep.subr.mxu0 0.0
        %594 = vmatpush1.msra.mxu0 %v556
        %595 = vmatprep.subr.mxu0 0.0
        %596 = vmatpush1.msra.mxu0 %v557
        %597 = vmatprep.subr.mxu0 0.0
        %598 = vmatpush1.msra.mxu0 0.0
        %599 = vmatprep.subr.mxu0 0.0
        %600 = vmatpush1.msra.mxu0 0.0
        %601 = vmatprep.subr.mxu0 0.0
        %602 = vmatpush1.msra.mxu0 0.0
        %603 = vmatprep.subr.mxu0 0.0
        %604 = vmatpush1.msra.mxu0 0.0
        %605 = vmatprep.subr.mxu0 0.0
        %606 = vmatpush1.msra.mxu0 0.0
        %607 = vmatprep.subr.mxu0 0.0
        %608 = vmatpush1.msra.mxu0 0.0
        %609 = vmatprep.subr.mxu0 0.0
        %610 = vmatpush1.msra.mxu0 0.0
        %611 = vmatprep.subr.mxu0 0.0
        %612 = vmatpush1.msra.mxu0 0.0
        %613 = vmatprep.subr.mxu0 0.0
        %614 = vmatpush1.msra.mxu0 0.0
        %615 = vmatprep.subr.mxu0 0.0
        %616 = vmatpush1.msra.mxu0 0.0
        %617 = vmatprep.subr.mxu0 0.0
        %618 = vmatpush1.msra.mxu0 0.0
        %619 = vmatprep.subr.mxu0 0.0
        %620 = vmatpush1.msra.mxu0 0.0
        %621 = vmatprep.subr.mxu0 0.0
        %622 = vmatpush1.msra.mxu0 0.0
        %623 = vmatprep.subr.mxu0 0.0
        %624 = vmatpush1.msra.mxu0 0.0
        %625 = vmatprep.subr.mxu0 0.0
        %626 = vmatpush1.msra.mxu0 0.0
        %627 = vmatprep.subr.mxu0 0.0
        %628 = vmatpush1.msra.mxu0 0.0
        %629 = vmatprep.mubr.f32.mxu0 0.0
        %630 = vmatmul.mubr.f32.gmra.mrb[0].mxu0 %v526
        %v631 = vpop.f32.mrb[0].mxu0
        %v632 = vadd.f32 %v563, %v631
        %v633 = vpop.f32.mrb[0].mxu0
        %634 = vmatprep.mubr.f32.mxu0 0.0
        %635 = vmatmul.mubr.f32.gmra.mrb[0].mxu0 %v527
        %v636 = vpop.f32.mrb[0].mxu0
        %v637 = vadd.f32 %v563, %v636
        %v638 = vpop.f32.mrb[0].mxu0
        %639 = vmatprep.mubr.f32.mxu0 0.0
        %640 = vmatmul.mubr.f32.gmra.mrb[0].mxu0 %v528
        %v641 = vpop.f32.mrb[0].mxu0
        %v642 = vadd.f32 %v563, %v641
        %v643 = vpop.f32.mrb[0].mxu0
        %644 = vmatprep.mubr.f32.mxu0 0.0
        %645 = vmatmul.mubr.f32.gmra.mrb[0].mxu0 %v529
        %v646 = vpop.f32.mrb[0].mxu0
        %v647 = vadd.f32 %v563, %v646
        %v648 = vpop.f32.mrb[0].mxu0
        %649 = vmatprep.mubr.f32.mxu0 0.0
        %650 = vmatmul.mubr.f32.gmra.mrb[0].mxu0 %v530
        %v651 = vpop.f32.mrb[0].mxu0
        %v652 = vadd.f32 %v563, %v651
        %v653 = vpop.f32.mrb[0].mxu0
        %654 = vmatprep.mubr.f32.mxu0 0.0
        %655 = vmatmul.mubr.f32.gmra.mrb[0].mxu0 %v531
        %v656 = vpop.f32.mrb[0].mxu0
        %v657 = vadd.f32 %v563, %v656
        %v658 = vpop.f32.mrb[0].mxu0
        %659 = vmatprep.mubr.f32.mxu0 0.0
        %660 = vmatmul.mubr.f32.gmra.mrb[0].mxu0 %v532
        %v661 = vpop.f32.mrb[0].mxu0
        %v662 = vadd.f32 %v563, %v661
        %v663 = vpop.f32.mrb[0].mxu0
        %664 = vmatprep.mubr.f32.mxu0 0.0
        %665 = vmatmul.mubr.f32.gmra.mrb[0].mxu0 %v533
        %v666 = vpop.f32.mrb[0].mxu0
        %v667 = vadd.f32 %v563, %v666
        %v668 = vpop.f32.mrb[0].mxu0
        %669 = vdwg.mxu0
        %v670 = vld [vmem:[%s5] sm:$0xff]
        %v671 = vld [vmem:[%s5 + $0x8] sm:$0xff]
        %v672 = vld [vmem:[%s5 + $0x10] sm:$0xff]
        %v673 = vld [vmem:[%s5 + $0x18] sm:$0xff]
        %v674 = vld [vmem:[%s5 + $0x20] sm:$0xff]
        %v675 = vld [vmem:[%s5 + $0x28] sm:$0xff]
        %v676 = vld [vmem:[%s5 + $0x30] sm:$0xff]
        %v677 = vld [vmem:[%s5 + $0x38] sm:$0xff]
        %v678 = vld [vmem:[%s5 + $0x40] sm:$0xff]
        %v679 = vld [vmem:[%s5 + $0x48] sm:$0xff]
        %v680 = vld [vmem:[%s5 + $0x50] sm:$0xff]
        %v681 = vld [vmem:[%s5 + $0x58] sm:$0xff]
        %v682 = vld [vmem:[%s5 + $0x60] sm:$0xff]
        %v683 = vld [vmem:[%s5 + $0x68] sm:$0xff]
        %v684 = vld [vmem:[%s5 + $0x70] sm:$0xff]
        %v685 = vld [vmem:[%s5 + $0x78] sm:$0xff]
        %v686 = vld [vmem:[#allocation9] sm:$0x1]
        %v688 = vlaneseq
        %v689 = vshrl.u32 %v688, 7
        %v690 = vsub.s32 0, %v689
        %v691 = vrot.slane %v686, %v690
        %693 = vmatprep.subr.mxu0 0.0
        %694 = vmatpush1.msra.mxu0 %v670
        %695 = vmatprep.subr.mxu0 0.0
        %696 = vmatpush1.msra.mxu0 %v671
        %697 = vmatprep.subr.mxu0 0.0
        %698 = vmatpush1.msra.mxu0 %v672
        %699 = vmatprep.subr.mxu0 0.0
        %700 = vmatpush1.msra.mxu0 %v673
        %701 = vmatprep.subr.mxu0 0.0
        %702 = vmatpush1.msra.mxu0 %v674
        %703 = vmatprep.subr.mxu0 0.0
        %704 = vmatpush1.msra.mxu0 %v675
        %705 = vmatprep.subr.mxu0 0.0
        %706 = vmatpush1.msra.mxu0 %v676
        %707 = vmatprep.subr.mxu0 0.0
        %708 = vmatpush1.msra.mxu0 %v677
        %709 = vmatprep.subr.mxu0 0.0
        %710 = vmatpush1.msra.mxu0 %v678
        %711 = vmatprep.subr.mxu0 0.0
        %712 = vmatpush1.msra.mxu0 %v679
        %713 = vmatprep.subr.mxu0 0.0
        %714 = vmatpush1.msra.mxu0 %v680
        %715 = vmatprep.subr.mxu0 0.0
        %716 = vmatpush1.msra.mxu0 %v681
        %717 = vmatprep.subr.mxu0 0.0
        %718 = vmatpush1.msra.mxu0 %v682
        %719 = vmatprep.subr.mxu0 0.0
        %720 = vmatpush1.msra.mxu0 %v683
        %721 = vmatprep.subr.mxu0 0.0
        %722 = vmatpush1.msra.mxu0 %v684
        %723 = vmatprep.subr.mxu0 0.0
        %724 = vmatpush1.msra.mxu0 %v685
        %725 = vmatprep.subr.mxu0 0.0
        %726 = vmatpush1.msra.mxu0 0.0
        %727 = vmatprep.subr.mxu0 0.0
        %728 = vmatpush1.msra.mxu0 0.0
        %729 = vmatprep.subr.mxu0 0.0
        %730 = vmatpush1.msra.mxu0 0.0
        %731 = vmatprep.subr.mxu0 0.0
        %732 = vmatpush1.msra.mxu0 0.0
        %733 = vmatprep.subr.mxu0 0.0
        %734 = vmatpush1.msra.mxu0 0.0
        %735 = vmatprep.subr.mxu0 0.0
        %736 = vmatpush1.msra.mxu0 0.0
        %737 = vmatprep.subr.mxu0 0.0
        %738 = vmatpush1.msra.mxu0 0.0
        %739 = vmatprep.subr.mxu0 0.0
        %740 = vmatpush1.msra.mxu0 0.0
        %741 = vmatprep.subr.mxu0 0.0
        %742 = vmatpush1.msra.mxu0 0.0
        %743 = vmatprep.subr.mxu0 0.0
        %744 = vmatpush1.msra.mxu0 0.0
        %745 = vmatprep.subr.mxu0 0.0
        %746 = vmatpush1.msra.mxu0 0.0
        %747 = vmatprep.subr.mxu0 0.0
        %748 = vmatpush1.msra.mxu0 0.0
        %749 = vmatprep.subr.mxu0 0.0
        %750 = vmatpush1.msra.mxu0 0.0
        %751 = vmatprep.subr.mxu0 0.0
        %752 = vmatpush1.msra.mxu0 0.0
        %753 = vmatprep.subr.mxu0 0.0
        %754 = vmatpush1.msra.mxu0 0.0
        %755 = vmatprep.subr.mxu0 0.0
        %756 = vmatpush1.msra.mxu0 0.0
        %757 = vmatprep.mubr.f32.mxu0 0.0
        %758 = vmatmul.mubr.f32.gmra.mrb[0].mxu0 %v518
        %v759 = vpop.f32.mrb[0].mxu0
        %v760 = vadd.f32 %v691, %v759
        %v761 = vpop.f32.mrb[0].mxu0
        %762 = vmatprep.mubr.f32.mxu0 0.0
        %763 = vmatmul.mubr.f32.gmra.mrb[0].mxu0 %v519
        %v764 = vpop.f32.mrb[0].mxu0
        %v765 = vadd.f32 %v691, %v764
        %v766 = vpop.f32.mrb[0].mxu0
        %767 = vmatprep.mubr.f32.mxu0 0.0
        %768 = vmatmul.mubr.f32.gmra.mrb[0].mxu0 %v520
        %v769 = vpop.f32.mrb[0].mxu0
        %v770 = vadd.f32 %v691, %v769
        %v771 = vpop.f32.mrb[0].mxu0
        %772 = vmatprep.mubr.f32.mxu0 0.0
        %773 = vmatmul.mubr.f32.gmra.mrb[0].mxu0 %v521
        %v774 = vpop.f32.mrb[0].mxu0
        %v775 = vadd.f32 %v691, %v774
        %v776 = vpop.f32.mrb[0].mxu0
        %777 = vmatprep.mubr.f32.mxu0 0.0
        %778 = vmatmul.mubr.f32.gmra.mrb[0].mxu0 %v522
        %v779 = vpop.f32.mrb[0].mxu0
        %v780 = vadd.f32 %v691, %v779
        %v781 = vpop.f32.mrb[0].mxu0
        %782 = vmatprep.mubr.f32.mxu0 0.0
        %783 = vmatmul.mubr.f32.gmra.mrb[0].mxu0 %v523
        %v784 = vpop.f32.mrb[0].mxu0
        %v785 = vadd.f32 %v691, %v784
        %v786 = vpop.f32.mrb[0].mxu0
        %787 = vmatprep.mubr.f32.mxu0 0.0
        %788 = vmatmul.mubr.f32.gmra.mrb[0].mxu0 %v524
        %v789 = vpop.f32.mrb[0].mxu0
        %v790 = vadd.f32 %v691, %v789
        %v791 = vpop.f32.mrb[0].mxu0
        %792 = vmatprep.mubr.f32.mxu0 0.0
        %793 = vmatmul.mubr.f32.gmra.mrb[0].mxu0 %v525
        %v794 = vpop.f32.mrb[0].mxu0
        %v795 = vadd.f32 %v691, %v794
        %v796 = vpop.f32.mrb[0].mxu0
        %797 = vdwg.mxu0
        %v798 = vld [vmem:[#allocation10] sm:$0xff]
        %v799 = vld [vmem:[#allocation10 + $0x8] sm:$0xff]
        %v800 = vld [vmem:[#allocation10 + $0x10] sm:$0xff]
        %v801 = vld [vmem:[#allocation10 + $0x18] sm:$0xff]
        %v802 = vld [vmem:[#allocation10 + $0x20] sm:$0xff]
        %v803 = vld [vmem:[#allocation10 + $0x28] sm:$0xff]
        %v804 = vld [vmem:[#allocation10 + $0x30] sm:$0xff]
        %v805 = vld [vmem:[#allocation10 + $0x38] sm:$0xff]
        %v806 = vld [vmem:[#allocation10 + $0x40] sm:$0xff]
        %v807 = vld [vmem:[#allocation10 + $0x48] sm:$0xff]
        %v808 = vld [vmem:[#allocation10 + $0x50] sm:$0xff]
        %v809 = vld [vmem:[#allocation10 + $0x58] sm:$0xff]
        %v810 = vld [vmem:[#allocation10 + $0x60] sm:$0xff]
        %v811 = vld [vmem:[#allocation10 + $0x68] sm:$0xff]
        %v812 = vld [vmem:[#allocation10 + $0x70] sm:$0xff]
        %v813 = vld [vmem:[#allocation10 + $0x78] sm:$0xff]
        %v814 = vld [vmem:[#allocation12] sm:$0x1]
        %v816 = vlaneseq
        %v817 = vshrl.u32 %v816, 7
        %v818 = vsub.s32 0, %v817
        %v819 = vrot.slane %v814, %v818
        %821 = vmatprep.subr.mxu0 0.0
        %822 = vmatpush1.msra.mxu0 %v798
        %823 = vmatprep.subr.mxu0 0.0
        %824 = vmatpush1.msra.mxu0 %v799
        %825 = vmatprep.subr.mxu0 0.0
        %826 = vmatpush1.msra.mxu0 %v800
        %827 = vmatprep.subr.mxu0 0.0
        %828 = vmatpush1.msra.mxu0 %v801
        %829 = vmatprep.subr.mxu0 0.0
        %830 = vmatpush1.msra.mxu0 %v802
        %831 = vmatprep.subr.mxu0 0.0
        %832 = vmatpush1.msra.mxu0 %v803
        %833 = vmatprep.subr.mxu0 0.0
        %834 = vmatpush1.msra.mxu0 %v804
        %835 = vmatprep.subr.mxu0 0.0
        %836 = vmatpush1.msra.mxu0 %v805
        %837 = vmatprep.subr.mxu0 0.0
        %838 = vmatpush1.msra.mxu0 %v806
        %839 = vmatprep.subr.mxu0 0.0
        %840 = vmatpush1.msra.mxu0 %v807
        %841 = vmatprep.subr.mxu0 0.0
        %842 = vmatpush1.msra.mxu0 %v808
        %843 = vmatprep.subr.mxu0 0.0
        %844 = vmatpush1.msra.mxu0 %v809
        %845 = vmatprep.subr.mxu0 0.0
        %846 = vmatpush1.msra.mxu0 %v810
        %847 = vmatprep.subr.mxu0 0.0
        %848 = vmatpush1.msra.mxu0 %v811
        %849 = vmatprep.subr.mxu0 0.0
        %850 = vmatpush1.msra.mxu0 %v812
        %851 = vmatprep.subr.mxu0 0.0
        %852 = vmatpush1.msra.mxu0 %v813
        %853 = vmatprep.subr.mxu0 0.0
        %854 = vmatpush1.msra.mxu0 0.0
        %855 = vmatprep.subr.mxu0 0.0
        %856 = vmatpush1.msra.mxu0 0.0
        %857 = vmatprep.subr.mxu0 0.0
        %858 = vmatpush1.msra.mxu0 0.0
        %859 = vmatprep.subr.mxu0 0.0
        %860 = vmatpush1.msra.mxu0 0.0
        %861 = vmatprep.subr.mxu0 0.0
        %862 = vmatpush1.msra.mxu0 0.0
        %863 = vmatprep.subr.mxu0 0.0
        %864 = vmatpush1.msra.mxu0 0.0
        %865 = vmatprep.subr.mxu0 0.0
        %866 = vmatpush1.msra.mxu0 0.0
        %867 = vmatprep.subr.mxu0 0.0
        %868 = vmatpush1.msra.mxu0 0.0
        %869 = vmatprep.subr.mxu0 0.0
        %870 = vmatpush1.msra.mxu0 0.0
        %871 = vmatprep.subr.mxu0 0.0
        %872 = vmatpush1.msra.mxu0 0.0
        %873 = vmatprep.subr.mxu0 0.0
        %874 = vmatpush1.msra.mxu0 0.0
        %875 = vmatprep.subr.mxu0 0.0
        %876 = vmatpush1.msra.mxu0 0.0
        %877 = vmatprep.subr.mxu0 0.0
        %878 = vmatpush1.msra.mxu0 0.0
        %879 = vmatprep.subr.mxu0 0.0
        %880 = vmatpush1.msra.mxu0 0.0
        %881 = vmatprep.subr.mxu0 0.0
        %882 = vmatpush1.msra.mxu0 0.0
        %883 = vmatprep.subr.mxu0 0.0
        %884 = vmatpush1.msra.mxu0 0.0
        %885 = vmatprep.mubr.f32.mxu0 0.0
        %886 = vmatmul.mubr.f32.gmra.mrb[0].mxu0 %v534
        %v887 = vpop.f32.mrb[0].mxu0
        %v888 = vadd.f32 %v819, %v887
        %v889 = vpop.f32.mrb[0].mxu0
        %890 = vmatprep.mubr.f32.mxu0 0.0
        %891 = vmatmul.mubr.f32.gmra.mrb[0].mxu0 %v535
        %v892 = vpop.f32.mrb[0].mxu0
        %v893 = vadd.f32 %v819, %v892
        %v894 = vpop.f32.mrb[0].mxu0
        %895 = vmatprep.mubr.f32.mxu0 0.0
        %896 = vmatmul.mubr.f32.gmra.mrb[0].mxu0 %v536
        %v897 = vpop.f32.mrb[0].mxu0
        %v898 = vadd.f32 %v819, %v897
        %v899 = vpop.f32.mrb[0].mxu0
        %900 = vmatprep.mubr.f32.mxu0 0.0
        %901 = vmatmul.mubr.f32.gmra.mrb[0].mxu0 %v537
        %v902 = vpop.f32.mrb[0].mxu0
        %v903 = vadd.f32 %v819, %v902
        %v904 = vpop.f32.mrb[0].mxu0
        %905 = vmatprep.mubr.f32.mxu0 0.0
        %906 = vmatmul.mubr.f32.gmra.mrb[0].mxu0 %v538
        %v907 = vpop.f32.mrb[0].mxu0
        %v908 = vadd.f32 %v819, %v907
        %v909 = vpop.f32.mrb[0].mxu0
        %910 = vmatprep.mubr.f32.mxu0 0.0
        %911 = vmatmul.mubr.f32.gmra.mrb[0].mxu0 %v539
        %v912 = vpop.f32.mrb[0].mxu0
        %v913 = vadd.f32 %v819, %v912
        %v914 = vpop.f32.mrb[0].mxu0
        %915 = vmatprep.mubr.f32.mxu0 0.0
        %916 = vmatmul.mubr.f32.gmra.mrb[0].mxu0 %v540
        %v917 = vpop.f32.mrb[0].mxu0
        %v918 = vadd.f32 %v819, %v917
        %v919 = vpop.f32.mrb[0].mxu0
        %920 = vmatprep.mubr.f32.mxu0 0.0
        %921 = vmatmul.mubr.f32.gmra.mrb[0].mxu0 %v541
        %v922 = vpop.f32.mrb[0].mxu0
        %v923 = vadd.f32 %v819, %v922
        %v924 = vpop.f32.mrb[0].mxu0
        %925 = vdwg.mxu0
        %vm926 = vcmask 130048
        %v928 = vsel %vm926, %v760, 0
        %v931 = vsel %vm926, %v765, 0
        %v934 = vsel %vm926, %v770, 0
        %v937 = vsel %vm926, %v775, 0
        %v940 = vsel %vm926, %v780, 0
        %v943 = vsel %vm926, %v785, 0
        %v946 = vsel %vm926, %v790, 0
        %v949 = vsel %vm926, %v795, 0
        %v952 = vsel %vm926, %v632, 0
        %v955 = vsel %vm926, %v637, 0
        %v958 = vsel %vm926, %v642, 0
        %v961 = vsel %vm926, %v647, 0
        %v964 = vsel %vm926, %v652, 0
        %v967 = vsel %vm926, %v657, 0
        %v970 = vsel %vm926, %v662, 0
        %v973 = vsel %vm926, %v667, 0
        %975 = vmatprep.subr.mxu0 0.0
        %976 = vmatpush1.xpose.msra.mxu0 %v952
        %977 = vmatprep.subr.mxu0 0.0
        %978 = vmatpush1.xpose.msra.mxu0 %v955
        %979 = vmatprep.subr.mxu0 0.0
        %980 = vmatpush1.xpose.msra.mxu0 %v958
        %981 = vmatprep.subr.mxu0 0.0
        %982 = vmatpush1.xpose.msra.mxu0 %v961
        %983 = vmatprep.subr.mxu0 0.0
        %984 = vmatpush1.xpose.msra.mxu0 %v964
        %985 = vmatprep.subr.mxu0 0.0
        %986 = vmatpush1.xpose.msra.mxu0 %v967
        %987 = vmatprep.subr.mxu0 0.0
        %988 = vmatpush1.xpose.msra.mxu0 %v970
        %989 = vmatprep.subr.mxu0 0.0
        %990 = vmatpush1.xpose.msra.mxu0 %v973
        %991 = vmatprep.subr.mxu0 0.0
        %992 = vmatpush1.xpose.msra.mxu0 0.0
        %993 = vmatprep.subr.mxu0 0.0
        %994 = vmatpush1.xpose.msra.mxu0 0.0
        %995 = vmatprep.subr.mxu0 0.0
        %996 = vmatpush1.xpose.msra.mxu0 0.0
        %997 = vmatprep.subr.mxu0 0.0
        %998 = vmatpush1.xpose.msra.mxu0 0.0
        %999 = vmatprep.subr.mxu0 0.0
        %1000 = vmatpush1.xpose.msra.mxu0 0.0
        %1001 = vmatprep.subr.mxu0 0.0
        %1002 = vmatpush1.xpose.msra.mxu0 0.0
        %1003 = vmatprep.subr.mxu0 0.0
        %1004 = vmatpush1.xpose.msra.mxu0 0.0
        %1005 = vmatprep.subr.mxu0 0.0
        %1006 = vmatpush1.xpose.msra.mxu0 0.0
        %1007 = vmatprep.subr.mxu0 0.0
        %1008 = vmatpush1.xpose.msra.mxu0 0.0
        %1009 = vmatprep.subr.mxu0 0.0
        %1010 = vmatpush1.xpose.msra.mxu0 0.0
        %1011 = vmatprep.subr.mxu0 0.0
        %1012 = vmatpush1.xpose.msra.mxu0 0.0
        %1013 = vmatprep.subr.mxu0 0.0
        %1014 = vmatpush1.xpose.msra.mxu0 0.0
        %1015 = vmatprep.subr.mxu0 0.0
        %1016 = vmatpush1.xpose.msra.mxu0 0.0
        %1017 = vmatprep.subr.mxu0 0.0
        %1018 = vmatpush1.xpose.msra.mxu0 0.0
        %1019 = vmatprep.subr.mxu0 0.0
        %1020 = vmatpush1.xpose.msra.mxu0 0.0
        %1021 = vmatprep.subr.mxu0 0.0
        %1022 = vmatpush1.xpose.msra.mxu0 0.0
        %1023 = vmatprep.subr.mxu0 0.0
        %1024 = vmatpush1.xpose.msra.mxu0 0.0
        %1025 = vmatprep.subr.mxu0 0.0
        %1026 = vmatpush1.xpose.msra.mxu0 0.0
        %1027 = vmatprep.subr.mxu0 0.0
        %1028 = vmatpush1.xpose.msra.mxu0 0.0
        %1029 = vmatprep.subr.mxu0 0.0
        %1030 = vmatpush1.xpose.msra.mxu0 0.0
        %1031 = vmatprep.subr.mxu0 0.0
        %1032 = vmatpush1.xpose.msra.mxu0 0.0
        %1033 = vmatprep.subr.mxu0 0.0
        %1034 = vmatpush1.xpose.msra.mxu0 0.0
        %1035 = vmatprep.subr.mxu0 0.0
        %1036 = vmatpush1.xpose.msra.mxu0 0.0
        %1037 = vmatprep.subr.mxu0 0.0
        %1038 = vmatpush1.xpose.msra.mxu0 0.0
        %1039 = vmatprep.mubr.f32.mxu0 0.0
        %1040 = vmatmul.mubr.f32.gmra.mrb[0].mxu0 %v928
        %v1041 = vpop.f32.mrb[0].mxu0
        %v1042 = vadd.f32 0.0, %v1041
        %v1043 = vpop.f32.mrb[0].mxu0
        %1044 = vmatprep.mubr.f32.mxu0 0.0
        %1045 = vmatmul.mubr.f32.gmra.mrb[0].mxu0 %v931
        %v1046 = vpop.f32.mrb[0].mxu0
        %v1047 = vadd.f32 0.0, %v1046
        %v1048 = vpop.f32.mrb[0].mxu0
        %1049 = vmatprep.mubr.f32.mxu0 0.0
        %1050 = vmatmul.mubr.f32.gmra.mrb[0].mxu0 %v934
        %v1051 = vpop.f32.mrb[0].mxu0
        %v1052 = vadd.f32 0.0, %v1051
        %v1053 = vpop.f32.mrb[0].mxu0
        %1054 = vmatprep.mubr.f32.mxu0 0.0
        %1055 = vmatmul.mubr.f32.gmra.mrb[0].mxu0 %v937
        %v1056 = vpop.f32.mrb[0].mxu0
        %v1057 = vadd.f32 0.0, %v1056
        %v1058 = vpop.f32.mrb[0].mxu0
        %1059 = vmatprep.mubr.f32.mxu0 0.0
        %1060 = vmatmul.mubr.f32.gmra.mrb[0].mxu0 %v940
        %v1061 = vpop.f32.mrb[0].mxu0
        %v1062 = vadd.f32 0.0, %v1061
        %v1063 = vpop.f32.mrb[0].mxu0
        %1064 = vmatprep.mubr.f32.mxu0 0.0
        %1065 = vmatmul.mubr.f32.gmra.mrb[0].mxu0 %v943
        %v1066 = vpop.f32.mrb[0].mxu0
        %v1067 = vadd.f32 0.0, %v1066
        %v1068 = vpop.f32.mrb[0].mxu0
        %1069 = vmatprep.mubr.f32.mxu0 0.0
        %1070 = vmatmul.mubr.f32.gmra.mrb[0].mxu0 %v946
        %v1071 = vpop.f32.mrb[0].mxu0
        %v1072 = vadd.f32 0.0, %v1071
        %v1073 = vpop.f32.mrb[0].mxu0
        %1074 = vmatprep.mubr.f32.mxu0 0.0
        %1075 = vmatmul.mubr.f32.gmra.mrb[0].mxu0 %v949
        %v1076 = vpop.f32.mrb[0].mxu0
        %v1077 = vadd.f32 0.0, %v1076
        %v1078 = vpop.f32.mrb[0].mxu0
        %1079 = vdwg.mxu0
        %vm1080 = vcmask 523264
        %v1081 = vsel %vm1080, %v1042, -inf
        %v1082 = vsel %vm1080, %v1047, -inf
        %v1083 = vsel %vm1080, %v1052, -inf
        %v1084 = vsel %vm1080, %v1057, -inf
        %v1085 = vsel %vm1080, %v1062, -inf
        %v1086 = vmax.f32 %v1081, %v1085
        %v1087 = vsel %vm1080, %v1067, -inf
        %v1088 = vmax.f32 %v1082, %v1087
        %v1089 = vsel %vm1080, %v1072, -inf
        %v1090 = vmax.f32 %v1083, %v1089
        %v1091 = vsel %vm1080, %v1077, -inf
        %v1092 = vmax.f32 %v1084, %v1091
        %v1093 = vmax.f32 %v1086, %v1088
        %v1094 = vmax.f32 %v1090, %v1092
        %v1095 = vmax.f32 %v1093, %v1094
        %v1096 = vrot.slane %v1095, 4
        %v1097 = vmax.f32 %v1095, %v1096
        %v1098 = vrot.slane %v1097, 2
        %v1099 = vmax.f32 %v1097, %v1098
        %v1100 = vrot.slane %v1099, 1
        %v1101 = vmax.f32 %v1099, %v1100
        %v1102 = vlaneseq
        %v1103 = vshrl.u32 %v1102, 7
        %v1104 = vadd.s32 %v1103, 8
        %v1105 = vadd.s32 %v1103, 16
        %v1106 = vadd.s32 %v1103, 24
        %v1107 = vadd.s32 %v1103, 32
        %v1108 = vadd.s32 %v1103, 40
        %v1109 = vadd.s32 %v1103, 48
        %v1110 = vadd.s32 %v1103, 56
        %vm1111 = vcmp.eq.f32.partialorder %v1042, %v1101
        %vm1112 = vcmp.eq.f32.partialorder %v1047, %v1101
        %vm1113 = vcmp.eq.f32.partialorder %v1052, %v1101
        %vm1114 = vcmp.eq.f32.partialorder %v1057, %v1101
        %vm1115 = vcmp.eq.f32.partialorder %v1062, %v1101
        %vm1116 = vcmp.eq.f32.partialorder %v1067, %v1101
        %vm1117 = vcmp.eq.f32.partialorder %v1072, %v1101
        %vm1118 = vcmp.eq.f32.partialorder %v1077, %v1101
        %v1119 = vsel %vm1111, %v1103, 64
        %v1120 = vsel %vm1112, %v1104, 64
        %v1121 = vsel %vm1113, %v1105, 64
        %v1122 = vsel %vm1114, %v1106, 64
        %v1123 = vsel %vm1115, %v1107, 64
        %v1124 = vsel %vm1116, %v1108, 64
        %v1125 = vsel %vm1117, %v1109, 64
        %v1126 = vsel %vm1118, %v1110, 64
        %v1127 = vsel %vm1080, %v1119, 2147483647
        %v1128 = vsel %vm1080, %v1120, 2147483647
        %v1129 = vsel %vm1080, %v1121, 2147483647
        %v1130 = vsel %vm1080, %v1122, 2147483647
        %v1131 = vsel %vm1080, %v1123, 2147483647
        %vm1132 = vcmp.lt.s32.totalorder %v1127, %v1131
        %v1133 = vsel %vm1132, %v1127, %v1131
        %v1134 = vsel %vm1080, %v1124, 2147483647
        %vm1135 = vcmp.lt.s32.totalorder %v1128, %v1134
        %v1136 = vsel %vm1135, %v1128, %v1134
        %v1137 = vsel %vm1080, %v1125, 2147483647
        %vm1138 = vcmp.lt.s32.totalorder %v1129, %v1137
        %v1139 = vsel %vm1138, %v1129, %v1137
        %v1140 = vsel %vm1080, %v1126, 2147483647
        %vm1141 = vcmp.lt.s32.totalorder %v1130, %v1140
        %v1142 = vsel %vm1141, %v1130, %v1140
        %vm1143 = vcmp.lt.s32.totalorder %v1133, %v1136
        %v1144 = vsel %vm1143, %v1133, %v1136
        %vm1145 = vcmp.lt.s32.totalorder %v1139, %v1142
        %v1146 = vsel %vm1145, %v1139, %v1142
        %vm1147 = vcmp.lt.s32.totalorder %v1144, %v1146
        %v1148 = vsel %vm1147, %v1144, %v1146
        %v1149 = vrot.slane %v1148, 4
        %vm1150 = vcmp.lt.s32.totalorder %v1148, %v1149
        %v1151 = vsel %vm1150, %v1148, %v1149
        %v1152 = vrot.slane %v1151, 2
        %vm1153 = vcmp.lt.s32.totalorder %v1151, %v1152
        %v1154 = vsel %vm1153, %v1151, %v1152
        %v1155 = vrot.slane %v1154, 1
        %vm1156 = vcmp.lt.s32.totalorder %v1154, %v1155
        %v1157 = vsel %vm1156, %v1154, %v1155
        %vm1158 = vcmp.eq.s32.totalorder %v1103, %v1157
        %vm1159 = vcmp.eq.s32.totalorder %v1104, %v1157
        %vm1160 = vcmp.eq.s32.totalorder %v1105, %v1157
        %vm1161 = vcmp.eq.s32.totalorder %v1106, %v1157
        %vm1162 = vcmp.eq.s32.totalorder %v1107, %v1157
        %vm1163 = vcmp.eq.s32.totalorder %v1108, %v1157
        %vm1164 = vcmp.eq.s32.totalorder %v1109, %v1157
        %vm1165 = vcmp.eq.s32.totalorder %v1110, %v1157
        %v1166 = vsel %vm1158, 1, 0
        %v1167 = vsel %vm1159, 1, 0
        %v1168 = vsel %vm1160, 1, 0
        %v1169 = vsel %vm1161, 1, 0
        %v1170 = vsel %vm1162, 1, 0
        %v1171 = vsel %vm1163, 1, 0
        %v1172 = vsel %vm1164, 1, 0
        %v1173 = vsel %vm1165, 1, 0
        %v1174 = vcvt.s32.f32 %v1166
        %v1175 = vcvt.s32.f32 %v1167
        %v1176 = vcvt.s32.f32 %v1168
        %v1177 = vcvt.s32.f32 %v1169
        %v1178 = vcvt.s32.f32 %v1170
        %v1179 = vcvt.s32.f32 %v1171
        %v1180 = vcvt.s32.f32 %v1172
        %v1181 = vcvt.s32.f32 %v1173
        %1182 = vxpose.xlu0.b32.start [1/16] %v1174, 128
        %1183 = vxpose.xlu0.b32.cont [2/16] %v1175, 128
        %1184 = vxpose.xlu0.b32.cont [3/16] %v1176, 128
        %1185 = vxpose.xlu0.b32.cont [4/16] %v1177, 128
        %1186 = vxpose.xlu0.b32.cont [5/16] %v1178, 128
        %1187 = vxpose.xlu0.b32.cont [6/16] %v1179, 128
        %1188 = vxpose.xlu0.b32.cont [7/16] %v1180, 128
        %1189 = vxpose.xlu0.b32.cont [8/16] %v1181, 128
        %1190 = vxpose.xlu0.b32.cont [9/16] 0.0, 128
        %1191 = vxpose.xlu0.b32.cont [10/16] 0.0, 128
        %1192 = vxpose.xlu0.b32.cont [11/16] 0.0, 128
        %1193 = vxpose.xlu0.b32.cont [12/16] 0.0, 128
        %1194 = vxpose.xlu0.b32.cont [13/16] 0.0, 128
        %1195 = vxpose.xlu0.b32.cont [14/16] 0.0, 128
        %1196 = vxpose.xlu0.b32.cont [15/16] 0.0, 128
        %1197 = vxpose.xlu0.b32.end [16/16] 0.0, 128
        %v1198 = vpop.trf.xlu0
        %v1199 = vpop.trf.xlu0
        %v1200 = vpop.trf.xlu0
        %v1201 = vpop.trf.xlu0
        %v1202 = vpop.trf.xlu0
        %v1203 = vpop.trf.xlu0
        %v1204 = vpop.trf.xlu0
        %v1205 = vpop.trf.xlu0
        %v1206 = vpop.trf.xlu0
        %v1207 = vpop.trf.xlu0
        %v1208 = vpop.trf.xlu0
        %v1209 = vpop.trf.xlu0
        %v1210 = vpop.trf.xlu0
        %v1211 = vpop.trf.xlu0
        %v1212 = vpop.trf.xlu0
        %v1213 = vpop.trf.xlu0
        %v1215 = vsel %vm1080, %v1198, 0
        %v1218 = vsel %vm1080, %v1199, 0
        %v1221 = vsel %vm1080, %v1200, 0
        %v1224 = vsel %vm1080, %v1201, 0
        %v1227 = vsel %vm1080, %v1202, 0
        %v1230 = vsel %vm1080, %v1203, 0
        %v1233 = vsel %vm1080, %v1204, 0
        %v1236 = vsel %vm1080, %v1205, 0
        %1238 = vmatprep.subr.mxu0 0.0
        %1239 = vmatpush1.msra.mxu0 %v888
        %1240 = vmatprep.subr.mxu0 0.0
        %1241 = vmatpush1.msra.mxu0 %v893
        %1242 = vmatprep.subr.mxu0 0.0
        %1243 = vmatpush1.msra.mxu0 %v898
        %1244 = vmatprep.subr.mxu0 0.0
        %1245 = vmatpush1.msra.mxu0 %v903
        %1246 = vmatprep.subr.mxu0 0.0
        %1247 = vmatpush1.msra.mxu0 %v908
        %1248 = vmatprep.subr.mxu0 0.0
        %1249 = vmatpush1.msra.mxu0 %v913
        %1250 = vmatprep.subr.mxu0 0.0
        %1251 = vmatpush1.msra.mxu0 %v918
        %1252 = vmatprep.subr.mxu0 0.0
        %1253 = vmatpush1.msra.mxu0 %v923
        %1254 = vmatprep.subr.mxu0 0.0
        %1255 = vmatpush1.msra.mxu0 0.0
        %1256 = vmatprep.subr.mxu0 0.0
        %1257 = vmatpush1.msra.mxu0 0.0
        %1258 = vmatprep.subr.mxu0 0.0
        %1259 = vmatpush1.msra.mxu0 0.0
        %1260 = vmatprep.subr.mxu0 0.0
        %1261 = vmatpush1.msra.mxu0 0.0
        %1262 = vmatprep.subr.mxu0 0.0
        %1263 = vmatpush1.msra.mxu0 0.0
        %1264 = vmatprep.subr.mxu0 0.0
        %1265 = vmatpush1.msra.mxu0 0.0
        %1266 = vmatprep.subr.mxu0 0.0
        %1267 = vmatpush1.msra.mxu0 0.0
        %1268 = vmatprep.subr.mxu0 0.0
        %1269 = vmatpush1.msra.mxu0 0.0
        %1270 = vmatprep.subr.mxu0 0.0
        %1271 = vmatpush1.msra.mxu0 0.0
        %1272 = vmatprep.subr.mxu0 0.0
        %1273 = vmatpush1.msra.mxu0 0.0
        %1274 = vmatprep.subr.mxu0 0.0
        %1275 = vmatpush1.msra.mxu0 0.0
        %1276 = vmatprep.subr.mxu0 0.0
        %1277 = vmatpush1.msra.mxu0 0.0
        %1278 = vmatprep.subr.mxu0 0.0
        %1279 = vmatpush1.msra.mxu0 0.0
        %1280 = vmatprep.subr.mxu0 0.0
        %1281 = vmatpush1.msra.mxu0 0.0
        %1282 = vmatprep.subr.mxu0 0.0
        %1283 = vmatpush1.msra.mxu0 0.0
        %1284 = vmatprep.subr.mxu0 0.0
        %1285 = vmatpush1.msra.mxu0 0.0
        %1286 = vmatprep.subr.mxu0 0.0
        %1287 = vmatpush1.msra.mxu0 0.0
        %1288 = vmatprep.subr.mxu0 0.0
        %1289 = vmatpush1.msra.mxu0 0.0
        %1290 = vmatprep.subr.mxu0 0.0
        %1291 = vmatpush1.msra.mxu0 0.0
        %1292 = vmatprep.subr.mxu0 0.0
        %1293 = vmatpush1.msra.mxu0 0.0
        %1294 = vmatprep.subr.mxu0 0.0
        %1295 = vmatpush1.msra.mxu0 0.0
        %1296 = vmatprep.subr.mxu0 0.0
        %1297 = vmatpush1.msra.mxu0 0.0
        %1298 = vmatprep.subr.mxu0 0.0
        %1299 = vmatpush1.msra.mxu0 0.0
        %1300 = vmatprep.subr.mxu0 0.0
        %1301 = vmatpush1.msra.mxu0 0.0
        %1302 = vmatprep.mubr.f32.mxu0 0.0
        %1303 = vmatmul.mubr.f32.gmra.mrb[0].mxu0 %v1215
        %v1304 = vpop.f32.mrb[0].mxu0
        %v1305 = vadd.f32 0.0, %v1304
        %v1306 = vpop.f32.mrb[0].mxu0
        %1307 = vmatprep.mubr.f32.mxu0 0.0
        %1308 = vmatmul.mubr.f32.gmra.mrb[0].mxu0 %v1218
        %v1309 = vpop.f32.mrb[0].mxu0
        %v1310 = vadd.f32 0.0, %v1309
        %v1311 = vpop.f32.mrb[0].mxu0
        %1312 = vmatprep.mubr.f32.mxu0 0.0
        %1313 = vmatmul.mubr.f32.gmra.mrb[0].mxu0 %v1221
        %v1314 = vpop.f32.mrb[0].mxu0
        %v1315 = vadd.f32 0.0, %v1314
        %v1316 = vpop.f32.mrb[0].mxu0
        %1317 = vmatprep.mubr.f32.mxu0 0.0
        %1318 = vmatmul.mubr.f32.gmra.mrb[0].mxu0 %v1224
        %v1319 = vpop.f32.mrb[0].mxu0
        %v1320 = vadd.f32 0.0, %v1319
        %v1321 = vpop.f32.mrb[0].mxu0
        %1322 = vmatprep.mubr.f32.mxu0 0.0
        %1323 = vmatmul.mubr.f32.gmra.mrb[0].mxu0 %v1227
        %v1324 = vpop.f32.mrb[0].mxu0
        %v1325 = vadd.f32 0.0, %v1324
        %v1326 = vpop.f32.mrb[0].mxu0
        %1327 = vmatprep.mubr.f32.mxu0 0.0
        %1328 = vmatmul.mubr.f32.gmra.mrb[0].mxu0 %v1230
        %v1329 = vpop.f32.mrb[0].mxu0
        %v1330 = vadd.f32 0.0, %v1329
        %v1331 = vpop.f32.mrb[0].mxu0
        %1332 = vmatprep.mubr.f32.mxu0 0.0
        %1333 = vmatmul.mubr.f32.gmra.mrb[0].mxu0 %v1233
        %v1334 = vpop.f32.mrb[0].mxu0
        %v1335 = vadd.f32 0.0, %v1334
        %v1336 = vpop.f32.mrb[0].mxu0
        %1337 = vmatprep.mubr.f32.mxu0 0.0
        %1338 = vmatmul.mubr.f32.gmra.mrb[0].mxu0 %v1236
        %v1339 = vpop.f32.mrb[0].mxu0
        %v1340 = vadd.f32 0.0, %v1339
        %v1341 = vpop.f32.mrb[0].mxu0
        %1342 = vdwg.mxu0
        %1343 = vst [vmem:[%s514] sm:$0xff] %v1305
        %1344 = vst [vmem:[%s514 + $0x8] sm:$0xff] %v1310
        %1345 = vst [vmem:[%s514 + $0x10] sm:$0xff] %v1315
        %1346 = vst [vmem:[%s514 + $0x18] sm:$0xff] %v1320
        %1347 = vst [vmem:[%s514 + $0x20] sm:$0xff] %v1325
        %1348 = vst [vmem:[%s514 + $0x28] sm:$0xff] %v1330
        %1349 = vst [vmem:[%s514 + $0x30] sm:$0xff] %v1335
        %1350 = vst [vmem:[%s514 + $0x38] sm:$0xff] %v1340
        %vm1351 = vcmask 516096
        %1352 = vst.msk [vmem:[%s517] sm:$0x1] %vm1351, %v1101
        %p1353 = scmp.lt.s32.totalorder %s30, 1
        %s1354 = scalar_select %p1353, %s30, 1
        %s1355 = smul.addr %s1354, 8
        %s1356 = smul.addr %s1355, 8
        %s1357 = scalar_lea.vmem %s9, %s1356
        %p1358 = scmp.lt.s32.totalorder %s30, 1
        %s1359 = scalar_select %p1358, %s30, 1
        %s1360 = scalar_lea.vmem %s10, %s1359
        // Predicated region
        $region85: #{forward_with_aux.2} parent=55 // pred_check
          %p1361 = pneg %p252
        $region86: #{forward_with_aux.2} parent=55 // pred_check_branch
          %1363 = sbr.rel (%p1361) target = $region88
        $region87: #{forward_with_aux.2} parent=55 // pred_region
          _
        $region88: #{forward_with_aux.2} parent=55 // pred_fallthru
          _
        // Predicated region
        $region89: #{forward_with_aux.2} parent=55 // pred_check
          %p1364 = pneg %p278
        $region90: #{forward_with_aux.2} parent=55 // pred_check_branch
          %1366 = sbr.rel (%p1364) target = $region92
        $region91: #{forward_with_aux.2} parent=55 // pred_region
          _
        $region92: #{forward_with_aux.2} parent=55 // pred_fallthru
          _
      $region56: #{forward_with_aux.2} parent=5 // pred_fallthru
        _
      %p1367 = scmp.le.s32.totalorder 2, %s25
      // Predicated region
      $region93: #{forward_with_aux.2} parent=5 // pred_check
        %p1368 = pneg %p1367
      $region94: #{forward_with_aux.2} parent=5 // pred_check_branch
        %1370 = sbr.rel (%p1368) target = $region96
      $region95: #{forward_with_aux.2} parent=5 // pred_region
        %s1371 = ssub.s32 %s25, 2
        // Predicated region
        $region97: #{forward_with_aux.2} parent=95 // pred_check
          %p1372 = pneg %p258
        $region98: #{forward_with_aux.2} parent=95 // pred_check_branch
          %1374 = sbr.rel (%p1372) target = $region100
        $region99: #{forward_with_aux.2} parent=95 // pred_region
          %p1375 = scmp.lt.s32.totalorder %s31, 1
          %s1376 = scalar_select %p1375, %s31, 1
          %s1377 = smul.addr %s1376, 8
          %s1378 = smul.addr %s1377, 8
          %s1379 = scalar_lea.vmem %s9, %s1378
        $region100: #{forward_with_aux.2} parent=95 // pred_fallthru
          _
        // Predicated region
        $region101: #{forward_with_aux.2} parent=95 // pred_check
          %p1380 = pneg %p284
        $region102: #{forward_with_aux.2} parent=95 // pred_check_branch
          %1382 = sbr.rel (%p1380) target = $region104
        $region103: #{forward_with_aux.2} parent=95 // pred_region
          %p1383 = scmp.lt.s32.totalorder %s31, 1
          %s1384 = scalar_select %p1383, %s31, 1
          %s1385 = scalar_lea.vmem %s10, %s1384
        $region104: #{forward_with_aux.2} parent=95 // pred_fallthru
          _
      $region96: #{forward_with_aux.2} parent=5 // pred_fallthru
        _
    $region6: #{forward_with_aux.2} parent=1 // loop_footer
      %s29 = sadd.s32 1, %s25
    $region7: #{forward_with_aux.2} parent=1 // loop_footer_branch
      %24 = sbr.rel target = $region3
    $region8: #{forward_with_aux.2} parent=1 // loop_exit
      _
    %1386 = vsyncpa [#allocation3], 1
    %s1387 = scalar_lea.sflag [#allocation3], 1
    %1388 = vsyncpa %s1387, 1
    %1389 = vsyncpa [#allocation5], 1
    %s1390 = scalar_lea.sflag [#allocation5], 1
    %1391 = vsyncpa %s1390, 1
    %1392 = vsyncpa [#allocation8], 1
    %1393 = vsyncpa [#allocation11], 1

// kernel: forward_with_aux.3
$region0: #{forward_with_aux.3}
  #allocation0 [shape = 'u32[]', space=smem, size = 0x4, offset = 0x4, fixed_abs, tag = 'smem constant byte address 0x4 - core index']
  #allocation1 [shape = 'u32[144,128]{1,0:T(1,128)}', space=vmem, size = 0x12000, scoped, tag = 'internal scratch']
  %s0 = inlined_call_operand.vmem [shape: bf16[2,3,160,256], index: 0, kind: input, shape index: {}]
  %s1 = inlined_call_operand.vmem [shape: bf16[9,256,128], index: 1, kind: input, shape index: {}]
  %s2 = inlined_call_operand.vmem [shape: f32[1,128], index: 2, kind: input, shape index: {}]
  %s3 = inlined_call_operand.vmem [shape: f32[2,128,128], index: 3, kind: input, shape index: {}]
  %s4 = inlined_call_operand.vmem [shape: f32[2,128,1], index: 4, kind: input, shape index: {}]
  %s5 = inlined_call_operand.vmem [shape: f32[2,128,128], index: 5, kind: output, shape index: {}]
  %s6 = sld [smem:[#allocation0]]
  $region53: #{forward_with_aux.3} parent=0
    _
  %s8 = ssub.s32 1, %s6
  %s9 = scalar_select 0, %s8, %s6
  loop: start=0, step=1, limit=4
  $region2: #{forward_with_aux.3} parent=0 // loop_pre_header
    _
  $region3: #{forward_with_aux.3} parent=0 // loop_header
    %s11 = sphi 0, %s15
    %p12 = scmp.ge.s32.totalorder %s11, 4
    %s21 = sphi 0, %s23
    %s24 = sphi 0, %s21
    %s25 = sphi 0, %s24
    %s41 = sphi 0, %s25
    %s45 = sphi 0, %s45
    %s47 = sphi 0, %s45
    %s48 = sphi 0, %s47
    %s62 = sphi 0, %s48
    %s66 = sphi 0, %s66
    %s68 = sphi 0, %s66
    %s69 = sphi 0, %s68
    %s83 = sphi 0, %s69
    %s89 = sphi 0, %s91
    %s92 = sphi 0, %s89
    %s93 = sphi 0, %s92
    %s109 = sphi 0, %s93
    %s115 = sphi 0, %s117
    %s118 = sphi 0, %s115
    %s119 = sphi 0, %s118
    %s135 = sphi 0, %s119
    %s141 = sphi 0, %s143
    %s144 = sphi 0, %s141
    %s145 = sphi 0, %s144
    %s161 = sphi 0, %s145
  $region4: #{forward_with_aux.3} parent=0 // loop_header_branch
    %14 = sbr.rel (%p12) target = $region8
  $region5: #{forward_with_aux.3} parent=0 // loop_body
    %s16 = ssub.s32 %s11, 1
    %s17 = ssub.s32 %s11, 2
    %s18 = sadd.s32 %s11, 1
    %s19 = ssub.s32 %s11, %s18
    %p20 = scmp.eq.s32.totalorder %s19, 0
    %s22 = sadd.s32 %s21, 1
    %s23 = scalar_select %p20, %s21, %s22
    %p26 = pneg %p20
    %p27 = scmp.eq.s32.totalorder %s11, 1
    %p28 = por %p26, %p27
    %p29 = scmp.ne.s32.totalorder %s21, %s24
    %p30 = scmp.eq.s32.totalorder %s11, 0
    %p31 = por %p29, %p30
    %p32 = scmp.ne.s32.totalorder %s21, %s24
    %p33 = scmp.eq.s32.totalorder %s16, 1
    %p34 = por %p32, %p33
    %p35 = scmp.ne.s32.totalorder %s24, %s25
    %p36 = scmp.eq.s32.totalorder %s16, 0
    %p37 = por %p35, %p36
    %p38 = scmp.ne.s32.totalorder %s24, %s25
    %p39 = scmp.eq.s32.totalorder %s17, 1
    %p40 = por %p38, %p39
    %p42 = scmp.ne.s32.totalorder %s25, %s41
    %p43 = scmp.eq.s32.totalorder %s17, 0
    %p44 = por %p42, %p43
    %s46 = sadd.s32 %s45, 1
    %p49 = scmp.eq.s32.totalorder %s11, 1
    %p50 = scmp.ne.s32.totalorder %s45, %s47
    %p51 = scmp.eq.s32.totalorder %s11, 0
    %p52 = por %p50, %p51
    %p53 = scmp.ne.s32.totalorder %s45, %s47
    %p54 = scmp.eq.s32.totalorder %s16, 1
    %p55 = por %p53, %p54
    %p56 = scmp.ne.s32.totalorder %s47, %s48
    %p57 = scmp.eq.s32.totalorder %s16, 0
    %p58 = por %p56, %p57
    %p59 = scmp.ne.s32.totalorder %s47, %s48
    %p60 = scmp.eq.s32.totalorder %s17, 1
    %p61 = por %p59, %p60
    %p63 = scmp.ne.s32.totalorder %s48, %s62
    %p64 = scmp.eq.s32.totalorder %s17, 0
    %p65 = por %p63, %p64
    %s67 = sadd.s32 %s66, 1
    %p70 = scmp.eq.s32.totalorder %s11, 1
    %p71 = scmp.ne.s32.totalorder %s66, %s68
    %p72 = scmp.eq.s32.totalorder %s11, 0
    %p73 = por %p71, %p72
    %p74 = scmp.ne.s32.totalorder %s66, %s68
    %p75 = scmp.eq.s32.totalorder %s16, 1
    %p76 = por %p74, %p75
    %p77 = scmp.ne.s32.totalorder %s68, %s69
    %p78 = scmp.eq.s32.totalorder %s16, 0
    %p79 = por %p77, %p78
    %p80 = scmp.ne.s32.totalorder %s68, %s69
    %p81 = scmp.eq.s32.totalorder %s17, 1
    %p82 = por %p80, %p81
    %p84 = scmp.ne.s32.totalorder %s69, %s83
    %p85 = scmp.eq.s32.totalorder %s17, 0
    %p86 = por %p84, %p85
    %s87 = ssub.s32 %s11, %s18
    %p88 = scmp.eq.s32.totalorder %s87, 0
    %s90 = sadd.s32 %s89, 1
    %s91 = scalar_select %p88, %s89, %s90
    %p94 = pneg %p88
    %p95 = scmp.eq.s32.totalorder %s11, 1
    %p96 = por %p94, %p95
    %p97 = scmp.ne.s32.totalorder %s89, %s92
    %p98 = scmp.eq.s32.totalorder %s11, 0
    %p99 = por %p97, %p98
    %p100 = scmp.ne.s32.totalorder %s89, %s92
    %p101 = scmp.eq.s32.totalorder %s16, 1
    %p102 = por %p100, %p101
    %p103 = scmp.ne.s32.totalorder %s92, %s93
    %p104 = scmp.eq.s32.totalorder %s16, 0
    %p105 = por %p103, %p104
    %p106 = scmp.ne.s32.totalorder %s92, %s93
    %p107 = scmp.eq.s32.totalorder %s17, 1
    %p108 = por %p106, %p107
    %p110 = scmp.ne.s32.totalorder %s93, %s109
    %p111 = scmp.eq.s32.totalorder %s17, 0
    %p112 = por %p110, %p111
    %s113 = ssub.s32 %s11, %s18
    %p114 = scmp.eq.s32.totalorder %s113, 0
    %s116 = sadd.s32 %s115, 1
    %s117 = scalar_select %p114, %s115, %s116
    %p120 = pneg %p114
    %p121 = scmp.eq.s32.totalorder %s11, 1
    %p122 = por %p120, %p121
    %p123 = scmp.ne.s32.totalorder %s115, %s118
    %p124 = scmp.eq.s32.totalorder %s11, 0
    %p125 = por %p123, %p124
    %p126 = scmp.ne.s32.totalorder %s115, %s118
    %p127 = scmp.eq.s32.totalorder %s16, 1
    %p128 = por %p126, %p127
    %p129 = scmp.ne.s32.totalorder %s118, %s119
    %p130 = scmp.eq.s32.totalorder %s16, 0
    %p131 = por %p129, %p130
    %p132 = scmp.ne.s32.totalorder %s118, %s119
    %p133 = scmp.eq.s32.totalorder %s17, 1
    %p134 = por %p132, %p133
    %p136 = scmp.ne.s32.totalorder %s119, %s135
    %p137 = scmp.eq.s32.totalorder %s17, 0
    %p138 = por %p136, %p137
    %s139 = ssub.s32 %s11, %s18
    %p140 = scmp.eq.s32.totalorder %s139, 0
    %s142 = sadd.s32 %s141, 1
    %s143 = scalar_select %p140, %s141, %s142
    %p146 = pneg %p140
    %p147 = scmp.eq.s32.totalorder %s11, 1
    %p148 = por %p146, %p147
    %p149 = scmp.ne.s32.totalorder %s141, %s144
    %p150 = scmp.eq.s32.totalorder %s11, 0
    %p151 = por %p149, %p150
    %p152 = scmp.ne.s32.totalorder %s141, %s144
    %p153 = scmp.eq.s32.totalorder %s16, 1
    %p154 = por %p152, %p153
    %p155 = scmp.ne.s32.totalorder %s144, %s145
    %p156 = scmp.eq.s32.totalorder %s16, 0
    %p157 = por %p155, %p156
    %p158 = scmp.ne.s32.totalorder %s144, %s145
    %p159 = scmp.eq.s32.totalorder %s17, 1
    %p160 = por %p158, %p159
    %p162 = scmp.ne.s32.totalorder %s145, %s161
    %p163 = scmp.eq.s32.totalorder %s17, 0
    %p164 = por %p162, %p163
    %p165 = scmp.le.s32.totalorder 1, %s11
    %p166 = scmp.lt.s32.totalorder %s11, 3
    %p167 = pnand %p165, %p166
    %p168 = pneg %p167
    // Predicated region
    $region9: #{forward_with_aux.3} parent=5 // pred_check
      _
    $region10: #{forward_with_aux.3} parent=5 // pred_check_branch
      %170 = sbr.rel (%p167) target = $region12
    $region11: #{forward_with_aux.3} parent=5 // pred_region
      %s171 = ssub.s32 %s11, 1
      // Predicated region
      $region13: #{forward_with_aux.3} parent=11 // pred_check
        %p172 = pneg %p58
      $region14: #{forward_with_aux.3} parent=11 // pred_check_branch
        %174 = sbr.rel (%p172) target = $region16
      $region15: #{forward_with_aux.3} parent=11 // pred_region
        _
      $region16: #{forward_with_aux.3} parent=11 // pred_fallthru
        _
      // Predicated region
      $region17: #{forward_with_aux.3} parent=11 // pred_check
        %p175 = pneg %p79
      $region18: #{forward_with_aux.3} parent=11 // pred_check_branch
        %177 = sbr.rel (%p175) target = $region20
      $region19: #{forward_with_aux.3} parent=11 // pred_region
        _
      $region20: #{forward_with_aux.3} parent=11 // pred_fallthru
        _
    $region12: #{forward_with_aux.3} parent=5 // pred_fallthru
      _
    %p178 = scmp.lt.s32.totalorder %s11, 2
    // Predicated region
    $region21: #{forward_with_aux.3} parent=5 // pred_check
      %p179 = pneg %p178
    $region22: #{forward_with_aux.3} parent=5 // pred_check_branch
      %181 = sbr.rel (%p179) target = $region24
    $region23: #{forward_with_aux.3} parent=5 // pred_region
      // Predicated region
      $region25: #{forward_with_aux.3} parent=23 // pred_check
        %p182 = pneg %p31
      $region26: #{forward_with_aux.3} parent=23 // pred_check_branch
        %184 = sbr.rel (%p182) target = $region28
      $region27: #{forward_with_aux.3} parent=23 // pred_region
        %p185 = scmp.lt.s32.totalorder %s11, 1
        %s186 = scalar_select %p185, %s11, 1
        %s187 = smul.addr %s186, 120
        %s188 = smul.addr %s187, 4
        %s189 = scalar_lea.vmem %s0, %s188
      $region28: #{forward_with_aux.3} parent=23 // pred_fallthru
        _
      // Predicated region
      $region29: #{forward_with_aux.3} parent=23 // pred_check
        %p190 = pneg %p99
      $region30: #{forward_with_aux.3} parent=23 // pred_check_branch
        %192 = sbr.rel (%p190) target = $region32
      $region31: #{forward_with_aux.3} parent=23 // pred_region
        %p193 = scmp.lt.s32.totalorder %s11, 1
        %s194 = scalar_select %p193, %s11, 1
        %s195 = smul.addr %s194, 16
        %s196 = smul.addr %s195, 8
        %s197 = scalar_lea.vmem %s3, %s196
      $region32: #{forward_with_aux.3} parent=23 // pred_fallthru
        _
      // Predicated region
      $region33: #{forward_with_aux.3} parent=23 // pred_check
        %p198 = pneg %p125
      $region34: #{forward_with_aux.3} parent=23 // pred_check_branch
        %200 = sbr.rel (%p198) target = $region36
      $region35: #{forward_with_aux.3} parent=23 // pred_region
        %p201 = scmp.lt.s32.totalorder %s11, 1
        %s202 = scalar_select %p201, %s11, 1
        %s203 = smul.addr %s202, 16
        %s204 = smul.addr %s203, 8
        %s205 = scalar_lea.vmem %s4, %s204
      $region36: #{forward_with_aux.3} parent=23 // pred_fallthru
        _
    $region24: #{forward_with_aux.3} parent=5 // pred_fallthru
      _
    %p206 = scmp.le.s32.totalorder 1, %s11
    %p207 = scmp.lt.s32.totalorder %s11, 3
    %p208 = pnand %p206, %p207
    %p209 = pneg %p208
    // Predicated region
    $region37: #{forward_with_aux.3} parent=5 // pred_check
      _
    $region38: #{forward_with_aux.3} parent=5 // pred_check_branch
      %211 = sbr.rel (%p208) target = $region40
    $region39: #{forward_with_aux.3} parent=5 // pred_region
      %s212 = ssub.s32 %s11, 1
      %p213 = scmp.lt.s32.totalorder %s16, 1
      %s214 = scalar_select %p213, %s16, 1
      %s215 = smul.addr %s214, 120
      %s216 = smul.addr %s215, 4
      %s217 = scalar_lea.vmem %s0, %s216
      %p218 = pneg %p37
      %p219 = pneg %p34
      %p220 = pneg %p58
      %p221 = pneg %p55
      %p222 = pneg %p79
      %p223 = pneg %p76
      %p224 = scmp.lt.s32.totalorder %s16, 1
      %s225 = scalar_select %p224, %s16, 1
      %s226 = smul.addr %s225, 16
      %s227 = smul.addr %s226, 8
      %s228 = scalar_lea.vmem %s3, %s227
      %p229 = pneg %p105
      %p230 = pneg %p102
      %p231 = scmp.lt.s32.totalorder %s16, 1
      %s232 = scalar_select %p231, %s16, 1
      %s233 = smul.addr %s232, 16
      %s234 = smul.addr %s233, 8
      %s235 = scalar_lea.vmem %s4, %s234
      %p236 = pneg %p131
      %p237 = pneg %p128
      %p238 = pneg %p157
      %p239 = pneg %p154
      %p240 = scmp.lt.s32.totalorder %s16, 1
      %s241 = scalar_select %p240, %s16, 1
      %s242 = smul.addr %s241, 16
      %s243 = smul.addr %s242, 8
      %s244 = scalar_lea.vmem %s5, %s243
      %p245 = scmp.lt.s32.totalorder %s16, 1
      %s246 = scalar_select %p245, %s16, 1
      %s247 = smul.addr %s246, 120
      %s248 = smul.addr %s247, 4
      %s249 = scalar_lea.vmem %s0, %s248
      %p250 = scmp.lt.s32.totalorder %s16, 1
      %s251 = scalar_select %p250, %s16, 1
      %s252 = smul.addr %s251, 16
      %s253 = smul.addr %s252, 8
      %s254 = scalar_lea.vmem %s3, %s253
      %p255 = scmp.lt.s32.totalorder %s16, 1
      %s256 = scalar_select %p255, %s16, 1
      %s257 = smul.addr %s256, 16
      %s258 = smul.addr %s257, 8
      %s259 = scalar_lea.vmem %s4, %s258
      %p260 = scmp.lt.s32.totalorder %s16, 1
      %s261 = scalar_select %p260, %s16, 1
      %s262 = smul.addr %s261, 16
      %s263 = smul.addr %s262, 8
      %s264 = scalar_lea.vmem %s5, %s263
      %v266 = vld [vmem:[%s249] sm:$0xff]
      %v267 = vld [vmem:[%s249 + $0x8] sm:$0xff]
      %v268 = vld [vmem:[%s249 + $0x10] sm:$0xff]
      %v269 = vld [vmem:[%s249 + $0x18] sm:$0xff]
      %v270 = vld [vmem:[%s249 + $0x20] sm:$0xff]
      %v271 = vld [vmem:[%s249 + $0x28] sm:$0xff]
      %v272 = vld [vmem:[%s249 + $0x30] sm:$0xff]
      %v273 = vld [vmem:[%s249 + $0x38] sm:$0xff]
      %v274 = vld [vmem:[%s249 + $0x40] sm:$0xff]
      %v275 = vld [vmem:[%s249 + $0x48] sm:$0xff]
      %v276 = vld [vmem:[%s249 + $0x50] sm:$0xff]
      %v277 = vld [vmem:[%s249 + $0x58] sm:$0xff]
      %v278 = vld [vmem:[%s249 + $0x60] sm:$0xff]
      %v279 = vld [vmem:[%s249 + $0x68] sm:$0xff]
      %v280 = vld [vmem:[%s249 + $0x70] sm:$0xff]
      %v281 = vld [vmem:[%s249 + $0x78] sm:$0xff]
      %v282 = vld [vmem:[%s1] sm:$0xf]
      %v283 = vld [vmem:[%s1 + $0x4] sm:$0xf]
      %v284 = vld [vmem:[%s1 + $0x8] sm:$0xf]
      %v285 = vld [vmem:[%s1 + $0xc] sm:$0xf]
      %v286 = vld [vmem:[%s1 + $0x10] sm:$0xf]
      %v287 = vld [vmem:[%s1 + $0x14] sm:$0xf]
      %v288 = vld [vmem:[%s1 + $0x18] sm:$0xf]
      %v289 = vld [vmem:[%s1 + $0x1c] sm:$0xf]
      %v290 = vld [vmem:[%s1 + $0x20] sm:$0xf]
      %v291 = vld [vmem:[%s1 + $0x24] sm:$0xf]
      %v292 = vld [vmem:[%s1 + $0x28] sm:$0xf]
      %v293 = vld [vmem:[%s1 + $0x2c] sm:$0xf]
      %v294 = vld [vmem:[%s1 + $0x30] sm:$0xf]
      %v295 = vld [vmem:[%s1 + $0x34] sm:$0xf]
      %v296 = vld [vmem:[%s1 + $0x38] sm:$0xf]
      %v297 = vld [vmem:[%s1 + $0x3c] sm:$0xf]
      %v298 = vld [vmem:[%s1 + $0x40] sm:$0xf]
      %v299 = vld [vmem:[%s1 + $0x44] sm:$0xf]
      %v300 = vld [vmem:[%s1 + $0x48] sm:$0xf]
      %v301 = vld [vmem:[%s1 + $0x4c] sm:$0xf]
      %v302 = vld [vmem:[%s1 + $0x50] sm:$0xf]
      %v303 = vld [vmem:[%s1 + $0x54] sm:$0xf]
      %v304 = vld [vmem:[%s1 + $0x58] sm:$0xf]
      %v305 = vld [vmem:[%s1 + $0x5c] sm:$0xf]
      %v306 = vld [vmem:[%s1 + $0x60] sm:$0xf]
      %v307 = vld [vmem:[%s1 + $0x64] sm:$0xf]
      %v308 = vld [vmem:[%s1 + $0x68] sm:$0xf]
      %v309 = vld [vmem:[%s1 + $0x6c] sm:$0xf]
      %v310 = vld [vmem:[%s1 + $0x70] sm:$0xf]
      %v311 = vld [vmem:[%s1 + $0x74] sm:$0xf]
      %v312 = vld [vmem:[%s1 + $0x78] sm:$0xf]
      %v313 = vld [vmem:[%s1 + $0x7c] sm:$0xf]
      %s314 = scalar_lea.vmem %s249, 160
      %v315 = vld [vmem:[%s314] sm:$0xff]
      %v316 = vld [vmem:[%s314 + $0x8] sm:$0xff]
      %v317 = vld [vmem:[%s314 + $0x10] sm:$0xff]
      %v318 = vld [vmem:[%s314 + $0x18] sm:$0xff]
      %v319 = vld [vmem:[%s314 + $0x20] sm:$0xff]
      %v320 = vld [vmem:[%s314 + $0x28] sm:$0xff]
      %v321 = vld [vmem:[%s314 + $0x30] sm:$0xff]
      %v322 = vld [vmem:[%s314 + $0x38] sm:$0xff]
      %v323 = vld [vmem:[%s314 + $0x40] sm:$0xff]
      %v324 = vld [vmem:[%s314 + $0x48] sm:$0xff]
      %v325 = vld [vmem:[%s314 + $0x50] sm:$0xff]
      %v326 = vld [vmem:[%s314 + $0x58] sm:$0xff]
      %v327 = vld [vmem:[%s314 + $0x60] sm:$0xff]
      %v328 = vld [vmem:[%s314 + $0x68] sm:$0xff]
      %v329 = vld [vmem:[%s314 + $0x70] sm:$0xff]
      %v330 = vld [vmem:[%s314 + $0x78] sm:$0xff]
      %s331 = scalar_lea.vmem %s1, 128
      %v332 = vld [vmem:[%s331] sm:$0xf]
      %v333 = vld [vmem:[%s331 + $0x4] sm:$0xf]
      %v334 = vld [vmem:[%s331 + $0x8] sm:$0xf]
      %v335 = vld [vmem:[%s331 + $0xc] sm:$0xf]
      %v336 = vld [vmem:[%s331 + $0x10] sm:$0xf]
      %v337 = vld [vmem:[%s331 + $0x14] sm:$0xf]
      %v338 = vld [vmem:[%s331 + $0x18] sm:$0xf]
      %v339 = vld [vmem:[%s331 + $0x1c] sm:$0xf]
      %v340 = vld [vmem:[%s331 + $0x20] sm:$0xf]
      %v341 = vld [vmem:[%s331 + $0x24] sm:$0xf]
      %v342 = vld [vmem:[%s331 + $0x28] sm:$0xf]
      %v343 = vld [vmem:[%s331 + $0x2c] sm:$0xf]
      %v344 = vld [vmem:[%s331 + $0x30] sm:$0xf]
      %v345 = vld [vmem:[%s331 + $0x34] sm:$0xf]
      %v346 = vld [vmem:[%s331 + $0x38] sm:$0xf]
      %v347 = vld [vmem:[%s331 + $0x3c] sm:$0xf]
      %v348 = vld [vmem:[%s331 + $0x40] sm:$0xf]
      %v349 = vld [vmem:[%s331 + $0x44] sm:$0xf]
      %v350 = vld [vmem:[%s331 + $0x48] sm:$0xf]
      %v351 = vld [vmem:[%s331 + $0x4c] sm:$0xf]
      %v352 = vld [vmem:[%s331 + $0x50] sm:$0xf]
      %v353 = vld [vmem:[%s331 + $0x54] sm:$0xf]
      %v354 = vld [vmem:[%s331 + $0x58] sm:$0xf]
      %v355 = vld [vmem:[%s331 + $0x5c] sm:$0xf]
      %v356 = vld [vmem:[%s331 + $0x60] sm:$0xf]
      %v357 = vld [vmem:[%s331 + $0x64] sm:$0xf]
      %v358 = vld [vmem:[%s331 + $0x68] sm:$0xf]
      %v359 = vld [vmem:[%s331 + $0x6c] sm:$0xf]
      %v360 = vld [vmem:[%s331 + $0x70] sm:$0xf]
      %v361 = vld [vmem:[%s331 + $0x74] sm:$0xf]
      %v362 = vld [vmem:[%s331 + $0x78] sm:$0xf]
      %v363 = vld [vmem:[%s331 + $0x7c] sm:$0xf]
      %v380 = vunpack.c.l.b16 %v315
      %v381 = vunpack.c.h.b16 %v315
      %v382 = vunpack.c.l.b16 %v316
      %v383 = vunpack.c.h.b16 %v316
      %v384 = vunpack.c.l.b16 %v317
      %v385 = vunpack.c.h.b16 %v317
      %v386 = vunpack.c.l.b16 %v318
      %v387 = vunpack.c.h.b16 %v318
      %v388 = vunpack.c.l.b16 %v319
      %v389 = vunpack.c.h.b16 %v319
      %v390 = vunpack.c.l.b16 %v320
      %v391 = vunpack.c.h.b16 %v320
      %v392 = vunpack.c.l.b16 %v321
      %v393 = vunpack.c.h.b16 %v321
      %v394 = vunpack.c.l.b16 %v322
      %v395 = vunpack.c.h.b16 %v322
      %v396 = vunpack.c.l.b16 %v323
      %v397 = vunpack.c.h.b16 %v323
      %v398 = vunpack.c.l.b16 %v324
      %v399 = vunpack.c.h.b16 %v324
      %v400 = vunpack.c.l.b16 %v325
      %v401 = vunpack.c.h.b16 %v325
      %v402 = vunpack.c.l.b16 %v326
      %v403 = vunpack.c.h.b16 %v326
      %v404 = vunpack.c.l.b16 %v327
      %v405 = vunpack.c.h.b16 %v327
      %v406 = vunpack.c.l.b16 %v328
      %v407 = vunpack.c.h.b16 %v328
      %v408 = vunpack.c.l.b16 %v329
      %v409 = vunpack.c.h.b16 %v329
      %v410 = vunpack.c.l.b16 %v330
      %v411 = vunpack.c.h.b16 %v330
      %v412 = vpack.c.b16 %v382, %v380
      %v413 = vpack.c.b16 %v383, %v381
      %v414 = vpack.c.b16 %v386, %v384
      %v415 = vpack.c.b16 %v387, %v385
      %v416 = vpack.c.b16 %v390, %v388
      %v417 = vpack.c.b16 %v391, %v389
      %v418 = vpack.c.b16 %v394, %v392
      %v419 = vpack.c.b16 %v395, %v393
      %v420 = vpack.c.b16 %v398, %v396
      %v421 = vpack.c.b16 %v399, %v397
      %v422 = vpack.c.b16 %v402, %v400
      %v423 = vpack.c.b16 %v403, %v401
      %v424 = vpack.c.b16 %v406, %v404
      %v425 = vpack.c.b16 %v407, %v405
      %v426 = vpack.c.b16 %v410, %v408
      %v427 = vpack.c.b16 %v411, %v409
      %v476 = vunpack.c.l.b16 %v332
      %v477 = vunpack.c.l.b16 %v333
      %v478 = vunpack.c.l.b16 %v334
      %v479 = vunpack.c.l.b16 %v335
      %v480 = vunpack.c.l.b16 %v336
      %v481 = vunpack.c.l.b16 %v337
      %v482 = vunpack.c.l.b16 %v338
      %v483 = vunpack.c.l.b16 %v339
      %v484 = vunpack.c.l.b16 %v340
      %v485 = vunpack.c.l.b16 %v341
      %v486 = vunpack.c.l.b16 %v342
      %v487 = vunpack.c.l.b16 %v343
      %v488 = vunpack.c.l.b16 %v344
      %v489 = vunpack.c.l.b16 %v345
      %v490 = vunpack.c.l.b16 %v346
      %v491 = vunpack.c.l.b16 %v347
      %v492 = vunpack.c.l.b16 %v348
      %v493 = vunpack.c.l.b16 %v349
      %v494 = vunpack.c.l.b16 %v350
      %v495 = vunpack.c.l.b16 %v351
      %v496 = vunpack.c.l.b16 %v352
      %v497 = vunpack.c.l.b16 %v353
      %v498 = vunpack.c.l.b16 %v354
      %v499 = vunpack.c.l.b16 %v355
      %v500 = vunpack.c.l.b16 %v356
      %v501 = vunpack.c.l.b16 %v357
      %v502 = vunpack.c.l.b16 %v358
      %v503 = vunpack.c.l.b16 %v359
      %v504 = vunpack.c.l.b16 %v360
      %v505 = vunpack.c.l.b16 %v361
      %v506 = vunpack.c.l.b16 %v362
      %v507 = vunpack.c.l.b16 %v363
      %v508 = vpack.c.b16 %v477, %v476
      %v509 = vpack.c.b16 %v479, %v478
      %v510 = vpack.c.b16 %v481, %v480
      %v511 = vpack.c.b16 %v483, %v482
      %v512 = vpack.c.b16 %v485, %v484
      %v513 = vpack.c.b16 %v487, %v486
      %v514 = vpack.c.b16 %v489, %v488
      %v515 = vpack.c.b16 %v491, %v490
      %v516 = vpack.c.b16 %v493, %v492
      %v517 = vpack.c.b16 %v495, %v494
      %v518 = vpack.c.b16 %v497, %v496
      %v519 = vpack.c.b16 %v499, %v498
      %v520 = vpack.c.b16 %v501, %v500
      %v521 = vpack.c.b16 %v503, %v502
      %v522 = vpack.c.b16 %v505, %v504
      %v523 = vpack.c.b16 %v507, %v506
      %540 = vmatprep.subr.bf16.mxu0 0
      %541 = vmatpush1.bf16.msra.mxu0 %v508
      %542 = vmatprep.subr.bf16.mxu0 0
      %543 = vmatpush1.bf16.msra.mxu0 %v509
      %544 = vmatprep.subr.bf16.mxu0 0
      %545 = vmatpush1.bf16.msra.mxu0 %v510
      %546 = vmatprep.subr.bf16.mxu0 0
      %547 = vmatpush1.bf16.msra.mxu0 %v511
      %548 = vmatprep.subr.bf16.mxu0 0
      %549 = vmatpush1.bf16.msra.mxu0 %v512
      %550 = vmatprep.subr.bf16.mxu0 0
      %551 = vmatpush1.bf16.msra.mxu0 %v513
      %552 = vmatprep.subr.bf16.mxu0 0
      %553 = vmatpush1.bf16.msra.mxu0 %v514
      %554 = vmatprep.subr.bf16.mxu0 0
      %555 = vmatpush1.bf16.msra.mxu0 %v515
      %556 = vmatprep.subr.bf16.mxu0 0
      %557 = vmatpush1.bf16.msra.mxu0 %v516
      %558 = vmatprep.subr.bf16.mxu0 0
      %559 = vmatpush1.bf16.msra.mxu0 %v517
      %560 = vmatprep.subr.bf16.mxu0 0
      %561 = vmatpush1.bf16.msra.mxu0 %v518
      %562 = vmatprep.subr.bf16.mxu0 0
      %563 = vmatpush1.bf16.msra.mxu0 %v519
      %564 = vmatprep.subr.bf16.mxu0 0
      %565 = vmatpush1.bf16.msra.mxu0 %v520
      %566 = vmatprep.subr.bf16.mxu0 0
      %567 = vmatpush1.bf16.msra.mxu0 %v521
      %568 = vmatprep.subr.bf16.mxu0 0
      %569 = vmatpush1.bf16.msra.mxu0 %v522
      %570 = vmatprep.subr.bf16.mxu0 0
      %571 = vmatpush1.bf16.msra.mxu0 %v523
      %572 = vmatprep.mubr.bf16.mxu0 %v413
      %573 = vmatmul.mubr.bf16.gmra.mrb[0].mxu0 %v412
      %v574 = vpop.f32.mrb[0].mxu0
      %v575 = vadd.f32 0.0, %v574
      %v576 = vpop.f32.mrb[0].mxu0
      %v577 = vpop.f32.mrb[0].mxu0
      %v578 = vadd.f32 0.0, %v577
      %v579 = vpop.f32.mrb[0].mxu0
      %580 = vmatprep.mubr.bf16.mxu0 %v415
      %581 = vmatmul.mubr.bf16.gmra.mrb[0].mxu0 %v414
      %v582 = vpop.f32.mrb[0].mxu0
      %v583 = vadd.f32 0.0, %v582
      %v584 = vpop.f32.mrb[0].mxu0
      %v585 = vpop.f32.mrb[0].mxu0
      %v586 = vadd.f32 0.0, %v585
      %v587 = vpop.f32.mrb[0].mxu0
      %588 = vmatprep.mubr.bf16.mxu0 %v417
      %589 = vmatmul.mubr.bf16.gmra.mrb[0].mxu0 %v416
      %v590 = vpop.f32.mrb[0].mxu0
      %v591 = vadd.f32 0.0, %v590
      %v592 = vpop.f32.mrb[0].mxu0
      %v593 = vpop.f32.mrb[0].mxu0
      %v594 = vadd.f32 0.0, %v593
      %v595 = vpop.f32.mrb[0].mxu0
      %596 = vmatprep.mubr.bf16.mxu0 %v419
      %597 = vmatmul.mubr.bf16.gmra.mrb[0].mxu0 %v418
      %v598 = vpop.f32.mrb[0].mxu0
      %v599 = vadd.f32 0.0, %v598
      %v600 = vpop.f32.mrb[0].mxu0
      %v601 = vpop.f32.mrb[0].mxu0
      %v602 = vadd.f32 0.0, %v601
      %v603 = vpop.f32.mrb[0].mxu0
      %604 = vmatprep.mubr.bf16.mxu0 %v421
      %605 = vmatmul.mubr.bf16.gmra.mrb[0].mxu0 %v420
      %v606 = vpop.f32.mrb[0].mxu0
      %v607 = vadd.f32 0.0, %v606
      %v608 = vpop.f32.mrb[0].mxu0
      %v609 = vpop.f32.mrb[0].mxu0
      %v610 = vadd.f32 0.0, %v609
      %v611 = vpop.f32.mrb[0].mxu0
      %612 = vmatprep.mubr.bf16.mxu0 %v423
      %613 = vmatmul.mubr.bf16.gmra.mrb[0].mxu0 %v422
      %v614 = vpop.f32.mrb[0].mxu0
      %v615 = vadd.f32 0.0, %v614
      %v616 = vpop.f32.mrb[0].mxu0
      %v617 = vpop.f32.mrb[0].mxu0
      %v618 = vadd.f32 0.0, %v617
      %v619 = vpop.f32.mrb[0].mxu0
      %620 = vmatprep.mubr.bf16.mxu0 %v425
      %621 = vmatmul.mubr.bf16.gmra.mrb[0].mxu0 %v424
      %v622 = vpop.f32.mrb[0].mxu0
      %v623 = vadd.f32 0.0, %v622
      %v624 = vpop.f32.mrb[0].mxu0
      %v625 = vpop.f32.mrb[0].mxu0
      %v626 = vadd.f32 0.0, %v625
      %v627 = vpop.f32.mrb[0].mxu0
      %628 = vmatprep.mubr.bf16.mxu0 %v427
      %629 = vmatmul.mubr.bf16.gmra.mrb[0].mxu0 %v426
      %v630 = vpop.f32.mrb[0].mxu0
      %v631 = vadd.f32 0.0, %v630
      %v632 = vpop.f32.mrb[0].mxu0
      %v633 = vpop.f32.mrb[0].mxu0
      %v634 = vadd.f32 0.0, %v633
      %v635 = vpop.f32.mrb[0].mxu0
      %636 = vdwg.mxu0
      %v653 = vunpack.c.l.b16 %v266
      %v654 = vunpack.c.h.b16 %v266
      %v655 = vunpack.c.l.b16 %v267
      %v656 = vunpack.c.h.b16 %v267
      %v657 = vunpack.c.l.b16 %v268
      %v658 = vunpack.c.h.b16 %v268
      %v659 = vunpack.c.l.b16 %v269
      %v660 = vunpack.c.h.b16 %v269
      %v661 = vunpack.c.l.b16 %v270
      %v662 = vunpack.c.h.b16 %v270
      %v663 = vunpack.c.l.b16 %v271
      %v664 = vunpack.c.h.b16 %v271
      %v665 = vunpack.c.l.b16 %v272
      %v666 = vunpack.c.h.b16 %v272
      %v667 = vunpack.c.l.b16 %v273
      %v668 = vunpack.c.h.b16 %v273
      %v669 = vunpack.c.l.b16 %v274
      %v670 = vunpack.c.h.b16 %v274
      %v671 = vunpack.c.l.b16 %v275
      %v672 = vunpack.c.h.b16 %v275
      %v673 = vunpack.c.l.b16 %v276
      %v674 = vunpack.c.h.b16 %v276
      %v675 = vunpack.c.l.b16 %v277
      %v676 = vunpack.c.h.b16 %v277
      %v677 = vunpack.c.l.b16 %v278
      %v678 = vunpack.c.h.b16 %v278
      %v679 = vunpack.c.l.b16 %v279
      %v680 = vunpack.c.h.b16 %v279
      %v681 = vunpack.c.l.b16 %v280
      %v682 = vunpack.c.h.b16 %v280
      %v683 = vunpack.c.l.b16 %v281
      %v684 = vunpack.c.h.b16 %v281
      %v685 = vpack.c.b16 %v655, %v653
      %v686 = vpack.c.b16 %v656, %v654
      %v687 = vpack.c.b16 %v659, %v657
      %v688 = vpack.c.b16 %v660, %v658
      %v689 = vpack.c.b16 %v663, %v661
      %v690 = vpack.c.b16 %v664, %v662
      %v691 = vpack.c.b16 %v667, %v665
      %v692 = vpack.c.b16 %v668, %v666
      %v693 = vpack.c.b16 %v671, %v669
      %v694 = vpack.c.b16 %v672, %v670
      %v695 = vpack.c.b16 %v675, %v673
      %v696 = vpack.c.b16 %v676, %v674
      %v697 = vpack.c.b16 %v679, %v677
      %v698 = vpack.c.b16 %v680, %v678
      %v699 = vpack.c.b16 %v683, %v681
      %v700 = vpack.c.b16 %v684, %v682
      %v749 = vunpack.c.l.b16 %v282
      %v750 = vunpack.c.l.b16 %v283
      %v751 = vunpack.c.l.b16 %v284
      %v752 = vunpack.c.l.b16 %v285
      %v753 = vunpack.c.l.b16 %v286
      %v754 = vunpack.c.l.b16 %v287
      %v755 = vunpack.c.l.b16 %v288
      %v756 = vunpack.c.l.b16 %v289
      %v757 = vunpack.c.l.b16 %v290
      %v758 = vunpack.c.l.b16 %v291
      %v759 = vunpack.c.l.b16 %v292
      %v760 = vunpack.c.l.b16 %v293
      %v761 = vunpack.c.l.b16 %v294
      %v762 = vunpack.c.l.b16 %v295
      %v763 = vunpack.c.l.b16 %v296
      %v764 = vunpack.c.l.b16 %v297
      %v765 = vunpack.c.l.b16 %v298
      %v766 = vunpack.c.l.b16 %v299
      %v767 = vunpack.c.l.b16 %v300
      %v768 = vunpack.c.l.b16 %v301
      %v769 = vunpack.c.l.b16 %v302
      %v770 = vunpack.c.l.b16 %v303
      %v771 = vunpack.c.l.b16 %v304
      %v772 = vunpack.c.l.b16 %v305
      %v773 = vunpack.c.l.b16 %v306
      %v774 = vunpack.c.l.b16 %v307
      %v775 = vunpack.c.l.b16 %v308
      %v776 = vunpack.c.l.b16 %v309
      %v777 = vunpack.c.l.b16 %v310
      %v778 = vunpack.c.l.b16 %v311
      %v779 = vunpack.c.l.b16 %v312
      %v780 = vunpack.c.l.b16 %v313
      %v781 = vpack.c.b16 %v750, %v749
      %v782 = vpack.c.b16 %v752, %v751
      %v783 = vpack.c.b16 %v754, %v753
      %v784 = vpack.c.b16 %v756, %v755
      %v785 = vpack.c.b16 %v758, %v757
      %v786 = vpack.c.b16 %v760, %v759
      %v787 = vpack.c.b16 %v762, %v761
      %v788 = vpack.c.b16 %v764, %v763
      %v789 = vpack.c.b16 %v766, %v765
      %v790 = vpack.c.b16 %v768, %v767
      %v791 = vpack.c.b16 %v770, %v769
      %v792 = vpack.c.b16 %v772, %v771
      %v793 = vpack.c.b16 %v774, %v773
      %v794 = vpack.c.b16 %v776, %v775
      %v795 = vpack.c.b16 %v778, %v777
      %v796 = vpack.c.b16 %v780, %v779
      %813 = vmatprep.subr.bf16.mxu0 0
      %814 = vmatpush1.bf16.msra.mxu0 %v781
      %815 = vmatprep.subr.bf16.mxu0 0
      %816 = vmatpush1.bf16.msra.mxu0 %v782
      %817 = vmatprep.subr.bf16.mxu0 0
      %818 = vmatpush1.bf16.msra.mxu0 %v783
      %819 = vmatprep.subr.bf16.mxu0 0
      %820 = vmatpush1.bf16.msra.mxu0 %v784
      %821 = vmatprep.subr.bf16.mxu0 0
      %822 = vmatpush1.bf16.msra.mxu0 %v785
      %823 = vmatprep.subr.bf16.mxu0 0
      %824 = vmatpush1.bf16.msra.mxu0 %v786
      %825 = vmatprep.subr.bf16.mxu0 0
      %826 = vmatpush1.bf16.msra.mxu0 %v787
      %827 = vmatprep.subr.bf16.mxu0 0
      %828 = vmatpush1.bf16.msra.mxu0 %v788
      %829 = vmatprep.subr.bf16.mxu0 0
      %830 = vmatpush1.bf16.msra.mxu0 %v789
      %831 = vmatprep.subr.bf16.mxu0 0
      %832 = vmatpush1.bf16.msra.mxu0 %v790
      %833 = vmatprep.subr.bf16.mxu0 0
      %834 = vmatpush1.bf16.msra.mxu0 %v791
      %835 = vmatprep.subr.bf16.mxu0 0
      %836 = vmatpush1.bf16.msra.mxu0 %v792
      %837 = vmatprep.subr.bf16.mxu0 0
      %838 = vmatpush1.bf16.msra.mxu0 %v793
      %839 = vmatprep.subr.bf16.mxu0 0
      %840 = vmatpush1.bf16.msra.mxu0 %v794
      %841 = vmatprep.subr.bf16.mxu0 0
      %842 = vmatpush1.bf16.msra.mxu0 %v795
      %843 = vmatprep.subr.bf16.mxu0 0
      %844 = vmatpush1.bf16.msra.mxu0 %v796
      %845 = vmatprep.mubr.bf16.mxu0 %v686
      %846 = vmatmul.mubr.bf16.gmra.mrb[0].mxu0 %v685
      %v847 = vpop.f32.mrb[0].mxu0
      %v848 = vadd.f32 %v575, %v847
      %v849 = vpop.f32.mrb[0].mxu0
      %v850 = vpop.f32.mrb[0].mxu0
      %v851 = vadd.f32 %v578, %v850
      %v852 = vpop.f32.mrb[0].mxu0
      %853 = vmatprep.mubr.bf16.mxu0 %v688
      %854 = vmatmul.mubr.bf16.gmra.mrb[0].mxu0 %v687
      %v855 = vpop.f32.mrb[0].mxu0
      %v856 = vadd.f32 %v583, %v855
      %v857 = vpop.f32.mrb[0].mxu0
      %v858 = vpop.f32.mrb[0].mxu0
      %v859 = vadd.f32 %v586, %v858
      %v860 = vpop.f32.mrb[0].mxu0
      %861 = vmatprep.mubr.bf16.mxu0 %v690
      %862 = vmatmul.mubr.bf16.gmra.mrb[0].mxu0 %v689
      %v863 = vpop.f32.mrb[0].mxu0
      %v864 = vadd.f32 %v591, %v863
      %v865 = vpop.f32.mrb[0].mxu0
      %v866 = vpop.f32.mrb[0].mxu0
      %v867 = vadd.f32 %v594, %v866
      %v868 = vpop.f32.mrb[0].mxu0
      %869 = vmatprep.mubr.bf16.mxu0 %v692
      %870 = vmatmul.mubr.bf16.gmra.mrb[0].mxu0 %v691
      %v871 = vpop.f32.mrb[0].mxu0
      %v872 = vadd.f32 %v599, %v871
      %v873 = vpop.f32.mrb[0].mxu0
      %v874 = vpop.f32.mrb[0].mxu0
      %v875 = vadd.f32 %v602, %v874
      %v876 = vpop.f32.mrb[0].mxu0
      %877 = vmatprep.mubr.bf16.mxu0 %v694
      %878 = vmatmul.mubr.bf16.gmra.mrb[0].mxu0 %v693
      %v879 = vpop.f32.mrb[0].mxu0
      %v880 = vadd.f32 %v607, %v879
      %v881 = vpop.f32.mrb[0].mxu0
      %v882 = vpop.f32.mrb[0].mxu0
      %v883 = vadd.f32 %v610, %v882
      %v884 = vpop.f32.mrb[0].mxu0
      %885 = vmatprep.mubr.bf16.mxu0 %v696
      %886 = vmatmul.mubr.bf16.gmra.mrb[0].mxu0 %v695
      %v887 = vpop.f32.mrb[0].mxu0
      %v888 = vadd.f32 %v615, %v887
      %v889 = vpop.f32.mrb[0].mxu0
      %v890 = vpop.f32.mrb[0].mxu0
      %v891 = vadd.f32 %v618, %v890
      %v892 = vpop.f32.mrb[0].mxu0
      %893 = vmatprep.mubr.bf16.mxu0 %v698
      %894 = vmatmul.mubr.bf16.gmra.mrb[0].mxu0 %v697
      %v895 = vpop.f32.mrb[0].mxu0
      %v896 = vadd.f32 %v623, %v895
      %v897 = vpop.f32.mrb[0].mxu0
      %v898 = vpop.f32.mrb[0].mxu0
      %v899 = vadd.f32 %v626, %v898
      %v900 = vpop.f32.mrb[0].mxu0
      %901 = vmatprep.mubr.bf16.mxu0 %v700
      %902 = vmatmul.mubr.bf16.gmra.mrb[0].mxu0 %v699
      %v903 = vpop.f32.mrb[0].mxu0
      %v904 = vadd.f32 %v631, %v903
      %v905 = vpop.f32.mrb[0].mxu0
      %v906 = vpop.f32.mrb[0].mxu0
      %v907 = vadd.f32 %v634, %v906
      %v908 = vpop.f32.mrb[0].mxu0
      %909 = vdwg.mxu0
      %s910 = scalar_lea.vmem %s249, 320
      %v911 = vld [vmem:[%s910] sm:$0xff]
      %v912 = vld [vmem:[%s910 + $0x8] sm:$0xff]
      %v913 = vld [vmem:[%s910 + $0x10] sm:$0xff]
      %v914 = vld [vmem:[%s910 + $0x18] sm:$0xff]
      %v915 = vld [vmem:[%s910 + $0x20] sm:$0xff]
      %v916 = vld [vmem:[%s910 + $0x28] sm:$0xff]
      %v917 = vld [vmem:[%s910 + $0x30] sm:$0xff]
      %v918 = vld [vmem:[%s910 + $0x38] sm:$0xff]
      %v919 = vld [vmem:[%s910 + $0x40] sm:$0xff]
      %v920 = vld [vmem:[%s910 + $0x48] sm:$0xff]
      %v921 = vld [vmem:[%s910 + $0x50] sm:$0xff]
      %v922 = vld [vmem:[%s910 + $0x58] sm:$0xff]
      %v923 = vld [vmem:[%s910 + $0x60] sm:$0xff]
      %v924 = vld [vmem:[%s910 + $0x68] sm:$0xff]
      %v925 = vld [vmem:[%s910 + $0x70] sm:$0xff]
      %v926 = vld [vmem:[%s910 + $0x78] sm:$0xff]
      %s927 = scalar_lea.vmem %s1, 256
      %v928 = vld [vmem:[%s927] sm:$0xf]
      %v929 = vld [vmem:[%s927 + $0x4] sm:$0xf]
      %v930 = vld [vmem:[%s927 + $0x8] sm:$0xf]
      %v931 = vld [vmem:[%s927 + $0xc] sm:$0xf]
      %v932 = vld [vmem:[%s927 + $0x10] sm:$0xf]
      %v933 = vld [vmem:[%s927 + $0x14] sm:$0xf]
      %v934 = vld [vmem:[%s927 + $0x18] sm:$0xf]
      %v935 = vld [vmem:[%s927 + $0x1c] sm:$0xf]
      %v936 = vld [vmem:[%s927 + $0x20] sm:$0xf]
      %v937 = vld [vmem:[%s927 + $0x24] sm:$0xf]
      %v938 = vld [vmem:[%s927 + $0x28] sm:$0xf]
      %v939 = vld [vmem:[%s927 + $0x2c] sm:$0xf]
      %v940 = vld [vmem:[%s927 + $0x30] sm:$0xf]
      %v941 = vld [vmem:[%s927 + $0x34] sm:$0xf]
      %v942 = vld [vmem:[%s927 + $0x38] sm:$0xf]
      %v943 = vld [vmem:[%s927 + $0x3c] sm:$0xf]
      %v944 = vld [vmem:[%s927 + $0x40] sm:$0xf]
      %v945 = vld [vmem:[%s927 + $0x44] sm:$0xf]
      %v946 = vld [vmem:[%s927 + $0x48] sm:$0xf]
      %v947 = vld [vmem:[%s927 + $0x4c] sm:$0xf]
      %v948 = vld [vmem:[%s927 + $0x50] sm:$0xf]
      %v949 = vld [vmem:[%s927 + $0x54] sm:$0xf]
      %v950 = vld [vmem:[%s927 + $0x58] sm:$0xf]
      %v951 = vld [vmem:[%s927 + $0x5c] sm:$0xf]
      %v952 = vld [vmem:[%s927 + $0x60] sm:$0xf]
      %v953 = vld [vmem:[%s927 + $0x64] sm:$0xf]
      %v954 = vld [vmem:[%s927 + $0x68] sm:$0xf]
      %v955 = vld [vmem:[%s927 + $0x6c] sm:$0xf]
      %v956 = vld [vmem:[%s927 + $0x70] sm:$0xf]
      %v957 = vld [vmem:[%s927 + $0x74] sm:$0xf]
      %v958 = vld [vmem:[%s927 + $0x78] sm:$0xf]
      %v959 = vld [vmem:[%s927 + $0x7c] sm:$0xf]
      %v976 = vunpack.c.l.b16 %v911
      %v977 = vunpack.c.h.b16 %v911
      %v978 = vunpack.c.l.b16 %v912
      %v979 = vunpack.c.h.b16 %v912
      %v980 = vunpack.c.l.b16 %v913
      %v981 = vunpack.c.h.b16 %v913
      %v982 = vunpack.c.l.b16 %v914
      %v983 = vunpack.c.h.b16 %v914
      %v984 = vunpack.c.l.b16 %v915
      %v985 = vunpack.c.h.b16 %v915
      %v986 = vunpack.c.l.b16 %v916
      %v987 = vunpack.c.h.b16 %v916
      %v988 = vunpack.c.l.b16 %v917
      %v989 = vunpack.c.h.b16 %v917
      %v990 = vunpack.c.l.b16 %v918
      %v991 = vunpack.c.h.b16 %v918
      %v992 = vunpack.c.l.b16 %v919
      %v993 = vunpack.c.h.b16 %v919
      %v994 = vunpack.c.l.b16 %v920
      %v995 = vunpack.c.h.b16 %v920
      %v996 = vunpack.c.l.b16 %v921
      %v997 = vunpack.c.h.b16 %v921
      %v998 = vunpack.c.l.b16 %v922
      %v999 = vunpack.c.h.b16 %v922
      %v1000 = vunpack.c.l.b16 %v923
      %v1001 = vunpack.c.h.b16 %v923
      %v1002 = vunpack.c.l.b16 %v924
      %v1003 = vunpack.c.h.b16 %v924
      %v1004 = vunpack.c.l.b16 %v925
      %v1005 = vunpack.c.h.b16 %v925
      %v1006 = vunpack.c.l.b16 %v926
      %v1007 = vunpack.c.h.b16 %v926
      %v1008 = vpack.c.b16 %v978, %v976
      %v1009 = vpack.c.b16 %v979, %v977
      %v1010 = vpack.c.b16 %v982, %v980
      %v1011 = vpack.c.b16 %v983, %v981
      %v1012 = vpack.c.b16 %v986, %v984
      %v1013 = vpack.c.b16 %v987, %v985
      %v1014 = vpack.c.b16 %v990, %v988
      %v1015 = vpack.c.b16 %v991, %v989
      %v1016 = vpack.c.b16 %v994, %v992
      %v1017 = vpack.c.b16 %v995, %v993
      %v1018 = vpack.c.b16 %v998, %v996
      %v1019 = vpack.c.b16 %v999, %v997
      %v1020 = vpack.c.b16 %v1002, %v1000
      %v1021 = vpack.c.b16 %v1003, %v1001
      %v1022 = vpack.c.b16 %v1006, %v1004
      %v1023 = vpack.c.b16 %v1007, %v1005
      %v1072 = vunpack.c.l.b16 %v928
      %v1073 = vunpack.c.l.b16 %v929
      %v1074 = vunpack.c.l.b16 %v930
      %v1075 = vunpack.c.l.b16 %v931
      %v1076 = vunpack.c.l.b16 %v932
      %v1077 = vunpack.c.l.b16 %v933
      %v1078 = vunpack.c.l.b16 %v934
      %v1079 = vunpack.c.l.b16 %v935
      %v1080 = vunpack.c.l.b16 %v936
      %v1081 = vunpack.c.l.b16 %v937
      %v1082 = vunpack.c.l.b16 %v938
      %v1083 = vunpack.c.l.b16 %v939
      %v1084 = vunpack.c.l.b16 %v940
      %v1085 = vunpack.c.l.b16 %v941
      %v1086 = vunpack.c.l.b16 %v942
      %v1087 = vunpack.c.l.b16 %v943
      %v1088 = vunpack.c.l.b16 %v944
      %v1089 = vunpack.c.l.b16 %v945
      %v1090 = vunpack.c.l.b16 %v946
      %v1091 = vunpack.c.l.b16 %v947
      %v1092 = vunpack.c.l.b16 %v948
      %v1093 = vunpack.c.l.b16 %v949
      %v1094 = vunpack.c.l.b16 %v950
      %v1095 = vunpack.c.l.b16 %v951
      %v1096 = vunpack.c.l.b16 %v952
      %v1097 = vunpack.c.l.b16 %v953
      %v1098 = vunpack.c.l.b16 %v954
      %v1099 = vunpack.c.l.b16 %v955
      %v1100 = vunpack.c.l.b16 %v956
      %v1101 = vunpack.c.l.b16 %v957
      %v1102 = vunpack.c.l.b16 %v958
      %v1103 = vunpack.c.l.b16 %v959
      %v1104 = vpack.c.b16 %v1073, %v1072
      %v1105 = vpack.c.b16 %v1075, %v1074
      %v1106 = vpack.c.b16 %v1077, %v1076
      %v1107 = vpack.c.b16 %v1079, %v1078
      %v1108 = vpack.c.b16 %v1081, %v1080
      %v1109 = vpack.c.b16 %v1083, %v1082
      %v1110 = vpack.c.b16 %v1085, %v1084
      %v1111 = vpack.c.b16 %v1087, %v1086
      %v1112 = vpack.c.b16 %v1089, %v1088
      %v1113 = vpack.c.b16 %v1091, %v1090
      %v1114 = vpack.c.b16 %v1093, %v1092
      %v1115 = vpack.c.b16 %v1095, %v1094
      %v1116 = vpack.c.b16 %v1097, %v1096
      %v1117 = vpack.c.b16 %v1099, %v1098
      %v1118 = vpack.c.b16 %v1101, %v1100
      %v1119 = vpack.c.b16 %v1103, %v1102
      %1136 = vmatprep.subr.bf16.mxu0 0
      %1137 = vmatpush1.bf16.msra.mxu0 %v1104
      %1138 = vmatprep.subr.bf16.mxu0 0
      %1139 = vmatpush1.bf16.msra.mxu0 %v1105
      %1140 = vmatprep.subr.bf16.mxu0 0
      %1141 = vmatpush1.bf16.msra.mxu0 %v1106
      %1142 = vmatprep.subr.bf16.mxu0 0
      %1143 = vmatpush1.bf16.msra.mxu0 %v1107
      %1144 = vmatprep.subr.bf16.mxu0 0
      %1145 = vmatpush1.bf16.msra.mxu0 %v1108
      %1146 = vmatprep.subr.bf16.mxu0 0
      %1147 = vmatpush1.bf16.msra.mxu0 %v1109
      %1148 = vmatprep.subr.bf16.mxu0 0
      %1149 = vmatpush1.bf16.msra.mxu0 %v1110
      %1150 = vmatprep.subr.bf16.mxu0 0
      %1151 = vmatpush1.bf16.msra.mxu0 %v1111
      %1152 = vmatprep.subr.bf16.mxu0 0
      %1153 = vmatpush1.bf16.msra.mxu0 %v1112
      %1154 = vmatprep.subr.bf16.mxu0 0
      %1155 = vmatpush1.bf16.msra.mxu0 %v1113
      %1156 = vmatprep.subr.bf16.mxu0 0
      %1157 = vmatpush1.bf16.msra.mxu0 %v1114
      %1158 = vmatprep.subr.bf16.mxu0 0
      %1159 = vmatpush1.bf16.msra.mxu0 %v1115
      %1160 = vmatprep.subr.bf16.mxu0 0
      %1161 = vmatpush1.bf16.msra.mxu0 %v1116
      %1162 = vmatprep.subr.bf16.mxu0 0
      %1163 = vmatpush1.bf16.msra.mxu0 %v1117
      %1164 = vmatprep.subr.bf16.mxu0 0
      %1165 = vmatpush1.bf16.msra.mxu0 %v1118
      %1166 = vmatprep.subr.bf16.mxu0 0
      %1167 = vmatpush1.bf16.msra.mxu0 %v1119
      %1168 = vmatprep.mubr.bf16.mxu0 %v1009
      %1169 = vmatmul.mubr.bf16.gmra.mrb[0].mxu0 %v1008
      %v1170 = vpop.f32.mrb[0].mxu0
      %v1171 = vadd.f32 0.0, %v1170
      %v1172 = vpop.f32.mrb[0].mxu0
      %v1173 = vpop.f32.mrb[0].mxu0
      %v1174 = vadd.f32 0.0, %v1173
      %v1175 = vpop.f32.mrb[0].mxu0
      %1176 = vmatprep.mubr.bf16.mxu0 %v1011
      %1177 = vmatmul.mubr.bf16.gmra.mrb[0].mxu0 %v1010
      %v1178 = vpop.f32.mrb[0].mxu0
      %v1179 = vadd.f32 0.0, %v1178
      %v1180 = vpop.f32.mrb[0].mxu0
      %v1181 = vpop.f32.mrb[0].mxu0
      %v1182 = vadd.f32 0.0, %v1181
      %v1183 = vpop.f32.mrb[0].mxu0
      %1184 = vmatprep.mubr.bf16.mxu0 %v1013
      %1185 = vmatmul.mubr.bf16.gmra.mrb[0].mxu0 %v1012
      %v1186 = vpop.f32.mrb[0].mxu0
      %v1187 = vadd.f32 0.0, %v1186
      %v1188 = vpop.f32.mrb[0].mxu0
      %v1189 = vpop.f32.mrb[0].mxu0
      %v1190 = vadd.f32 0.0, %v1189
      %v1191 = vpop.f32.mrb[0].mxu0
      %1192 = vmatprep.mubr.bf16.mxu0 %v1015
      %1193 = vmatmul.mubr.bf16.gmra.mrb[0].mxu0 %v1014
      %v1194 = vpop.f32.mrb[0].mxu0
      %v1195 = vadd.f32 0.0, %v1194
      %v1196 = vpop.f32.mrb[0].mxu0
      %v1197 = vpop.f32.mrb[0].mxu0
      %v1198 = vadd.f32 0.0, %v1197
      %v1199 = vpop.f32.mrb[0].mxu0
      %1200 = vmatprep.mubr.bf16.mxu0 %v1017
      %1201 = vmatmul.mubr.bf16.gmra.mrb[0].mxu0 %v1016
      %v1202 = vpop.f32.mrb[0].mxu0
      %v1203 = vadd.f32 0.0, %v1202
      %v1204 = vpop.f32.mrb[0].mxu0
      %v1205 = vpop.f32.mrb[0].mxu0
      %v1206 = vadd.f32 0.0, %v1205
      %v1207 = vpop.f32.mrb[0].mxu0
      %1208 = vmatprep.mubr.bf16.mxu0 %v1019
      %1209 = vmatmul.mubr.bf16.gmra.mrb[0].mxu0 %v1018
      %v1210 = vpop.f32.mrb[0].mxu0
      %v1211 = vadd.f32 0.0, %v1210
      %v1212 = vpop.f32.mrb[0].mxu0
      %v1213 = vpop.f32.mrb[0].mxu0
      %v1214 = vadd.f32 0.0, %v1213
      %v1215 = vpop.f32.mrb[0].mxu0
      %1216 = vmatprep.mubr.bf16.mxu0 %v1021
      %1217 = vmatmul.mubr.bf16.gmra.mrb[0].mxu0 %v1020
      %v1218 = vpop.f32.mrb[0].mxu0
      %v1219 = vadd.f32 0.0, %v1218
      %v1220 = vpop.f32.mrb[0].mxu0
      %v1221 = vpop.f32.mrb[0].mxu0
      %v1222 = vadd.f32 0.0, %v1221
      %v1223 = vpop.f32.mrb[0].mxu0
      %1224 = vmatprep.mubr.bf16.mxu0 %v1023
      %1225 = vmatmul.mubr.bf16.gmra.mrb[0].mxu0 %v1022
      %v1226 = vpop.f32.mrb[0].mxu0
      %v1227 = vadd.f32 0.0, %v1226
      %v1228 = vpop.f32.mrb[0].mxu0
      %v1229 = vpop.f32.mrb[0].mxu0
      %v1230 = vadd.f32 0.0, %v1229
      %v1231 = vpop.f32.mrb[0].mxu0
      %1232 = vdwg.mxu0
      %v1233 = vadd.f32 %v848, %v1171
      %v1234 = vadd.f32 %v851, %v1174
      %v1235 = vadd.f32 %v856, %v1179
      %v1236 = vadd.f32 %v859, %v1182
      %v1237 = vadd.f32 %v864, %v1187
      %v1238 = vadd.f32 %v867, %v1190
      %v1239 = vadd.f32 %v872, %v1195
      %v1240 = vadd.f32 %v875, %v1198
      %v1241 = vadd.f32 %v880, %v1203
      %v1242 = vadd.f32 %v883, %v1206
      %v1243 = vadd.f32 %v888, %v1211
      %v1244 = vadd.f32 %v891, %v1214
      %v1245 = vadd.f32 %v896, %v1219
      %v1246 = vadd.f32 %v899, %v1222
      %v1247 = vadd.f32 %v904, %v1227
      %v1248 = vadd.f32 %v907, %v1230
      %v1249 = vld [vmem:[%s249 + $0x10] sm:$0xff]
      %v1250 = vld [vmem:[%s249 + $0x18] sm:$0xff]
      %v1251 = vld [vmem:[%s249 + $0x20] sm:$0xff]
      %v1252 = vld [vmem:[%s249 + $0x28] sm:$0xff]
      %v1253 = vld [vmem:[%s249 + $0x30] sm:$0xff]
      %v1254 = vld [vmem:[%s249 + $0x38] sm:$0xff]
      %v1255 = vld [vmem:[%s249 + $0x40] sm:$0xff]
      %v1256 = vld [vmem:[%s249 + $0x48] sm:$0xff]
      %v1257 = vld [vmem:[%s249 + $0x50] sm:$0xff]
      %v1258 = vld [vmem:[%s249 + $0x58] sm:$0xff]
      %v1259 = vld [vmem:[%s249 + $0x60] sm:$0xff]
      %v1260 = vld [vmem:[%s249 + $0x68] sm:$0xff]
      %v1261 = vld [vmem:[%s249 + $0x70] sm:$0xff]
      %v1262 = vld [vmem:[%s249 + $0x78] sm:$0xff]
      %v1263 = vld [vmem:[%s249 + $0x80] sm:$0xff]
      %v1264 = vld [vmem:[%s249 + $0x88] sm:$0xff]
      %s1265 = scalar_lea.vmem %s1, 384
      %v1266 = vld [vmem:[%s1265] sm:$0xf]
      %v1267 = vld [vmem:[%s1265 + $0x4] sm:$0xf]
      %v1268 = vld [vmem:[%s1265 + $0x8] sm:$0xf]
      %v1269 = vld [vmem:[%s1265 + $0xc] sm:$0xf]
      %v1270 = vld [vmem:[%s1265 + $0x10] sm:$0xf]
      %v1271 = vld [vmem:[%s1265 + $0x14] sm:$0xf]
      %v1272 = vld [vmem:[%s1265 + $0x18] sm:$0xf]
      %v1273 = vld [vmem:[%s1265 + $0x1c] sm:$0xf]
      %v1274 = vld [vmem:[%s1265 + $0x20] sm:$0xf]
      %v1275 = vld [vmem:[%s1265 + $0x24] sm:$0xf]
      %v1276 = vld [vmem:[%s1265 + $0x28] sm:$0xf]
      %v1277 = vld [vmem:[%s1265 + $0x2c] sm:$0xf]
      %v1278 = vld [vmem:[%s1265 + $0x30] sm:$0xf]
      %v1279 = vld [vmem:[%s1265 + $0x34] sm:$0xf]
      %v1280 = vld [vmem:[%s1265 + $0x38] sm:$0xf]
      %v1281 = vld [vmem:[%s1265 + $0x3c] sm:$0xf]
      %v1282 = vld [vmem:[%s1265 + $0x40] sm:$0xf]
      %v1283 = vld [vmem:[%s1265 + $0x44] sm:$0xf]
      %v1284 = vld [vmem:[%s1265 + $0x48] sm:$0xf]
      %v1285 = vld [vmem:[%s1265 + $0x4c] sm:$0xf]
      %v1286 = vld [vmem:[%s1265 + $0x50] sm:$0xf]
      %v1287 = vld [vmem:[%s1265 + $0x54] sm:$0xf]
      %v1288 = vld [vmem:[%s1265 + $0x58] sm:$0xf]
      %v1289 = vld [vmem:[%s1265 + $0x5c] sm:$0xf]
      %v1290 = vld [vmem:[%s1265 + $0x60] sm:$0xf]
      %v1291 = vld [vmem:[%s1265 + $0x64] sm:$0xf]
      %v1292 = vld [vmem:[%s1265 + $0x68] sm:$0xf]
      %v1293 = vld [vmem:[%s1265 + $0x6c] sm:$0xf]
      %v1294 = vld [vmem:[%s1265 + $0x70] sm:$0xf]
      %v1295 = vld [vmem:[%s1265 + $0x74] sm:$0xf]
      %v1296 = vld [vmem:[%s1265 + $0x78] sm:$0xf]
      %v1297 = vld [vmem:[%s1265 + $0x7c] sm:$0xf]
      %v1314 = vunpack.c.l.b16 %v1249
      %v1315 = vunpack.c.h.b16 %v1249
      %v1316 = vunpack.c.l.b16 %v1250
      %v1317 = vunpack.c.h.b16 %v1250
      %v1318 = vunpack.c.l.b16 %v1251
      %v1319 = vunpack.c.h.b16 %v1251
      %v1320 = vunpack.c.l.b16 %v1252
      %v1321 = vunpack.c.h.b16 %v1252
      %v1322 = vunpack.c.l.b16 %v1253
      %v1323 = vunpack.c.h.b16 %v1253
      %v1324 = vunpack.c.l.b16 %v1254
      %v1325 = vunpack.c.h.b16 %v1254
      %v1326 = vunpack.c.l.b16 %v1255
      %v1327 = vunpack.c.h.b16 %v1255
      %v1328 = vunpack.c.l.b16 %v1256
      %v1329 = vunpack.c.h.b16 %v1256
      %v1330 = vunpack.c.l.b16 %v1257
      %v1331 = vunpack.c.h.b16 %v1257
      %v1332 = vunpack.c.l.b16 %v1258
      %v1333 = vunpack.c.h.b16 %v1258
      %v1334 = vunpack.c.l.b16 %v1259
      %v1335 = vunpack.c.h.b16 %v1259
      %v1336 = vunpack.c.l.b16 %v1260
      %v1337 = vunpack.c.h.b16 %v1260
      %v1338 = vunpack.c.l.b16 %v1261
      %v1339 = vunpack.c.h.b16 %v1261
      %v1340 = vunpack.c.l.b16 %v1262
      %v1341 = vunpack.c.h.b16 %v1262
      %v1342 = vunpack.c.l.b16 %v1263
      %v1343 = vunpack.c.h.b16 %v1263
      %v1344 = vunpack.c.l.b16 %v1264
      %v1345 = vunpack.c.h.b16 %v1264
      %v1346 = vpack.c.b16 %v1316, %v1314
      %v1347 = vpack.c.b16 %v1317, %v1315
      %v1348 = vpack.c.b16 %v1320, %v1318
      %v1349 = vpack.c.b16 %v1321, %v1319
      %v1350 = vpack.c.b16 %v1324, %v1322
      %v1351 = vpack.c.b16 %v1325, %v1323
      %v1352 = vpack.c.b16 %v1328, %v1326
      %v1353 = vpack.c.b16 %v1329, %v1327
      %v1354 = vpack.c.b16 %v1332, %v1330
      %v1355 = vpack.c.b16 %v1333, %v1331
      %v1356 = vpack.c.b16 %v1336, %v1334
      %v1357 = vpack.c.b16 %v1337, %v1335
      %v1358 = vpack.c.b16 %v1340, %v1338
      %v1359 = vpack.c.b16 %v1341, %v1339
      %v1360 = vpack.c.b16 %v1344, %v1342
      %v1361 = vpack.c.b16 %v1345, %v1343
      %v1410 = vunpack.c.l.b16 %v1266
      %v1411 = vunpack.c.l.b16 %v1267
      %v1412 = vunpack.c.l.b16 %v1268
      %v1413 = vunpack.c.l.b16 %v1269
      %v1414 = vunpack.c.l.b16 %v1270
      %v1415 = vunpack.c.l.b16 %v1271
      %v1416 = vunpack.c.l.b16 %v1272
      %v1417 = vunpack.c.l.b16 %v1273
      %v1418 = vunpack.c.l.b16 %v1274
      %v1419 = vunpack.c.l.b16 %v1275
      %v1420 = vunpack.c.l.b16 %v1276
      %v1421 = vunpack.c.l.b16 %v1277
      %v1422 = vunpack.c.l.b16 %v1278
      %v1423 = vunpack.c.l.b16 %v1279
      %v1424 = vunpack.c.l.b16 %v1280
      %v1425 = vunpack.c.l.b16 %v1281
      %v1426 = vunpack.c.l.b16 %v1282
      %v1427 = vunpack.c.l.b16 %v1283
      %v1428 = vunpack.c.l.b16 %v1284
      %v1429 = vunpack.c.l.b16 %v1285
      %v1430 = vunpack.c.l.b16 %v1286
      %v1431 = vunpack.c.l.b16 %v1287
      %v1432 = vunpack.c.l.b16 %v1288
      %v1433 = vunpack.c.l.b16 %v1289
      %v1434 = vunpack.c.l.b16 %v1290
      %v1435 = vunpack.c.l.b16 %v1291
      %v1436 = vunpack.c.l.b16 %v1292
      %v1437 = vunpack.c.l.b16 %v1293
      %v1438 = vunpack.c.l.b16 %v1294
      %v1439 = vunpack.c.l.b16 %v1295
      %v1440 = vunpack.c.l.b16 %v1296
      %v1441 = vunpack.c.l.b16 %v1297
      %v1442 = vpack.c.b16 %v1411, %v1410
      %v1443 = vpack.c.b16 %v1413, %v1412
      %v1444 = vpack.c.b16 %v1415, %v1414
      %v1445 = vpack.c.b16 %v1417, %v1416
      %v1446 = vpack.c.b16 %v1419, %v1418
      %v1447 = vpack.c.b16 %v1421, %v1420
      %v1448 = vpack.c.b16 %v1423, %v1422
      %v1449 = vpack.c.b16 %v1425, %v1424
      %v1450 = vpack.c.b16 %v1427, %v1426
      %v1451 = vpack.c.b16 %v1429, %v1428
      %v1452 = vpack.c.b16 %v1431, %v1430
      %v1453 = vpack.c.b16 %v1433, %v1432
      %v1454 = vpack.c.b16 %v1435, %v1434
      %v1455 = vpack.c.b16 %v1437, %v1436
      %v1456 = vpack.c.b16 %v1439, %v1438
      %v1457 = vpack.c.b16 %v1441, %v1440
      %1474 = vmatprep.subr.bf16.mxu0 0
      %1475 = vmatpush1.bf16.msra.mxu0 %v1442
      %1476 = vmatprep.subr.bf16.mxu0 0
      %1477 = vmatpush1.bf16.msra.mxu0 %v1443
      %1478 = vmatprep.subr.bf16.mxu0 0
      %1479 = vmatpush1.bf16.msra.mxu0 %v1444
      %1480 = vmatprep.subr.bf16.mxu0 0
      %1481 = vmatpush1.bf16.msra.mxu0 %v1445
      %1482 = vmatprep.subr.bf16.mxu0 0
      %1483 = vmatpush1.bf16.msra.mxu0 %v1446
      %1484 = vmatprep.subr.bf16.mxu0 0
      %1485 = vmatpush1.bf16.msra.mxu0 %v1447
      %1486 = vmatprep.subr.bf16.mxu0 0
      %1487 = vmatpush1.bf16.msra.mxu0 %v1448
      %1488 = vmatprep.subr.bf16.mxu0 0
      %1489 = vmatpush1.bf16.msra.mxu0 %v1449
      %1490 = vmatprep.subr.bf16.mxu0 0
      %1491 = vmatpush1.bf16.msra.mxu0 %v1450
      %1492 = vmatprep.subr.bf16.mxu0 0
      %1493 = vmatpush1.bf16.msra.mxu0 %v1451
      %1494 = vmatprep.subr.bf16.mxu0 0
      %1495 = vmatpush1.bf16.msra.mxu0 %v1452
      %1496 = vmatprep.subr.bf16.mxu0 0
      %1497 = vmatpush1.bf16.msra.mxu0 %v1453
      %1498 = vmatprep.subr.bf16.mxu0 0
      %1499 = vmatpush1.bf16.msra.mxu0 %v1454
      %1500 = vmatprep.subr.bf16.mxu0 0
      %1501 = vmatpush1.bf16.msra.mxu0 %v1455
      %1502 = vmatprep.subr.bf16.mxu0 0
      %1503 = vmatpush1.bf16.msra.mxu0 %v1456
      %1504 = vmatprep.subr.bf16.mxu0 0
      %1505 = vmatpush1.bf16.msra.mxu0 %v1457
      %1506 = vmatprep.mubr.bf16.mxu0 %v1347
      %1507 = vmatmul.mubr.bf16.gmra.mrb[0].mxu0 %v1346
      %v1508 = vpop.f32.mrb[0].mxu0
      %v1509 = vadd.f32 0.0, %v1508
      %v1510 = vpop.f32.mrb[0].mxu0
      %v1511 = vpop.f32.mrb[0].mxu0
      %v1512 = vadd.f32 0.0, %v1511
      %v1513 = vpop.f32.mrb[0].mxu0
      %1514 = vmatprep.mubr.bf16.mxu0 %v1349
      %1515 = vmatmul.mubr.bf16.gmra.mrb[0].mxu0 %v1348
      %v1516 = vpop.f32.mrb[0].mxu0
      %v1517 = vadd.f32 0.0, %v1516
      %v1518 = vpop.f32.mrb[0].mxu0
      %v1519 = vpop.f32.mrb[0].mxu0
      %v1520 = vadd.f32 0.0, %v1519
      %v1521 = vpop.f32.mrb[0].mxu0
      %1522 = vmatprep.mubr.bf16.mxu0 %v1351
      %1523 = vmatmul.mubr.bf16.gmra.mrb[0].mxu0 %v1350
      %v1524 = vpop.f32.mrb[0].mxu0
      %v1525 = vadd.f32 0.0, %v1524
      %v1526 = vpop.f32.mrb[0].mxu0
      %v1527 = vpop.f32.mrb[0].mxu0
      %v1528 = vadd.f32 0.0, %v1527
      %v1529 = vpop.f32.mrb[0].mxu0
      %1530 = vmatprep.mubr.bf16.mxu0 %v1353
      %1531 = vmatmul.mubr.bf16.gmra.mrb[0].mxu0 %v1352
      %v1532 = vpop.f32.mrb[0].mxu0
      %v1533 = vadd.f32 0.0, %v1532
      %v1534 = vpop.f32.mrb[0].mxu0
      %v1535 = vpop.f32.mrb[0].mxu0
      %v1536 = vadd.f32 0.0, %v1535
      %v1537 = vpop.f32.mrb[0].mxu0
      %1538 = vmatprep.mubr.bf16.mxu0 %v1355
      %1539 = vmatmul.mubr.bf16.gmra.mrb[0].mxu0 %v1354
      %v1540 = vpop.f32.mrb[0].mxu0
      %v1541 = vadd.f32 0.0, %v1540
      %v1542 = vpop.f32.mrb[0].mxu0
      %v1543 = vpop.f32.mrb[0].mxu0
      %v1544 = vadd.f32 0.0, %v1543
      %v1545 = vpop.f32.mrb[0].mxu0
      %1546 = vmatprep.mubr.bf16.mxu0 %v1357
      %1547 = vmatmul.mubr.bf16.gmra.mrb[0].mxu0 %v1356
      %v1548 = vpop.f32.mrb[0].mxu0
      %v1549 = vadd.f32 0.0, %v1548
      %v1550 = vpop.f32.mrb[0].mxu0
      %v1551 = vpop.f32.mrb[0].mxu0
      %v1552 = vadd.f32 0.0, %v1551
      %v1553 = vpop.f32.mrb[0].mxu0
      %1554 = vmatprep.mubr.bf16.mxu0 %v1359
      %1555 = vmatmul.mubr.bf16.gmra.mrb[0].mxu0 %v1358
      %v1556 = vpop.f32.mrb[0].mxu0
      %v1557 = vadd.f32 0.0, %v1556
      %v1558 = vpop.f32.mrb[0].mxu0
      %v1559 = vpop.f32.mrb[0].mxu0
      %v1560 = vadd.f32 0.0, %v1559
      %v1561 = vpop.f32.mrb[0].mxu0
      %1562 = vmatprep.mubr.bf16.mxu0 %v1361
      %1563 = vmatmul.mubr.bf16.gmra.mrb[0].mxu0 %v1360
      %v1564 = vpop.f32.mrb[0].mxu0
      %v1565 = vadd.f32 0.0, %v1564
      %v1566 = vpop.f32.mrb[0].mxu0
      %v1567 = vpop.f32.mrb[0].mxu0
      %v1568 = vadd.f32 0.0, %v1567
      %v1569 = vpop.f32.mrb[0].mxu0
      %1570 = vdwg.mxu0
      %v1571 = vadd.f32 %v1233, %v1509
      %v1572 = vadd.f32 %v1234, %v1512
      %v1573 = vadd.f32 %v1235, %v1517
      %v1574 = vadd.f32 %v1236, %v1520
      %v1575 = vadd.f32 %v1237, %v1525
      %v1576 = vadd.f32 %v1238, %v1528
      %v1577 = vadd.f32 %v1239, %v1533
      %v1578 = vadd.f32 %v1240, %v1536
      %v1579 = vadd.f32 %v1241, %v1541
      %v1580 = vadd.f32 %v1242, %v1544
      %v1581 = vadd.f32 %v1243, %v1549
      %v1582 = vadd.f32 %v1244, %v1552
      %v1583 = vadd.f32 %v1245, %v1557
      %v1584 = vadd.f32 %v1246, %v1560
      %v1585 = vadd.f32 %v1247, %v1565
      %v1586 = vadd.f32 %v1248, %v1568
      %v1587 = vld [vmem:[%s314 + $0x10] sm:$0xff]
      %v1588 = vld [vmem:[%s314 + $0x18] sm:$0xff]
      %v1589 = vld [vmem:[%s314 + $0x20] sm:$0xff]
      %v1590 = vld [vmem:[%s314 + $0x28] sm:$0xff]
      %v1591 = vld [vmem:[%s314 + $0x30] sm:$0xff]
      %v1592 = vld [vmem:[%s314 + $0x38] sm:$0xff]
      %v1593 = vld [vmem:[%s314 + $0x40] sm:$0xff]
      %v1594 = vld [vmem:[%s314 + $0x48] sm:$0xff]
      %v1595 = vld [vmem:[%s314 + $0x50] sm:$0xff]
      %v1596 = vld [vmem:[%s314 + $0x58] sm:$0xff]
      %v1597 = vld [vmem:[%s314 + $0x60] sm:$0xff]
      %v1598 = vld [vmem:[%s314 + $0x68] sm:$0xff]
      %v1599 = vld [vmem:[%s314 + $0x70] sm:$0xff]
      %v1600 = vld [vmem:[%s314 + $0x78] sm:$0xff]
      %v1601 = vld [vmem:[%s314 + $0x80] sm:$0xff]
      %v1602 = vld [vmem:[%s314 + $0x88] sm:$0xff]
      %s1603 = scalar_lea.vmem %s1, 512
      %v1604 = vld [vmem:[%s1603] sm:$0xf]
      %v1605 = vld [vmem:[%s1603 + $0x4] sm:$0xf]
      %v1606 = vld [vmem:[%s1603 + $0x8] sm:$0xf]
      %v1607 = vld [vmem:[%s1603 + $0xc] sm:$0xf]
      %v1608 = vld [vmem:[%s1603 + $0x10] sm:$0xf]
      %v1609 = vld [vmem:[%s1603 + $0x14] sm:$0xf]
      %v1610 = vld [vmem:[%s1603 + $0x18] sm:$0xf]
      %v1611 = vld [vmem:[%s1603 + $0x1c] sm:$0xf]
      %v1612 = vld [vmem:[%s1603 + $0x20] sm:$0xf]
      %v1613 = vld [vmem:[%s1603 + $0x24] sm:$0xf]
      %v1614 = vld [vmem:[%s1603 + $0x28] sm:$0xf]
      %v1615 = vld [vmem:[%s1603 + $0x2c] sm:$0xf]
      %v1616 = vld [vmem:[%s1603 + $0x30] sm:$0xf]
      %v1617 = vld [vmem:[%s1603 + $0x34] sm:$0xf]
      %v1618 = vld [vmem:[%s1603 + $0x38] sm:$0xf]
      %v1619 = vld [vmem:[%s1603 + $0x3c] sm:$0xf]
      %v1620 = vld [vmem:[%s1603 + $0x40] sm:$0xf]
      %v1621 = vld [vmem:[%s1603 + $0x44] sm:$0xf]
      %v1622 = vld [vmem:[%s1603 + $0x48] sm:$0xf]
      %v1623 = vld [vmem:[%s1603 + $0x4c] sm:$0xf]
      %v1624 = vld [vmem:[%s1603 + $0x50] sm:$0xf]
      %v1625 = vld [vmem:[%s1603 + $0x54] sm:$0xf]
      %v1626 = vld [vmem:[%s1603 + $0x58] sm:$0xf]
      %v1627 = vld [vmem:[%s1603 + $0x5c] sm:$0xf]
      %v1628 = vld [vmem:[%s1603 + $0x60] sm:$0xf]
      %v1629 = vld [vmem:[%s1603 + $0x64] sm:$0xf]
      %v1630 = vld [vmem:[%s1603 + $0x68] sm:$0xf]
      %v1631 = vld [vmem:[%s1603 + $0x6c] sm:$0xf]
      %v1632 = vld [vmem:[%s1603 + $0x70] sm:$0xf]
      %v1633 = vld [vmem:[%s1603 + $0x74] sm:$0xf]
      %v1634 = vld [vmem:[%s1603 + $0x78] sm:$0xf]
      %v1635 = vld [vmem:[%s1603 + $0x7c] sm:$0xf]
      %v1652 = vunpack.c.l.b16 %v1587
      %v1653 = vunpack.c.h.b16 %v1587
      %v1654 = vunpack.c.l.b16 %v1588
      %v1655 = vunpack.c.h.b16 %v1588
      %v1656 = vunpack.c.l.b16 %v1589
      %v1657 = vunpack.c.h.b16 %v1589
      %v1658 = vunpack.c.l.b16 %v1590
      %v1659 = vunpack.c.h.b16 %v1590
      %v1660 = vunpack.c.l.b16 %v1591
      %v1661 = vunpack.c.h.b16 %v1591
      %v1662 = vunpack.c.l.b16 %v1592
      %v1663 = vunpack.c.h.b16 %v1592
      %v1664 = vunpack.c.l.b16 %v1593
      %v1665 = vunpack.c.h.b16 %v1593
      %v1666 = vunpack.c.l.b16 %v1594
      %v1667 = vunpack.c.h.b16 %v1594
      %v1668 = vunpack.c.l.b16 %v1595
      %v1669 = vunpack.c.h.b16 %v1595
      %v1670 = vunpack.c.l.b16 %v1596
      %v1671 = vunpack.c.h.b16 %v1596
      %v1672 = vunpack.c.l.b16 %v1597
      %v1673 = vunpack.c.h.b16 %v1597
      %v1674 = vunpack.c.l.b16 %v1598
      %v1675 = vunpack.c.h.b16 %v1598
      %v1676 = vunpack.c.l.b16 %v1599
      %v1677 = vunpack.c.h.b16 %v1599
      %v1678 = vunpack.c.l.b16 %v1600
      %v1679 = vunpack.c.h.b16 %v1600
      %v1680 = vunpack.c.l.b16 %v1601
      %v1681 = vunpack.c.h.b16 %v1601
      %v1682 = vunpack.c.l.b16 %v1602
      %v1683 = vunpack.c.h.b16 %v1602
      %v1684 = vpack.c.b16 %v1654, %v1652
      %v1685 = vpack.c.b16 %v1655, %v1653
      %v1686 = vpack.c.b16 %v1658, %v1656
      %v1687 = vpack.c.b16 %v1659, %v1657
      %v1688 = vpack.c.b16 %v1662, %v1660
      %v1689 = vpack.c.b16 %v1663, %v1661
      %v1690 = vpack.c.b16 %v1666, %v1664
      %v1691 = vpack.c.b16 %v1667, %v1665
      %v1692 = vpack.c.b16 %v1670, %v1668
      %v1693 = vpack.c.b16 %v1671, %v1669
      %v1694 = vpack.c.b16 %v1674, %v1672
      %v1695 = vpack.c.b16 %v1675, %v1673
      %v1696 = vpack.c.b16 %v1678, %v1676
      %v1697 = vpack.c.b16 %v1679, %v1677
      %v1698 = vpack.c.b16 %v1682, %v1680
      %v1699 = vpack.c.b16 %v1683, %v1681
      %v1748 = vunpack.c.l.b16 %v1604
      %v1749 = vunpack.c.l.b16 %v1605
      %v1750 = vunpack.c.l.b16 %v1606
      %v1751 = vunpack.c.l.b16 %v1607
      %v1752 = vunpack.c.l.b16 %v1608
      %v1753 = vunpack.c.l.b16 %v1609
      %v1754 = vunpack.c.l.b16 %v1610
      %v1755 = vunpack.c.l.b16 %v1611
      %v1756 = vunpack.c.l.b16 %v1612
      %v1757 = vunpack.c.l.b16 %v1613
      %v1758 = vunpack.c.l.b16 %v1614
      %v1759 = vunpack.c.l.b16 %v1615
      %v1760 = vunpack.c.l.b16 %v1616
      %v1761 = vunpack.c.l.b16 %v1617
      %v1762 = vunpack.c.l.b16 %v1618
      %v1763 = vunpack.c.l.b16 %v1619
      %v1764 = vunpack.c.l.b16 %v1620
      %v1765 = vunpack.c.l.b16 %v1621
      %v1766 = vunpack.c.l.b16 %v1622
      %v1767 = vunpack.c.l.b16 %v1623
      %v1768 = vunpack.c.l.b16 %v1624
      %v1769 = vunpack.c.l.b16 %v1625
      %v1770 = vunpack.c.l.b16 %v1626
      %v1771 = vunpack.c.l.b16 %v1627
      %v1772 = vunpack.c.l.b16 %v1628
      %v1773 = vunpack.c.l.b16 %v1629
      %v1774 = vunpack.c.l.b16 %v1630
      %v1775 = vunpack.c.l.b16 %v1631
      %v1776 = vunpack.c.l.b16 %v1632
      %v1777 = vunpack.c.l.b16 %v1633
      %v1778 = vunpack.c.l.b16 %v1634
      %v1779 = vunpack.c.l.b16 %v1635
      %v1780 = vpack.c.b16 %v1749, %v1748
      %v1781 = vpack.c.b16 %v1751, %v1750
      %v1782 = vpack.c.b16 %v1753, %v1752
      %v1783 = vpack.c.b16 %v1755, %v1754
      %v1784 = vpack.c.b16 %v1757, %v1756
      %v1785 = vpack.c.b16 %v1759, %v1758
      %v1786 = vpack.c.b16 %v1761, %v1760
      %v1787 = vpack.c.b16 %v1763, %v1762
      %v1788 = vpack.c.b16 %v1765, %v1764
      %v1789 = vpack.c.b16 %v1767, %v1766
      %v1790 = vpack.c.b16 %v1769, %v1768
      %v1791 = vpack.c.b16 %v1771, %v1770
      %v1792 = vpack.c.b16 %v1773, %v1772
      %v1793 = vpack.c.b16 %v1775, %v1774
      %v1794 = vpack.c.b16 %v1777, %v1776
      %v1795 = vpack.c.b16 %v1779, %v1778
      %1812 = vmatprep.subr.bf16.mxu0 0
      %1813 = vmatpush1.bf16.msra.mxu0 %v1780
      %1814 = vmatprep.subr.bf16.mxu0 0
      %1815 = vmatpush1.bf16.msra.mxu0 %v1781
      %1816 = vmatprep.subr.bf16.mxu0 0
      %1817 = vmatpush1.bf16.msra.mxu0 %v1782
      %1818 = vmatprep.subr.bf16.mxu0 0
      %1819 = vmatpush1.bf16.msra.mxu0 %v1783
      %1820 = vmatprep.subr.bf16.mxu0 0
      %1821 = vmatpush1.bf16.msra.mxu0 %v1784
      %1822 = vmatprep.subr.bf16.mxu0 0
      %1823 = vmatpush1.bf16.msra.mxu0 %v1785
      %1824 = vmatprep.subr.bf16.mxu0 0
      %1825 = vmatpush1.bf16.msra.mxu0 %v1786
      %1826 = vmatprep.subr.bf16.mxu0 0
      %1827 = vmatpush1.bf16.msra.mxu0 %v1787
      %1828 = vmatprep.subr.bf16.mxu0 0
      %1829 = vmatpush1.bf16.msra.mxu0 %v1788
      %1830 = vmatprep.subr.bf16.mxu0 0
      %1831 = vmatpush1.bf16.msra.mxu0 %v1789
      %1832 = vmatprep.subr.bf16.mxu0 0
      %1833 = vmatpush1.bf16.msra.mxu0 %v1790
      %1834 = vmatprep.subr.bf16.mxu0 0
      %1835 = vmatpush1.bf16.msra.mxu0 %v1791
      %1836 = vmatprep.subr.bf16.mxu0 0
      %1837 = vmatpush1.bf16.msra.mxu0 %v1792
      %1838 = vmatprep.subr.bf16.mxu0 0
      %1839 = vmatpush1.bf16.msra.mxu0 %v1793
      %1840 = vmatprep.subr.bf16.mxu0 0
      %1841 = vmatpush1.bf16.msra.mxu0 %v1794
      %1842 = vmatprep.subr.bf16.mxu0 0
      %1843 = vmatpush1.bf16.msra.mxu0 %v1795
      %1844 = vmatprep.mubr.bf16.mxu0 %v1685
      %1845 = vmatmul.mubr.bf16.gmra.mrb[0].mxu0 %v1684
      %v1846 = vpop.f32.mrb[0].mxu0
      %v1847 = vadd.f32 0.0, %v1846
      %v1848 = vpop.f32.mrb[0].mxu0
      %v1849 = vpop.f32.mrb[0].mxu0
      %v1850 = vadd.f32 0.0, %v1849
      %v1851 = vpop.f32.mrb[0].mxu0
      %1852 = vmatprep.mubr.bf16.mxu0 %v1687
      %1853 = vmatmul.mubr.bf16.gmra.mrb[0].mxu0 %v1686
      %v1854 = vpop.f32.mrb[0].mxu0
      %v1855 = vadd.f32 0.0, %v1854
      %v1856 = vpop.f32.mrb[0].mxu0
      %v1857 = vpop.f32.mrb[0].mxu0
      %v1858 = vadd.f32 0.0, %v1857
      %v1859 = vpop.f32.mrb[0].mxu0
      %1860 = vmatprep.mubr.bf16.mxu0 %v1689
      %1861 = vmatmul.mubr.bf16.gmra.mrb[0].mxu0 %v1688
      %v1862 = vpop.f32.mrb[0].mxu0
      %v1863 = vadd.f32 0.0, %v1862
      %v1864 = vpop.f32.mrb[0].mxu0
      %v1865 = vpop.f32.mrb[0].mxu0
      %v1866 = vadd.f32 0.0, %v1865
      %v1867 = vpop.f32.mrb[0].mxu0
      %1868 = vmatprep.mubr.bf16.mxu0 %v1691
      %1869 = vmatmul.mubr.bf16.gmra.mrb[0].mxu0 %v1690
      %v1870 = vpop.f32.mrb[0].mxu0
      %v1871 = vadd.f32 0.0, %v1870
      %v1872 = vpop.f32.mrb[0].mxu0
      %v1873 = vpop.f32.mrb[0].mxu0
      %v1874 = vadd.f32 0.0, %v1873
      %v1875 = vpop.f32.mrb[0].mxu0
      %1876 = vmatprep.mubr.bf16.mxu0 %v1693
      %1877 = vmatmul.mubr.bf16.gmra.mrb[0].mxu0 %v1692
      %v1878 = vpop.f32.mrb[0].mxu0
      %v1879 = vadd.f32 0.0, %v1878
      %v1880 = vpop.f32.mrb[0].mxu0
      %v1881 = vpop.f32.mrb[0].mxu0
      %v1882 = vadd.f32 0.0, %v1881
      %v1883 = vpop.f32.mrb[0].mxu0
      %1884 = vmatprep.mubr.bf16.mxu0 %v1695
      %1885 = vmatmul.mubr.bf16.gmra.mrb[0].mxu0 %v1694
      %v1886 = vpop.f32.mrb[0].mxu0
      %v1887 = vadd.f32 0.0, %v1886
      %v1888 = vpop.f32.mrb[0].mxu0
      %v1889 = vpop.f32.mrb[0].mxu0
      %v1890 = vadd.f32 0.0, %v1889
      %v1891 = vpop.f32.mrb[0].mxu0
      %1892 = vmatprep.mubr.bf16.mxu0 %v1697
      %1893 = vmatmul.mubr.bf16.gmra.mrb[0].mxu0 %v1696
      %v1894 = vpop.f32.mrb[0].mxu0
      %v1895 = vadd.f32 0.0, %v1894
      %v1896 = vpop.f32.mrb[0].mxu0
      %v1897 = vpop.f32.mrb[0].mxu0
      %v1898 = vadd.f32 0.0, %v1897
      %v1899 = vpop.f32.mrb[0].mxu0
      %1900 = vmatprep.mubr.bf16.mxu0 %v1699
      %1901 = vmatmul.mubr.bf16.gmra.mrb[0].mxu0 %v1698
      %v1902 = vpop.f32.mrb[0].mxu0
      %v1903 = vadd.f32 0.0, %v1902
      %v1904 = vpop.f32.mrb[0].mxu0
      %v1905 = vpop.f32.mrb[0].mxu0
      %v1906 = vadd.f32 0.0, %v1905
      %v1907 = vpop.f32.mrb[0].mxu0
      %1908 = vdwg.mxu0
      %v1909 = vadd.f32 %v1571, %v1847
      %v1910 = vadd.f32 %v1572, %v1850
      %v1911 = vadd.f32 %v1573, %v1855
      %v1912 = vadd.f32 %v1574, %v1858
      %v1913 = vadd.f32 %v1575, %v1863
      %v1914 = vadd.f32 %v1576, %v1866
      %v1915 = vadd.f32 %v1577, %v1871
      %v1916 = vadd.f32 %v1578, %v1874
      %v1917 = vadd.f32 %v1579, %v1879
      %v1918 = vadd.f32 %v1580, %v1882
      %v1919 = vadd.f32 %v1581, %v1887
      %v1920 = vadd.f32 %v1582, %v1890
      %v1921 = vadd.f32 %v1583, %v1895
      %v1922 = vadd.f32 %v1584, %v1898
      %v1923 = vadd.f32 %v1585, %v1903
      %v1924 = vadd.f32 %v1586, %v1906
      %v1925 = vld [vmem:[%s910 + $0x10] sm:$0xff]
      %v1926 = vld [vmem:[%s910 + $0x18] sm:$0xff]
      %v1927 = vld [vmem:[%s910 + $0x20] sm:$0xff]
      %v1928 = vld [vmem:[%s910 + $0x28] sm:$0xff]
      %v1929 = vld [vmem:[%s910 + $0x30] sm:$0xff]
      %v1930 = vld [vmem:[%s910 + $0x38] sm:$0xff]
      %v1931 = vld [vmem:[%s910 + $0x40] sm:$0xff]
      %v1932 = vld [vmem:[%s910 + $0x48] sm:$0xff]
      %v1933 = vld [vmem:[%s910 + $0x50] sm:$0xff]
      %v1934 = vld [vmem:[%s910 + $0x58] sm:$0xff]
      %v1935 = vld [vmem:[%s910 + $0x60] sm:$0xff]
      %v1936 = vld [vmem:[%s910 + $0x68] sm:$0xff]
      %v1937 = vld [vmem:[%s910 + $0x70] sm:$0xff]
      %v1938 = vld [vmem:[%s910 + $0x78] sm:$0xff]
      %v1939 = vld [vmem:[%s910 + $0x80] sm:$0xff]
      %v1940 = vld [vmem:[%s910 + $0x88] sm:$0xff]
      %s1941 = scalar_lea.vmem %s1, 640
      %v1942 = vld [vmem:[%s1941] sm:$0xf]
      %v1943 = vld [vmem:[%s1941 + $0x4] sm:$0xf]
      %v1944 = vld [vmem:[%s1941 + $0x8] sm:$0xf]
      %v1945 = vld [vmem:[%s1941 + $0xc] sm:$0xf]
      %v1946 = vld [vmem:[%s1941 + $0x10] sm:$0xf]
      %v1947 = vld [vmem:[%s1941 + $0x14] sm:$0xf]
      %v1948 = vld [vmem:[%s1941 + $0x18] sm:$0xf]
      %v1949 = vld [vmem:[%s1941 + $0x1c] sm:$0xf]
      %v1950 = vld [vmem:[%s1941 + $0x20] sm:$0xf]
      %v1951 = vld [vmem:[%s1941 + $0x24] sm:$0xf]
      %v1952 = vld [vmem:[%s1941 + $0x28] sm:$0xf]
      %v1953 = vld [vmem:[%s1941 + $0x2c] sm:$0xf]
      %v1954 = vld [vmem:[%s1941 + $0x30] sm:$0xf]
      %v1955 = vld [vmem:[%s1941 + $0x34] sm:$0xf]
      %v1956 = vld [vmem:[%s1941 + $0x38] sm:$0xf]
      %v1957 = vld [vmem:[%s1941 + $0x3c] sm:$0xf]
      %v1958 = vld [vmem:[%s1941 + $0x40] sm:$0xf]
      %v1959 = vld [vmem:[%s1941 + $0x44] sm:$0xf]
      %v1960 = vld [vmem:[%s1941 + $0x48] sm:$0xf]
      %v1961 = vld [vmem:[%s1941 + $0x4c] sm:$0xf]
      %v1962 = vld [vmem:[%s1941 + $0x50] sm:$0xf]
      %v1963 = vld [vmem:[%s1941 + $0x54] sm:$0xf]
      %v1964 = vld [vmem:[%s1941 + $0x58] sm:$0xf]
      %v1965 = vld [vmem:[%s1941 + $0x5c] sm:$0xf]
      %v1966 = vld [vmem:[%s1941 + $0x60] sm:$0xf]
      %v1967 = vld [vmem:[%s1941 + $0x64] sm:$0xf]
      %v1968 = vld [vmem:[%s1941 + $0x68] sm:$0xf]
      %v1969 = vld [vmem:[%s1941 + $0x6c] sm:$0xf]
      %v1970 = vld [vmem:[%s1941 + $0x70] sm:$0xf]
      %v1971 = vld [vmem:[%s1941 + $0x74] sm:$0xf]
      %v1972 = vld [vmem:[%s1941 + $0x78] sm:$0xf]
      %v1973 = vld [vmem:[%s1941 + $0x7c] sm:$0xf]
      %v1990 = vunpack.c.l.b16 %v1925
      %v1991 = vunpack.c.h.b16 %v1925
      %v1992 = vunpack.c.l.b16 %v1926
      %v1993 = vunpack.c.h.b16 %v1926
      %v1994 = vunpack.c.l.b16 %v1927
      %v1995 = vunpack.c.h.b16 %v1927
      %v1996 = vunpack.c.l.b16 %v1928
      %v1997 = vunpack.c.h.b16 %v1928
      %v1998 = vunpack.c.l.b16 %v1929
      %v1999 = vunpack.c.h.b16 %v1929
      %v2000 = vunpack.c.l.b16 %v1930
      %v2001 = vunpack.c.h.b16 %v1930
      %v2002 = vunpack.c.l.b16 %v1931
      %v2003 = vunpack.c.h.b16 %v1931
      %v2004 = vunpack.c.l.b16 %v1932
      %v2005 = vunpack.c.h.b16 %v1932
      %v2006 = vunpack.c.l.b16 %v1933
      %v2007 = vunpack.c.h.b16 %v1933
      %v2008 = vunpack.c.l.b16 %v1934
      %v2009 = vunpack.c.h.b16 %v1934
      %v2010 = vunpack.c.l.b16 %v1935
      %v2011 = vunpack.c.h.b16 %v1935
      %v2012 = vunpack.c.l.b16 %v1936
      %v2013 = vunpack.c.h.b16 %v1936
      %v2014 = vunpack.c.l.b16 %v1937
      %v2015 = vunpack.c.h.b16 %v1937
      %v2016 = vunpack.c.l.b16 %v1938
      %v2017 = vunpack.c.h.b16 %v1938
      %v2018 = vunpack.c.l.b16 %v1939
      %v2019 = vunpack.c.h.b16 %v1939
      %v2020 = vunpack.c.l.b16 %v1940
      %v2021 = vunpack.c.h.b16 %v1940
      %v2022 = vpack.c.b16 %v1992, %v1990
      %v2023 = vpack.c.b16 %v1993, %v1991
      %v2024 = vpack.c.b16 %v1996, %v1994
      %v2025 = vpack.c.b16 %v1997, %v1995
      %v2026 = vpack.c.b16 %v2000, %v1998
      %v2027 = vpack.c.b16 %v2001, %v1999
      %v2028 = vpack.c.b16 %v2004, %v2002
      %v2029 = vpack.c.b16 %v2005, %v2003
      %v2030 = vpack.c.b16 %v2008, %v2006
      %v2031 = vpack.c.b16 %v2009, %v2007
      %v2032 = vpack.c.b16 %v2012, %v2010
      %v2033 = vpack.c.b16 %v2013, %v2011
      %v2034 = vpack.c.b16 %v2016, %v2014
      %v2035 = vpack.c.b16 %v2017, %v2015
      %v2036 = vpack.c.b16 %v2020, %v2018
      %v2037 = vpack.c.b16 %v2021, %v2019
      %v2086 = vunpack.c.l.b16 %v1942
      %v2087 = vunpack.c.l.b16 %v1943
      %v2088 = vunpack.c.l.b16 %v1944
      %v2089 = vunpack.c.l.b16 %v1945
      %v2090 = vunpack.c.l.b16 %v1946
      %v2091 = vunpack.c.l.b16 %v1947
      %v2092 = vunpack.c.l.b16 %v1948
      %v2093 = vunpack.c.l.b16 %v1949
      %v2094 = vunpack.c.l.b16 %v1950
      %v2095 = vunpack.c.l.b16 %v1951
      %v2096 = vunpack.c.l.b16 %v1952
      %v2097 = vunpack.c.l.b16 %v1953
      %v2098 = vunpack.c.l.b16 %v1954
      %v2099 = vunpack.c.l.b16 %v1955
      %v2100 = vunpack.c.l.b16 %v1956
      %v2101 = vunpack.c.l.b16 %v1957
      %v2102 = vunpack.c.l.b16 %v1958
      %v2103 = vunpack.c.l.b16 %v1959
      %v2104 = vunpack.c.l.b16 %v1960
      %v2105 = vunpack.c.l.b16 %v1961
      %v2106 = vunpack.c.l.b16 %v1962
      %v2107 = vunpack.c.l.b16 %v1963
      %v2108 = vunpack.c.l.b16 %v1964
      %v2109 = vunpack.c.l.b16 %v1965
      %v2110 = vunpack.c.l.b16 %v1966
      %v2111 = vunpack.c.l.b16 %v1967
      %v2112 = vunpack.c.l.b16 %v1968
      %v2113 = vunpack.c.l.b16 %v1969
      %v2114 = vunpack.c.l.b16 %v1970
      %v2115 = vunpack.c.l.b16 %v1971
      %v2116 = vunpack.c.l.b16 %v1972
      %v2117 = vunpack.c.l.b16 %v1973
      %v2118 = vpack.c.b16 %v2087, %v2086
      %v2119 = vpack.c.b16 %v2089, %v2088
      %v2120 = vpack.c.b16 %v2091, %v2090
      %v2121 = vpack.c.b16 %v2093, %v2092
      %v2122 = vpack.c.b16 %v2095, %v2094
      %v2123 = vpack.c.b16 %v2097, %v2096
      %v2124 = vpack.c.b16 %v2099, %v2098
      %v2125 = vpack.c.b16 %v2101, %v2100
      %v2126 = vpack.c.b16 %v2103, %v2102
      %v2127 = vpack.c.b16 %v2105, %v2104
      %v2128 = vpack.c.b16 %v2107, %v2106
      %v2129 = vpack.c.b16 %v2109, %v2108
      %v2130 = vpack.c.b16 %v2111, %v2110
      %v2131 = vpack.c.b16 %v2113, %v2112
      %v2132 = vpack.c.b16 %v2115, %v2114
      %v2133 = vpack.c.b16 %v2117, %v2116
      %2150 = vmatprep.subr.bf16.mxu0 0
      %2151 = vmatpush1.bf16.msra.mxu0 %v2118
      %2152 = vmatprep.subr.bf16.mxu0 0
      %2153 = vmatpush1.bf16.msra.mxu0 %v2119
      %2154 = vmatprep.subr.bf16.mxu0 0
      %2155 = vmatpush1.bf16.msra.mxu0 %v2120
      %2156 = vmatprep.subr.bf16.mxu0 0
      %2157 = vmatpush1.bf16.msra.mxu0 %v2121
      %2158 = vmatprep.subr.bf16.mxu0 0
      %2159 = vmatpush1.bf16.msra.mxu0 %v2122
      %2160 = vmatprep.subr.bf16.mxu0 0
      %2161 = vmatpush1.bf16.msra.mxu0 %v2123
      %2162 = vmatprep.subr.bf16.mxu0 0
      %2163 = vmatpush1.bf16.msra.mxu0 %v2124
      %2164 = vmatprep.subr.bf16.mxu0 0
      %2165 = vmatpush1.bf16.msra.mxu0 %v2125
      %2166 = vmatprep.subr.bf16.mxu0 0
      %2167 = vmatpush1.bf16.msra.mxu0 %v2126
      %2168 = vmatprep.subr.bf16.mxu0 0
      %2169 = vmatpush1.bf16.msra.mxu0 %v2127
      %2170 = vmatprep.subr.bf16.mxu0 0
      %2171 = vmatpush1.bf16.msra.mxu0 %v2128
      %2172 = vmatprep.subr.bf16.mxu0 0
      %2173 = vmatpush1.bf16.msra.mxu0 %v2129
      %2174 = vmatprep.subr.bf16.mxu0 0
      %2175 = vmatpush1.bf16.msra.mxu0 %v2130
      %2176 = vmatprep.subr.bf16.mxu0 0
      %2177 = vmatpush1.bf16.msra.mxu0 %v2131
      %2178 = vmatprep.subr.bf16.mxu0 0
      %2179 = vmatpush1.bf16.msra.mxu0 %v2132
      %2180 = vmatprep.subr.bf16.mxu0 0
      %2181 = vmatpush1.bf16.msra.mxu0 %v2133
      %2182 = vmatprep.mubr.bf16.mxu0 %v2023
      %2183 = vmatmul.mubr.bf16.gmra.mrb[0].mxu0 %v2022
      %v2184 = vpop.f32.mrb[0].mxu0
      %v2185 = vadd.f32 0.0, %v2184
      %v2186 = vpop.f32.mrb[0].mxu0
      %v2187 = vpop.f32.mrb[0].mxu0
      %v2188 = vadd.f32 0.0, %v2187
      %v2189 = vpop.f32.mrb[0].mxu0
      %2190 = vmatprep.mubr.bf16.mxu0 %v2025
      %2191 = vmatmul.mubr.bf16.gmra.mrb[0].mxu0 %v2024
      %v2192 = vpop.f32.mrb[0].mxu0
      %v2193 = vadd.f32 0.0, %v2192
      %v2194 = vpop.f32.mrb[0].mxu0
      %v2195 = vpop.f32.mrb[0].mxu0
      %v2196 = vadd.f32 0.0, %v2195
      %v2197 = vpop.f32.mrb[0].mxu0
      %2198 = vmatprep.mubr.bf16.mxu0 %v2027
      %2199 = vmatmul.mubr.bf16.gmra.mrb[0].mxu0 %v2026
      %v2200 = vpop.f32.mrb[0].mxu0
      %v2201 = vadd.f32 0.0, %v2200
      %v2202 = vpop.f32.mrb[0].mxu0
      %v2203 = vpop.f32.mrb[0].mxu0
      %v2204 = vadd.f32 0.0, %v2203
      %v2205 = vpop.f32.mrb[0].mxu0
      %2206 = vmatprep.mubr.bf16.mxu0 %v2029
      %2207 = vmatmul.mubr.bf16.gmra.mrb[0].mxu0 %v2028
      %v2208 = vpop.f32.mrb[0].mxu0
      %v2209 = vadd.f32 0.0, %v2208
      %v2210 = vpop.f32.mrb[0].mxu0
      %v2211 = vpop.f32.mrb[0].mxu0
      %v2212 = vadd.f32 0.0, %v2211
      %v2213 = vpop.f32.mrb[0].mxu0
      %2214 = vmatprep.mubr.bf16.mxu0 %v2031
      %2215 = vmatmul.mubr.bf16.gmra.mrb[0].mxu0 %v2030
      %v2216 = vpop.f32.mrb[0].mxu0
      %v2217 = vadd.f32 0.0, %v2216
      %v2218 = vpop.f32.mrb[0].mxu0
      %v2219 = vpop.f32.mrb[0].mxu0
      %v2220 = vadd.f32 0.0, %v2219
      %v2221 = vpop.f32.mrb[0].mxu0
      %2222 = vmatprep.mubr.bf16.mxu0 %v2033
      %2223 = vmatmul.mubr.bf16.gmra.mrb[0].mxu0 %v2032
      %v2224 = vpop.f32.mrb[0].mxu0
      %v2225 = vadd.f32 0.0, %v2224
      %v2226 = vpop.f32.mrb[0].mxu0
      %v2227 = vpop.f32.mrb[0].mxu0
      %v2228 = vadd.f32 0.0, %v2227
      %v2229 = vpop.f32.mrb[0].mxu0
      %2230 = vmatprep.mubr.bf16.mxu0 %v2035
      %2231 = vmatmul.mubr.bf16.gmra.mrb[0].mxu0 %v2034
      %v2232 = vpop.f32.mrb[0].mxu0
      %v2233 = vadd.f32 0.0, %v2232
      %v2234 = vpop.f32.mrb[0].mxu0
      %v2235 = vpop.f32.mrb[0].mxu0
      %v2236 = vadd.f32 0.0, %v2235
      %v2237 = vpop.f32.mrb[0].mxu0
      %2238 = vmatprep.mubr.bf16.mxu0 %v2037
      %2239 = vmatmul.mubr.bf16.gmra.mrb[0].mxu0 %v2036
      %v2240 = vpop.f32.mrb[0].mxu0
      %v2241 = vadd.f32 0.0, %v2240
      %v2242 = vpop.f32.mrb[0].mxu0
      %v2243 = vpop.f32.mrb[0].mxu0
      %v2244 = vadd.f32 0.0, %v2243
      %v2245 = vpop.f32.mrb[0].mxu0
      %2246 = vdwg.mxu0
      %v2247 = vadd.f32 %v1909, %v2185
      %v2248 = vadd.f32 %v1910, %v2188
      %v2249 = vadd.f32 %v1911, %v2193
      %v2250 = vadd.f32 %v1912, %v2196
      %v2251 = vadd.f32 %v1913, %v2201
      %v2252 = vadd.f32 %v1914, %v2204
      %v2253 = vadd.f32 %v1915, %v2209
      %v2254 = vadd.f32 %v1916, %v2212
      %v2255 = vadd.f32 %v1917, %v2217
      %v2256 = vadd.f32 %v1918, %v2220
      %v2257 = vadd.f32 %v1919, %v2225
      %v2258 = vadd.f32 %v1920, %v2228
      %v2259 = vadd.f32 %v1921, %v2233
      %v2260 = vadd.f32 %v1922, %v2236
      %v2261 = vadd.f32 %v1923, %v2241
      %v2262 = vadd.f32 %v1924, %v2244
      %v2263 = vld [vmem:[%s249 + $0x20] sm:$0xff]
      %v2264 = vld [vmem:[%s249 + $0x28] sm:$0xff]
      %v2265 = vld [vmem:[%s249 + $0x30] sm:$0xff]
      %v2266 = vld [vmem:[%s249 + $0x38] sm:$0xff]
      %v2267 = vld [vmem:[%s249 + $0x40] sm:$0xff]
      %v2268 = vld [vmem:[%s249 + $0x48] sm:$0xff]
      %v2269 = vld [vmem:[%s249 + $0x50] sm:$0xff]
      %v2270 = vld [vmem:[%s249 + $0x58] sm:$0xff]
      %v2271 = vld [vmem:[%s249 + $0x60] sm:$0xff]
      %v2272 = vld [vmem:[%s249 + $0x68] sm:$0xff]
      %v2273 = vld [vmem:[%s249 + $0x70] sm:$0xff]
      %v2274 = vld [vmem:[%s249 + $0x78] sm:$0xff]
      %v2275 = vld [vmem:[%s249 + $0x80] sm:$0xff]
      %v2276 = vld [vmem:[%s249 + $0x88] sm:$0xff]
      %v2277 = vld [vmem:[%s249 + $0x90] sm:$0xff]
      %v2278 = vld [vmem:[%s249 + $0x98] sm:$0xff]
      %s2279 = scalar_lea.vmem %s1, 768
      %v2280 = vld [vmem:[%s2279] sm:$0xf]
      %v2281 = vld [vmem:[%s2279 + $0x4] sm:$0xf]
      %v2282 = vld [vmem:[%s2279 + $0x8] sm:$0xf]
      %v2283 = vld [vmem:[%s2279 + $0xc] sm:$0xf]
      %v2284 = vld [vmem:[%s2279 + $0x10] sm:$0xf]
      %v2285 = vld [vmem:[%s2279 + $0x14] sm:$0xf]
      %v2286 = vld [vmem:[%s2279 + $0x18] sm:$0xf]
      %v2287 = vld [vmem:[%s2279 + $0x1c] sm:$0xf]
      %v2288 = vld [vmem:[%s2279 + $0x20] sm:$0xf]
      %v2289 = vld [vmem:[%s2279 + $0x24] sm:$0xf]
      %v2290 = vld [vmem:[%s2279 + $0x28] sm:$0xf]
      %v2291 = vld [vmem:[%s2279 + $0x2c] sm:$0xf]
      %v2292 = vld [vmem:[%s2279 + $0x30] sm:$0xf]
      %v2293 = vld [vmem:[%s2279 + $0x34] sm:$0xf]
      %v2294 = vld [vmem:[%s2279 + $0x38] sm:$0xf]
      %v2295 = vld [vmem:[%s2279 + $0x3c] sm:$0xf]
      %v2296 = vld [vmem:[%s2279 + $0x40] sm:$0xf]
      %v2297 = vld [vmem:[%s2279 + $0x44] sm:$0xf]
      %v2298 = vld [vmem:[%s2279 + $0x48] sm:$0xf]
      %v2299 = vld [vmem:[%s2279 + $0x4c] sm:$0xf]
      %v2300 = vld [vmem:[%s2279 + $0x50] sm:$0xf]
      %v2301 = vld [vmem:[%s2279 + $0x54] sm:$0xf]
      %v2302 = vld [vmem:[%s2279 + $0x58] sm:$0xf]
      %v2303 = vld [vmem:[%s2279 + $0x5c] sm:$0xf]
      %v2304 = vld [vmem:[%s2279 + $0x60] sm:$0xf]
      %v2305 = vld [vmem:[%s2279 + $0x64] sm:$0xf]
      %v2306 = vld [vmem:[%s2279 + $0x68] sm:$0xf]
      %v2307 = vld [vmem:[%s2279 + $0x6c] sm:$0xf]
      %v2308 = vld [vmem:[%s2279 + $0x70] sm:$0xf]
      %v2309 = vld [vmem:[%s2279 + $0x74] sm:$0xf]
      %v2310 = vld [vmem:[%s2279 + $0x78] sm:$0xf]
      %v2311 = vld [vmem:[%s2279 + $0x7c] sm:$0xf]
      %v2328 = vunpack.c.l.b16 %v2263
      %v2329 = vunpack.c.h.b16 %v2263
      %v2330 = vunpack.c.l.b16 %v2264
      %v2331 = vunpack.c.h.b16 %v2264
      %v2332 = vunpack.c.l.b16 %v2265
      %v2333 = vunpack.c.h.b16 %v2265
      %v2334 = vunpack.c.l.b16 %v2266
      %v2335 = vunpack.c.h.b16 %v2266
      %v2336 = vunpack.c.l.b16 %v2267
      %v2337 = vunpack.c.h.b16 %v2267
      %v2338 = vunpack.c.l.b16 %v2268
      %v2339 = vunpack.c.h.b16 %v2268
      %v2340 = vunpack.c.l.b16 %v2269
      %v2341 = vunpack.c.h.b16 %v2269
      %v2342 = vunpack.c.l.b16 %v2270
      %v2343 = vunpack.c.h.b16 %v2270
      %v2344 = vunpack.c.l.b16 %v2271
      %v2345 = vunpack.c.h.b16 %v2271
      %v2346 = vunpack.c.l.b16 %v2272
      %v2347 = vunpack.c.h.b16 %v2272
      %v2348 = vunpack.c.l.b16 %v2273
      %v2349 = vunpack.c.h.b16 %v2273
      %v2350 = vunpack.c.l.b16 %v2274
      %v2351 = vunpack.c.h.b16 %v2274
      %v2352 = vunpack.c.l.b16 %v2275
      %v2353 = vunpack.c.h.b16 %v2275
      %v2354 = vunpack.c.l.b16 %v2276
      %v2355 = vunpack.c.h.b16 %v2276
      %v2356 = vunpack.c.l.b16 %v2277
      %v2357 = vunpack.c.h.b16 %v2277
      %v2358 = vunpack.c.l.b16 %v2278
      %v2359 = vunpack.c.h.b16 %v2278
      %v2360 = vpack.c.b16 %v2330, %v2328
      %v2361 = vpack.c.b16 %v2331, %v2329
      %v2362 = vpack.c.b16 %v2334, %v2332
      %v2363 = vpack.c.b16 %v2335, %v2333
      %v2364 = vpack.c.b16 %v2338, %v2336
      %v2365 = vpack.c.b16 %v2339, %v2337
      %v2366 = vpack.c.b16 %v2342, %v2340
      %v2367 = vpack.c.b16 %v2343, %v2341
      %v2368 = vpack.c.b16 %v2346, %v2344
      %v2369 = vpack.c.b16 %v2347, %v2345
      %v2370 = vpack.c.b16 %v2350, %v2348
      %v2371 = vpack.c.b16 %v2351, %v2349
      %v2372 = vpack.c.b16 %v2354, %v2352
      %v2373 = vpack.c.b16 %v2355, %v2353
      %v2374 = vpack.c.b16 %v2358, %v2356
      %v2375 = vpack.c.b16 %v2359, %v2357
      %v2424 = vunpack.c.l.b16 %v2280
      %v2425 = vunpack.c.l.b16 %v2281
      %v2426 = vunpack.c.l.b16 %v2282
      %v2427 = vunpack.c.l.b16 %v2283
      %v2428 = vunpack.c.l.b16 %v2284
      %v2429 = vunpack.c.l.b16 %v2285
      %v2430 = vunpack.c.l.b16 %v2286
      %v2431 = vunpack.c.l.b16 %v2287
      %v2432 = vunpack.c.l.b16 %v2288
      %v2433 = vunpack.c.l.b16 %v2289
      %v2434 = vunpack.c.l.b16 %v2290
      %v2435 = vunpack.c.l.b16 %v2291
      %v2436 = vunpack.c.l.b16 %v2292
      %v2437 = vunpack.c.l.b16 %v2293
      %v2438 = vunpack.c.l.b16 %v2294
      %v2439 = vunpack.c.l.b16 %v2295
      %v2440 = vunpack.c.l.b16 %v2296
      %v2441 = vunpack.c.l.b16 %v2297
      %v2442 = vunpack.c.l.b16 %v2298
      %v2443 = vunpack.c.l.b16 %v2299
      %v2444 = vunpack.c.l.b16 %v2300
      %v2445 = vunpack.c.l.b16 %v2301
      %v2446 = vunpack.c.l.b16 %v2302
      %v2447 = vunpack.c.l.b16 %v2303
      %v2448 = vunpack.c.l.b16 %v2304
      %v2449 = vunpack.c.l.b16 %v2305
      %v2450 = vunpack.c.l.b16 %v2306
      %v2451 = vunpack.c.l.b16 %v2307
      %v2452 = vunpack.c.l.b16 %v2308
      %v2453 = vunpack.c.l.b16 %v2309
      %v2454 = vunpack.c.l.b16 %v2310
      %v2455 = vunpack.c.l.b16 %v2311
      %v2456 = vpack.c.b16 %v2425, %v2424
      %v2457 = vpack.c.b16 %v2427, %v2426
      %v2458 = vpack.c.b16 %v2429, %v2428
      %v2459 = vpack.c.b16 %v2431, %v2430
      %v2460 = vpack.c.b16 %v2433, %v2432
      %v2461 = vpack.c.b16 %v2435, %v2434
      %v2462 = vpack.c.b16 %v2437, %v2436
      %v2463 = vpack.c.b16 %v2439, %v2438
      %v2464 = vpack.c.b16 %v2441, %v2440
      %v2465 = vpack.c.b16 %v2443, %v2442
      %v2466 = vpack.c.b16 %v2445, %v2444
      %v2467 = vpack.c.b16 %v2447, %v2446
      %v2468 = vpack.c.b16 %v2449, %v2448
      %v2469 = vpack.c.b16 %v2451, %v2450
      %v2470 = vpack.c.b16 %v2453, %v2452
      %v2471 = vpack.c.b16 %v2455, %v2454
      %2488 = vmatprep.subr.bf16.mxu0 0
      %2489 = vmatpush1.bf16.msra.mxu0 %v2456
      %2490 = vmatprep.subr.bf16.mxu0 0
      %2491 = vmatpush1.bf16.msra.mxu0 %v2457
      %2492 = vmatprep.subr.bf16.mxu0 0
      %2493 = vmatpush1.bf16.msra.mxu0 %v2458
      %2494 = vmatprep.subr.bf16.mxu0 0
      %2495 = vmatpush1.bf16.msra.mxu0 %v2459
      %2496 = vmatprep.subr.bf16.mxu0 0
      %2497 = vmatpush1.bf16.msra.mxu0 %v2460
      %2498 = vmatprep.subr.bf16.mxu0 0
      %2499 = vmatpush1.bf16.msra.mxu0 %v2461
      %2500 = vmatprep.subr.bf16.mxu0 0
      %2501 = vmatpush1.bf16.msra.mxu0 %v2462
      %2502 = vmatprep.subr.bf16.mxu0 0
      %2503 = vmatpush1.bf16.msra.mxu0 %v2463
      %2504 = vmatprep.subr.bf16.mxu0 0
      %2505 = vmatpush1.bf16.msra.mxu0 %v2464
      %2506 = vmatprep.subr.bf16.mxu0 0
      %2507 = vmatpush1.bf16.msra.mxu0 %v2465
      %2508 = vmatprep.subr.bf16.mxu0 0
      %2509 = vmatpush1.bf16.msra.mxu0 %v2466
      %2510 = vmatprep.subr.bf16.mxu0 0
      %2511 = vmatpush1.bf16.msra.mxu0 %v2467
      %2512 = vmatprep.subr.bf16.mxu0 0
      %2513 = vmatpush1.bf16.msra.mxu0 %v2468
      %2514 = vmatprep.subr.bf16.mxu0 0
      %2515 = vmatpush1.bf16.msra.mxu0 %v2469
      %2516 = vmatprep.subr.bf16.mxu0 0
      %2517 = vmatpush1.bf16.msra.mxu0 %v2470
      %2518 = vmatprep.subr.bf16.mxu0 0
      %2519 = vmatpush1.bf16.msra.mxu0 %v2471
      %2520 = vmatprep.mubr.bf16.mxu0 %v2361
      %2521 = vmatmul.mubr.bf16.gmra.mrb[0].mxu0 %v2360
      %v2522 = vpop.f32.mrb[0].mxu0
      %v2523 = vadd.f32 0.0, %v2522
      %v2524 = vpop.f32.mrb[0].mxu0
      %v2525 = vpop.f32.mrb[0].mxu0
      %v2526 = vadd.f32 0.0, %v2525
      %v2527 = vpop.f32.mrb[0].mxu0
      %2528 = vmatprep.mubr.bf16.mxu0 %v2363
      %2529 = vmatmul.mubr.bf16.gmra.mrb[0].mxu0 %v2362
      %v2530 = vpop.f32.mrb[0].mxu0
      %v2531 = vadd.f32 0.0, %v2530
      %v2532 = vpop.f32.mrb[0].mxu0
      %v2533 = vpop.f32.mrb[0].mxu0
      %v2534 = vadd.f32 0.0, %v2533
      %v2535 = vpop.f32.mrb[0].mxu0
      %2536 = vmatprep.mubr.bf16.mxu0 %v2365
      %2537 = vmatmul.mubr.bf16.gmra.mrb[0].mxu0 %v2364
      %v2538 = vpop.f32.mrb[0].mxu0
      %v2539 = vadd.f32 0.0, %v2538
      %v2540 = vpop.f32.mrb[0].mxu0
      %v2541 = vpop.f32.mrb[0].mxu0
      %v2542 = vadd.f32 0.0, %v2541
      %v2543 = vpop.f32.mrb[0].mxu0
      %2544 = vmatprep.mubr.bf16.mxu0 %v2367
      %2545 = vmatmul.mubr.bf16.gmra.mrb[0].mxu0 %v2366
      %v2546 = vpop.f32.mrb[0].mxu0
      %v2547 = vadd.f32 0.0, %v2546
      %v2548 = vpop.f32.mrb[0].mxu0
      %v2549 = vpop.f32.mrb[0].mxu0
      %v2550 = vadd.f32 0.0, %v2549
      %v2551 = vpop.f32.mrb[0].mxu0
      %2552 = vmatprep.mubr.bf16.mxu0 %v2369
      %2553 = vmatmul.mubr.bf16.gmra.mrb[0].mxu0 %v2368
      %v2554 = vpop.f32.mrb[0].mxu0
      %v2555 = vadd.f32 0.0, %v2554
      %v2556 = vpop.f32.mrb[0].mxu0
      %v2557 = vpop.f32.mrb[0].mxu0
      %v2558 = vadd.f32 0.0, %v2557
      %v2559 = vpop.f32.mrb[0].mxu0
      %2560 = vmatprep.mubr.bf16.mxu0 %v2371
      %2561 = vmatmul.mubr.bf16.gmra.mrb[0].mxu0 %v2370
      %v2562 = vpop.f32.mrb[0].mxu0
      %v2563 = vadd.f32 0.0, %v2562
      %v2564 = vpop.f32.mrb[0].mxu0
      %v2565 = vpop.f32.mrb[0].mxu0
      %v2566 = vadd.f32 0.0, %v2565
      %v2567 = vpop.f32.mrb[0].mxu0
      %2568 = vmatprep.mubr.bf16.mxu0 %v2373
      %2569 = vmatmul.mubr.bf16.gmra.mrb[0].mxu0 %v2372
      %v2570 = vpop.f32.mrb[0].mxu0
      %v2571 = vadd.f32 0.0, %v2570
      %v2572 = vpop.f32.mrb[0].mxu0
      %v2573 = vpop.f32.mrb[0].mxu0
      %v2574 = vadd.f32 0.0, %v2573
      %v2575 = vpop.f32.mrb[0].mxu0
      %2576 = vmatprep.mubr.bf16.mxu0 %v2375
      %2577 = vmatmul.mubr.bf16.gmra.mrb[0].mxu0 %v2374
      %v2578 = vpop.f32.mrb[0].mxu0
      %v2579 = vadd.f32 0.0, %v2578
      %v2580 = vpop.f32.mrb[0].mxu0
      %v2581 = vpop.f32.mrb[0].mxu0
      %v2582 = vadd.f32 0.0, %v2581
      %v2583 = vpop.f32.mrb[0].mxu0
      %2584 = vdwg.mxu0
      %v2585 = vadd.f32 %v2247, %v2523
      %v2586 = vadd.f32 %v2248, %v2526
      %v2587 = vadd.f32 %v2249, %v2531
      %v2588 = vadd.f32 %v2250, %v2534
      %v2589 = vadd.f32 %v2251, %v2539
      %v2590 = vadd.f32 %v2252, %v2542
      %v2591 = vadd.f32 %v2253, %v2547
      %v2592 = vadd.f32 %v2254, %v2550
      %v2593 = vadd.f32 %v2255, %v2555
      %v2594 = vadd.f32 %v2256, %v2558
      %v2595 = vadd.f32 %v2257, %v2563
      %v2596 = vadd.f32 %v2258, %v2566
      %v2597 = vadd.f32 %v2259, %v2571
      %v2598 = vadd.f32 %v2260, %v2574
      %v2599 = vadd.f32 %v2261, %v2579
      %v2600 = vadd.f32 %v2262, %v2582
      %v2601 = vld [vmem:[%s314 + $0x20] sm:$0xff]
      %v2602 = vld [vmem:[%s314 + $0x28] sm:$0xff]
      %v2603 = vld [vmem:[%s314 + $0x30] sm:$0xff]
      %v2604 = vld [vmem:[%s314 + $0x38] sm:$0xff]
      %v2605 = vld [vmem:[%s314 + $0x40] sm:$0xff]
      %v2606 = vld [vmem:[%s314 + $0x48] sm:$0xff]
      %v2607 = vld [vmem:[%s314 + $0x50] sm:$0xff]
      %v2608 = vld [vmem:[%s314 + $0x58] sm:$0xff]
      %v2609 = vld [vmem:[%s314 + $0x60] sm:$0xff]
      %v2610 = vld [vmem:[%s314 + $0x68] sm:$0xff]
      %v2611 = vld [vmem:[%s314 + $0x70] sm:$0xff]
      %v2612 = vld [vmem:[%s314 + $0x78] sm:$0xff]
      %v2613 = vld [vmem:[%s314 + $0x80] sm:$0xff]
      %v2614 = vld [vmem:[%s314 + $0x88] sm:$0xff]
      %v2615 = vld [vmem:[%s314 + $0x90] sm:$0xff]
      %v2616 = vld [vmem:[%s314 + $0x98] sm:$0xff]
      %s2617 = scalar_lea.vmem %s1, 896
      %v2618 = vld [vmem:[%s2617] sm:$0xf]
      %v2619 = vld [vmem:[%s2617 + $0x4] sm:$0xf]
      %v2620 = vld [vmem:[%s2617 + $0x8] sm:$0xf]
      %v2621 = vld [vmem:[%s2617 + $0xc] sm:$0xf]
      %v2622 = vld [vmem:[%s2617 + $0x10] sm:$0xf]
      %v2623 = vld [vmem:[%s2617 + $0x14] sm:$0xf]
      %v2624 = vld [vmem:[%s2617 + $0x18] sm:$0xf]
      %v2625 = vld [vmem:[%s2617 + $0x1c] sm:$0xf]
      %v2626 = vld [vmem:[%s2617 + $0x20] sm:$0xf]
      %v2627 = vld [vmem:[%s2617 + $0x24] sm:$0xf]
      %v2628 = vld [vmem:[%s2617 + $0x28] sm:$0xf]
      %v2629 = vld [vmem:[%s2617 + $0x2c] sm:$0xf]
      %v2630 = vld [vmem:[%s2617 + $0x30] sm:$0xf]
      %v2631 = vld [vmem:[%s2617 + $0x34] sm:$0xf]
      %v2632 = vld [vmem:[%s2617 + $0x38] sm:$0xf]
      %v2633 = vld [vmem:[%s2617 + $0x3c] sm:$0xf]
      %v2634 = vld [vmem:[%s2617 + $0x40] sm:$0xf]
      %v2635 = vld [vmem:[%s2617 + $0x44] sm:$0xf]
      %v2636 = vld [vmem:[%s2617 + $0x48] sm:$0xf]
      %v2637 = vld [vmem:[%s2617 + $0x4c] sm:$0xf]
      %v2638 = vld [vmem:[%s2617 + $0x50] sm:$0xf]
      %v2639 = vld [vmem:[%s2617 + $0x54] sm:$0xf]
      %v2640 = vld [vmem:[%s2617 + $0x58] sm:$0xf]
      %v2641 = vld [vmem:[%s2617 + $0x5c] sm:$0xf]
      %v2642 = vld [vmem:[%s2617 + $0x60] sm:$0xf]
      %v2643 = vld [vmem:[%s2617 + $0x64] sm:$0xf]
      %v2644 = vld [vmem:[%s2617 + $0x68] sm:$0xf]
      %v2645 = vld [vmem:[%s2617 + $0x6c] sm:$0xf]
      %v2646 = vld [vmem:[%s2617 + $0x70] sm:$0xf]
      %v2647 = vld [vmem:[%s2617 + $0x74] sm:$0xf]
      %v2648 = vld [vmem:[%s2617 + $0x78] sm:$0xf]
      %v2649 = vld [vmem:[%s2617 + $0x7c] sm:$0xf]
      %v2666 = vunpack.c.l.b16 %v2601
      %v2667 = vunpack.c.h.b16 %v2601
      %v2668 = vunpack.c.l.b16 %v2602
      %v2669 = vunpack.c.h.b16 %v2602
      %v2670 = vunpack.c.l.b16 %v2603
      %v2671 = vunpack.c.h.b16 %v2603
      %v2672 = vunpack.c.l.b16 %v2604
      %v2673 = vunpack.c.h.b16 %v2604
      %v2674 = vunpack.c.l.b16 %v2605
      %v2675 = vunpack.c.h.b16 %v2605
      %v2676 = vunpack.c.l.b16 %v2606
      %v2677 = vunpack.c.h.b16 %v2606
      %v2678 = vunpack.c.l.b16 %v2607
      %v2679 = vunpack.c.h.b16 %v2607
      %v2680 = vunpack.c.l.b16 %v2608
      %v2681 = vunpack.c.h.b16 %v2608
      %v2682 = vunpack.c.l.b16 %v2609
      %v2683 = vunpack.c.h.b16 %v2609
      %v2684 = vunpack.c.l.b16 %v2610
      %v2685 = vunpack.c.h.b16 %v2610
      %v2686 = vunpack.c.l.b16 %v2611
      %v2687 = vunpack.c.h.b16 %v2611
      %v2688 = vunpack.c.l.b16 %v2612
      %v2689 = vunpack.c.h.b16 %v2612
      %v2690 = vunpack.c.l.b16 %v2613
      %v2691 = vunpack.c.h.b16 %v2613
      %v2692 = vunpack.c.l.b16 %v2614
      %v2693 = vunpack.c.h.b16 %v2614
      %v2694 = vunpack.c.l.b16 %v2615
      %v2695 = vunpack.c.h.b16 %v2615
      %v2696 = vunpack.c.l.b16 %v2616
      %v2697 = vunpack.c.h.b16 %v2616
      %v2698 = vpack.c.b16 %v2668, %v2666
      %v2699 = vpack.c.b16 %v2669, %v2667
      %v2700 = vpack.c.b16 %v2672, %v2670
      %v2701 = vpack.c.b16 %v2673, %v2671
      %v2702 = vpack.c.b16 %v2676, %v2674
      %v2703 = vpack.c.b16 %v2677, %v2675
      %v2704 = vpack.c.b16 %v2680, %v2678
      %v2705 = vpack.c.b16 %v2681, %v2679
      %v2706 = vpack.c.b16 %v2684, %v2682
      %v2707 = vpack.c.b16 %v2685, %v2683
      %v2708 = vpack.c.b16 %v2688, %v2686
      %v2709 = vpack.c.b16 %v2689, %v2687
      %v2710 = vpack.c.b16 %v2692, %v2690
      %v2711 = vpack.c.b16 %v2693, %v2691
      %v2712 = vpack.c.b16 %v2696, %v2694
      %v2713 = vpack.c.b16 %v2697, %v2695
      %v2762 = vunpack.c.l.b16 %v2618
      %v2763 = vunpack.c.l.b16 %v2619
      %v2764 = vunpack.c.l.b16 %v2620
      %v2765 = vunpack.c.l.b16 %v2621
      %v2766 = vunpack.c.l.b16 %v2622
      %v2767 = vunpack.c.l.b16 %v2623
      %v2768 = vunpack.c.l.b16 %v2624
      %v2769 = vunpack.c.l.b16 %v2625
      %v2770 = vunpack.c.l.b16 %v2626
      %v2771 = vunpack.c.l.b16 %v2627
      %v2772 = vunpack.c.l.b16 %v2628
      %v2773 = vunpack.c.l.b16 %v2629
      %v2774 = vunpack.c.l.b16 %v2630
      %v2775 = vunpack.c.l.b16 %v2631
      %v2776 = vunpack.c.l.b16 %v2632
      %v2777 = vunpack.c.l.b16 %v2633
      %v2778 = vunpack.c.l.b16 %v2634
      %v2779 = vunpack.c.l.b16 %v2635
      %v2780 = vunpack.c.l.b16 %v2636
      %v2781 = vunpack.c.l.b16 %v2637
      %v2782 = vunpack.c.l.b16 %v2638
      %v2783 = vunpack.c.l.b16 %v2639
      %v2784 = vunpack.c.l.b16 %v2640
      %v2785 = vunpack.c.l.b16 %v2641
      %v2786 = vunpack.c.l.b16 %v2642
      %v2787 = vunpack.c.l.b16 %v2643
      %v2788 = vunpack.c.l.b16 %v2644
      %v2789 = vunpack.c.l.b16 %v2645
      %v2790 = vunpack.c.l.b16 %v2646
      %v2791 = vunpack.c.l.b16 %v2647
      %v2792 = vunpack.c.l.b16 %v2648
      %v2793 = vunpack.c.l.b16 %v2649
      %v2794 = vpack.c.b16 %v2763, %v2762
      %v2795 = vpack.c.b16 %v2765, %v2764
      %v2796 = vpack.c.b16 %v2767, %v2766
      %v2797 = vpack.c.b16 %v2769, %v2768
      %v2798 = vpack.c.b16 %v2771, %v2770
      %v2799 = vpack.c.b16 %v2773, %v2772
      %v2800 = vpack.c.b16 %v2775, %v2774
      %v2801 = vpack.c.b16 %v2777, %v2776
      %v2802 = vpack.c.b16 %v2779, %v2778
      %v2803 = vpack.c.b16 %v2781, %v2780
      %v2804 = vpack.c.b16 %v2783, %v2782
      %v2805 = vpack.c.b16 %v2785, %v2784
      %v2806 = vpack.c.b16 %v2787, %v2786
      %v2807 = vpack.c.b16 %v2789, %v2788
      %v2808 = vpack.c.b16 %v2791, %v2790
      %v2809 = vpack.c.b16 %v2793, %v2792
      %2826 = vmatprep.subr.bf16.mxu0 0
      %2827 = vmatpush1.bf16.msra.mxu0 %v2794
      %2828 = vmatprep.subr.bf16.mxu0 0
      %2829 = vmatpush1.bf16.msra.mxu0 %v2795
      %2830 = vmatprep.subr.bf16.mxu0 0
      %2831 = vmatpush1.bf16.msra.mxu0 %v2796
      %2832 = vmatprep.subr.bf16.mxu0 0
      %2833 = vmatpush1.bf16.msra.mxu0 %v2797
      %2834 = vmatprep.subr.bf16.mxu0 0
      %2835 = vmatpush1.bf16.msra.mxu0 %v2798
      %2836 = vmatprep.subr.bf16.mxu0 0
      %2837 = vmatpush1.bf16.msra.mxu0 %v2799
      %2838 = vmatprep.subr.bf16.mxu0 0
      %2839 = vmatpush1.bf16.msra.mxu0 %v2800
      %2840 = vmatprep.subr.bf16.mxu0 0
      %2841 = vmatpush1.bf16.msra.mxu0 %v2801
      %2842 = vmatprep.subr.bf16.mxu0 0
      %2843 = vmatpush1.bf16.msra.mxu0 %v2802
      %2844 = vmatprep.subr.bf16.mxu0 0
      %2845 = vmatpush1.bf16.msra.mxu0 %v2803
      %2846 = vmatprep.subr.bf16.mxu0 0
      %2847 = vmatpush1.bf16.msra.mxu0 %v2804
      %2848 = vmatprep.subr.bf16.mxu0 0
      %2849 = vmatpush1.bf16.msra.mxu0 %v2805
      %2850 = vmatprep.subr.bf16.mxu0 0
      %2851 = vmatpush1.bf16.msra.mxu0 %v2806
      %2852 = vmatprep.subr.bf16.mxu0 0
      %2853 = vmatpush1.bf16.msra.mxu0 %v2807
      %2854 = vmatprep.subr.bf16.mxu0 0
      %2855 = vmatpush1.bf16.msra.mxu0 %v2808
      %2856 = vmatprep.subr.bf16.mxu0 0
      %2857 = vmatpush1.bf16.msra.mxu0 %v2809
      %2858 = vmatprep.mubr.bf16.mxu0 %v2699
      %2859 = vmatmul.mubr.bf16.gmra.mrb[0].mxu0 %v2698
      %v2860 = vpop.f32.mrb[0].mxu0
      %v2861 = vadd.f32 0.0, %v2860
      %v2862 = vpop.f32.mrb[0].mxu0
      %v2863 = vpop.f32.mrb[0].mxu0
      %v2864 = vadd.f32 0.0, %v2863
      %v2865 = vpop.f32.mrb[0].mxu0
      %2866 = vmatprep.mubr.bf16.mxu0 %v2701
      %2867 = vmatmul.mubr.bf16.gmra.mrb[0].mxu0 %v2700
      %v2868 = vpop.f32.mrb[0].mxu0
      %v2869 = vadd.f32 0.0, %v2868
      %v2870 = vpop.f32.mrb[0].mxu0
      %v2871 = vpop.f32.mrb[0].mxu0
      %v2872 = vadd.f32 0.0, %v2871
      %v2873 = vpop.f32.mrb[0].mxu0
      %2874 = vmatprep.mubr.bf16.mxu0 %v2703
      %2875 = vmatmul.mubr.bf16.gmra.mrb[0].mxu0 %v2702
      %v2876 = vpop.f32.mrb[0].mxu0
      %v2877 = vadd.f32 0.0, %v2876
      %v2878 = vpop.f32.mrb[0].mxu0
      %v2879 = vpop.f32.mrb[0].mxu0
      %v2880 = vadd.f32 0.0, %v2879
      %v2881 = vpop.f32.mrb[0].mxu0
      %2882 = vmatprep.mubr.bf16.mxu0 %v2705
      %2883 = vmatmul.mubr.bf16.gmra.mrb[0].mxu0 %v2704
      %v2884 = vpop.f32.mrb[0].mxu0
      %v2885 = vadd.f32 0.0, %v2884
      %v2886 = vpop.f32.mrb[0].mxu0
      %v2887 = vpop.f32.mrb[0].mxu0
      %v2888 = vadd.f32 0.0, %v2887
      %v2889 = vpop.f32.mrb[0].mxu0
      %2890 = vmatprep.mubr.bf16.mxu0 %v2707
      %2891 = vmatmul.mubr.bf16.gmra.mrb[0].mxu0 %v2706
      %v2892 = vpop.f32.mrb[0].mxu0
      %v2893 = vadd.f32 0.0, %v2892
      %v2894 = vpop.f32.mrb[0].mxu0
      %v2895 = vpop.f32.mrb[0].mxu0
      %v2896 = vadd.f32 0.0, %v2895
      %v2897 = vpop.f32.mrb[0].mxu0
      %2898 = vmatprep.mubr.bf16.mxu0 %v2709
      %2899 = vmatmul.mubr.bf16.gmra.mrb[0].mxu0 %v2708
      %v2900 = vpop.f32.mrb[0].mxu0
      %v2901 = vadd.f32 0.0, %v2900
      %v2902 = vpop.f32.mrb[0].mxu0
      %v2903 = vpop.f32.mrb[0].mxu0
      %v2904 = vadd.f32 0.0, %v2903
      %v2905 = vpop.f32.mrb[0].mxu0
      %2906 = vmatprep.mubr.bf16.mxu0 %v2711
      %2907 = vmatmul.mubr.bf16.gmra.mrb[0].mxu0 %v2710
      %v2908 = vpop.f32.mrb[0].mxu0
      %v2909 = vadd.f32 0.0, %v2908
      %v2910 = vpop.f32.mrb[0].mxu0
      %v2911 = vpop.f32.mrb[0].mxu0
      %v2912 = vadd.f32 0.0, %v2911
      %v2913 = vpop.f32.mrb[0].mxu0
      %2914 = vmatprep.mubr.bf16.mxu0 %v2713
      %2915 = vmatmul.mubr.bf16.gmra.mrb[0].mxu0 %v2712
      %v2916 = vpop.f32.mrb[0].mxu0
      %v2917 = vadd.f32 0.0, %v2916
      %v2918 = vpop.f32.mrb[0].mxu0
      %v2919 = vpop.f32.mrb[0].mxu0
      %v2920 = vadd.f32 0.0, %v2919
      %v2921 = vpop.f32.mrb[0].mxu0
      %2922 = vdwg.mxu0
      %v2923 = vadd.f32 %v2585, %v2861
      %v2924 = vadd.f32 %v2586, %v2864
      %v2925 = vadd.f32 %v2587, %v2869
      %v2926 = vadd.f32 %v2588, %v2872
      %v2927 = vadd.f32 %v2589, %v2877
      %v2928 = vadd.f32 %v2590, %v2880
      %v2929 = vadd.f32 %v2591, %v2885
      %v2930 = vadd.f32 %v2592, %v2888
      %v2931 = vadd.f32 %v2593, %v2893
      %v2932 = vadd.f32 %v2594, %v2896
      %v2933 = vadd.f32 %v2595, %v2901
      %v2934 = vadd.f32 %v2596, %v2904
      %v2935 = vadd.f32 %v2597, %v2909
      %v2936 = vadd.f32 %v2598, %v2912
      %v2937 = vadd.f32 %v2599, %v2917
      %v2938 = vadd.f32 %v2600, %v2920
      %v2939 = vld [vmem:[%s910 + $0x20] sm:$0xff]
      %v2940 = vld [vmem:[%s910 + $0x28] sm:$0xff]
      %v2941 = vld [vmem:[%s910 + $0x30] sm:$0xff]
      %v2942 = vld [vmem:[%s910 + $0x38] sm:$0xff]
      %v2943 = vld [vmem:[%s910 + $0x40] sm:$0xff]
      %v2944 = vld [vmem:[%s910 + $0x48] sm:$0xff]
      %v2945 = vld [vmem:[%s910 + $0x50] sm:$0xff]
      %v2946 = vld [vmem:[%s910 + $0x58] sm:$0xff]
      %v2947 = vld [vmem:[%s910 + $0x60] sm:$0xff]
      %v2948 = vld [vmem:[%s910 + $0x68] sm:$0xff]
      %v2949 = vld [vmem:[%s910 + $0x70] sm:$0xff]
      %v2950 = vld [vmem:[%s910 + $0x78] sm:$0xff]
      %v2951 = vld [vmem:[%s910 + $0x80] sm:$0xff]
      %v2952 = vld [vmem:[%s910 + $0x88] sm:$0xff]
      %v2953 = vld [vmem:[%s910 + $0x90] sm:$0xff]
      %v2954 = vld [vmem:[%s910 + $0x98] sm:$0xff]
      %s2955 = scalar_lea.vmem %s1, 1024
      %v2956 = vld [vmem:[%s2955] sm:$0xf]
      %v2957 = vld [vmem:[%s2955 + $0x4] sm:$0xf]
      %v2958 = vld [vmem:[%s2955 + $0x8] sm:$0xf]
      %v2959 = vld [vmem:[%s2955 + $0xc] sm:$0xf]
      %v2960 = vld [vmem:[%s2955 + $0x10] sm:$0xf]
      %v2961 = vld [vmem:[%s2955 + $0x14] sm:$0xf]
      %v2962 = vld [vmem:[%s2955 + $0x18] sm:$0xf]
      %v2963 = vld [vmem:[%s2955 + $0x1c] sm:$0xf]
      %v2964 = vld [vmem:[%s2955 + $0x20] sm:$0xf]
      %v2965 = vld [vmem:[%s2955 + $0x24] sm:$0xf]
      %v2966 = vld [vmem:[%s2955 + $0x28] sm:$0xf]
      %v2967 = vld [vmem:[%s2955 + $0x2c] sm:$0xf]
      %v2968 = vld [vmem:[%s2955 + $0x30] sm:$0xf]
      %v2969 = vld [vmem:[%s2955 + $0x34] sm:$0xf]
      %v2970 = vld [vmem:[%s2955 + $0x38] sm:$0xf]
      %v2971 = vld [vmem:[%s2955 + $0x3c] sm:$0xf]
      %v2972 = vld [vmem:[%s2955 + $0x40] sm:$0xf]
      %v2973 = vld [vmem:[%s2955 + $0x44] sm:$0xf]
      %v2974 = vld [vmem:[%s2955 + $0x48] sm:$0xf]
      %v2975 = vld [vmem:[%s2955 + $0x4c] sm:$0xf]
      %v2976 = vld [vmem:[%s2955 + $0x50] sm:$0xf]
      %v2977 = vld [vmem:[%s2955 + $0x54] sm:$0xf]
      %v2978 = vld [vmem:[%s2955 + $0x58] sm:$0xf]
      %v2979 = vld [vmem:[%s2955 + $0x5c] sm:$0xf]
      %v2980 = vld [vmem:[%s2955 + $0x60] sm:$0xf]
      %v2981 = vld [vmem:[%s2955 + $0x64] sm:$0xf]
      %v2982 = vld [vmem:[%s2955 + $0x68] sm:$0xf]
      %v2983 = vld [vmem:[%s2955 + $0x6c] sm:$0xf]
      %v2984 = vld [vmem:[%s2955 + $0x70] sm:$0xf]
      %v2985 = vld [vmem:[%s2955 + $0x74] sm:$0xf]
      %v2986 = vld [vmem:[%s2955 + $0x78] sm:$0xf]
      %v2987 = vld [vmem:[%s2955 + $0x7c] sm:$0xf]
      %v3004 = vunpack.c.l.b16 %v2939
      %v3005 = vunpack.c.h.b16 %v2939
      %v3006 = vunpack.c.l.b16 %v2940
      %v3007 = vunpack.c.h.b16 %v2940
      %v3008 = vunpack.c.l.b16 %v2941
      %v3009 = vunpack.c.h.b16 %v2941
      %v3010 = vunpack.c.l.b16 %v2942
      %v3011 = vunpack.c.h.b16 %v2942
      %v3012 = vunpack.c.l.b16 %v2943
      %v3013 = vunpack.c.h.b16 %v2943
      %v3014 = vunpack.c.l.b16 %v2944
      %v3015 = vunpack.c.h.b16 %v2944
      %v3016 = vunpack.c.l.b16 %v2945
      %v3017 = vunpack.c.h.b16 %v2945
      %v3018 = vunpack.c.l.b16 %v2946
      %v3019 = vunpack.c.h.b16 %v2946
      %v3020 = vunpack.c.l.b16 %v2947
      %v3021 = vunpack.c.h.b16 %v2947
      %v3022 = vunpack.c.l.b16 %v2948
      %v3023 = vunpack.c.h.b16 %v2948
      %v3024 = vunpack.c.l.b16 %v2949
      %v3025 = vunpack.c.h.b16 %v2949
      %v3026 = vunpack.c.l.b16 %v2950
      %v3027 = vunpack.c.h.b16 %v2950
      %v3028 = vunpack.c.l.b16 %v2951
      %v3029 = vunpack.c.h.b16 %v2951
      %v3030 = vunpack.c.l.b16 %v2952
      %v3031 = vunpack.c.h.b16 %v2952
      %v3032 = vunpack.c.l.b16 %v2953
      %v3033 = vunpack.c.h.b16 %v2953
      %v3034 = vunpack.c.l.b16 %v2954
      %v3035 = vunpack.c.h.b16 %v2954
      %v3036 = vpack.c.b16 %v3006, %v3004
      %v3037 = vpack.c.b16 %v3007, %v3005
      %v3038 = vpack.c.b16 %v3010, %v3008
      %v3039 = vpack.c.b16 %v3011, %v3009
      %v3040 = vpack.c.b16 %v3014, %v3012
      %v3041 = vpack.c.b16 %v3015, %v3013
      %v3042 = vpack.c.b16 %v3018, %v3016
      %v3043 = vpack.c.b16 %v3019, %v3017
      %v3044 = vpack.c.b16 %v3022, %v3020
      %v3045 = vpack.c.b16 %v3023, %v3021
      %v3046 = vpack.c.b16 %v3026, %v3024
      %v3047 = vpack.c.b16 %v3027, %v3025
      %v3048 = vpack.c.b16 %v3030, %v3028
      %v3049 = vpack.c.b16 %v3031, %v3029
      %v3050 = vpack.c.b16 %v3034, %v3032
      %v3051 = vpack.c.b16 %v3035, %v3033
      %v3100 = vunpack.c.l.b16 %v2956
      %v3101 = vunpack.c.l.b16 %v2957
      %v3102 = vunpack.c.l.b16 %v2958
      %v3103 = vunpack.c.l.b16 %v2959
      %v3104 = vunpack.c.l.b16 %v2960
      %v3105 = vunpack.c.l.b16 %v2961
      %v3106 = vunpack.c.l.b16 %v2962
      %v3107 = vunpack.c.l.b16 %v2963
      %v3108 = vunpack.c.l.b16 %v2964
      %v3109 = vunpack.c.l.b16 %v2965
      %v3110 = vunpack.c.l.b16 %v2966
      %v3111 = vunpack.c.l.b16 %v2967
      %v3112 = vunpack.c.l.b16 %v2968
      %v3113 = vunpack.c.l.b16 %v2969
      %v3114 = vunpack.c.l.b16 %v2970
      %v3115 = vunpack.c.l.b16 %v2971
      %v3116 = vunpack.c.l.b16 %v2972
      %v3117 = vunpack.c.l.b16 %v2973
      %v3118 = vunpack.c.l.b16 %v2974
      %v3119 = vunpack.c.l.b16 %v2975
      %v3120 = vunpack.c.l.b16 %v2976
      %v3121 = vunpack.c.l.b16 %v2977
      %v3122 = vunpack.c.l.b16 %v2978
      %v3123 = vunpack.c.l.b16 %v2979
      %v3124 = vunpack.c.l.b16 %v2980
      %v3125 = vunpack.c.l.b16 %v2981
      %v3126 = vunpack.c.l.b16 %v2982
      %v3127 = vunpack.c.l.b16 %v2983
      %v3128 = vunpack.c.l.b16 %v2984
      %v3129 = vunpack.c.l.b16 %v2985
      %v3130 = vunpack.c.l.b16 %v2986
      %v3131 = vunpack.c.l.b16 %v2987
      %v3132 = vpack.c.b16 %v3101, %v3100
      %v3133 = vpack.c.b16 %v3103, %v3102
      %v3134 = vpack.c.b16 %v3105, %v3104
      %v3135 = vpack.c.b16 %v3107, %v3106
      %v3136 = vpack.c.b16 %v3109, %v3108
      %v3137 = vpack.c.b16 %v3111, %v3110
      %v3138 = vpack.c.b16 %v3113, %v3112
      %v3139 = vpack.c.b16 %v3115, %v3114
      %v3140 = vpack.c.b16 %v3117, %v3116
      %v3141 = vpack.c.b16 %v3119, %v3118
      %v3142 = vpack.c.b16 %v3121, %v3120
      %v3143 = vpack.c.b16 %v3123, %v3122
      %v3144 = vpack.c.b16 %v3125, %v3124
      %v3145 = vpack.c.b16 %v3127, %v3126
      %v3146 = vpack.c.b16 %v3129, %v3128
      %v3147 = vpack.c.b16 %v3131, %v3130
      %3164 = vmatprep.subr.bf16.mxu0 0
      %3165 = vmatpush1.bf16.msra.mxu0 %v3132
      %3166 = vmatprep.subr.bf16.mxu0 0
      %3167 = vmatpush1.bf16.msra.mxu0 %v3133
      %3168 = vmatprep.subr.bf16.mxu0 0
      %3169 = vmatpush1.bf16.msra.mxu0 %v3134
      %3170 = vmatprep.subr.bf16.mxu0 0
      %3171 = vmatpush1.bf16.msra.mxu0 %v3135
      %3172 = vmatprep.subr.bf16.mxu0 0
      %3173 = vmatpush1.bf16.msra.mxu0 %v3136
      %3174 = vmatprep.subr.bf16.mxu0 0
      %3175 = vmatpush1.bf16.msra.mxu0 %v3137
      %3176 = vmatprep.subr.bf16.mxu0 0
      %3177 = vmatpush1.bf16.msra.mxu0 %v3138
      %3178 = vmatprep.subr.bf16.mxu0 0
      %3179 = vmatpush1.bf16.msra.mxu0 %v3139
      %3180 = vmatprep.subr.bf16.mxu0 0
      %3181 = vmatpush1.bf16.msra.mxu0 %v3140
      %3182 = vmatprep.subr.bf16.mxu0 0
      %3183 = vmatpush1.bf16.msra.mxu0 %v3141
      %3184 = vmatprep.subr.bf16.mxu0 0
      %3185 = vmatpush1.bf16.msra.mxu0 %v3142
      %3186 = vmatprep.subr.bf16.mxu0 0
      %3187 = vmatpush1.bf16.msra.mxu0 %v3143
      %3188 = vmatprep.subr.bf16.mxu0 0
      %3189 = vmatpush1.bf16.msra.mxu0 %v3144
      %3190 = vmatprep.subr.bf16.mxu0 0
      %3191 = vmatpush1.bf16.msra.mxu0 %v3145
      %3192 = vmatprep.subr.bf16.mxu0 0
      %3193 = vmatpush1.bf16.msra.mxu0 %v3146
      %3194 = vmatprep.subr.bf16.mxu0 0
      %3195 = vmatpush1.bf16.msra.mxu0 %v3147
      %3196 = vmatprep.mubr.bf16.mxu0 %v3037
      %3197 = vmatmul.mubr.bf16.gmra.mrb[0].mxu0 %v3036
      %v3198 = vpop.f32.mrb[0].mxu0
      %v3199 = vadd.f32 0.0, %v3198
      %v3200 = vpop.f32.mrb[0].mxu0
      %v3201 = vpop.f32.mrb[0].mxu0
      %v3202 = vadd.f32 0.0, %v3201
      %v3203 = vpop.f32.mrb[0].mxu0
      %3204 = vmatprep.mubr.bf16.mxu0 %v3039
      %3205 = vmatmul.mubr.bf16.gmra.mrb[0].mxu0 %v3038
      %v3206 = vpop.f32.mrb[0].mxu0
      %v3207 = vadd.f32 0.0, %v3206
      %v3208 = vpop.f32.mrb[0].mxu0
      %v3209 = vpop.f32.mrb[0].mxu0
      %v3210 = vadd.f32 0.0, %v3209
      %v3211 = vpop.f32.mrb[0].mxu0
      %3212 = vmatprep.mubr.bf16.mxu0 %v3041
      %3213 = vmatmul.mubr.bf16.gmra.mrb[0].mxu0 %v3040
      %v3214 = vpop.f32.mrb[0].mxu0
      %v3215 = vadd.f32 0.0, %v3214
      %v3216 = vpop.f32.mrb[0].mxu0
      %v3217 = vpop.f32.mrb[0].mxu0
      %v3218 = vadd.f32 0.0, %v3217
      %v3219 = vpop.f32.mrb[0].mxu0
      %3220 = vmatprep.mubr.bf16.mxu0 %v3043
      %3221 = vmatmul.mubr.bf16.gmra.mrb[0].mxu0 %v3042
      %v3222 = vpop.f32.mrb[0].mxu0
      %v3223 = vadd.f32 0.0, %v3222
      %v3224 = vpop.f32.mrb[0].mxu0
      %v3225 = vpop.f32.mrb[0].mxu0
      %v3226 = vadd.f32 0.0, %v3225
      %v3227 = vpop.f32.mrb[0].mxu0
      %3228 = vmatprep.mubr.bf16.mxu0 %v3045
      %3229 = vmatmul.mubr.bf16.gmra.mrb[0].mxu0 %v3044
      %v3230 = vpop.f32.mrb[0].mxu0
      %v3231 = vadd.f32 0.0, %v3230
      %v3232 = vpop.f32.mrb[0].mxu0
      %v3233 = vpop.f32.mrb[0].mxu0
      %v3234 = vadd.f32 0.0, %v3233
      %v3235 = vpop.f32.mrb[0].mxu0
      %3236 = vmatprep.mubr.bf16.mxu0 %v3047
      %3237 = vmatmul.mubr.bf16.gmra.mrb[0].mxu0 %v3046
      %v3238 = vpop.f32.mrb[0].mxu0
      %v3239 = vadd.f32 0.0, %v3238
      %v3240 = vpop.f32.mrb[0].mxu0
      %v3241 = vpop.f32.mrb[0].mxu0
      %v3242 = vadd.f32 0.0, %v3241
      %v3243 = vpop.f32.mrb[0].mxu0
      %3244 = vmatprep.mubr.bf16.mxu0 %v3049
      %3245 = vmatmul.mubr.bf16.gmra.mrb[0].mxu0 %v3048
      %v3246 = vpop.f32.mrb[0].mxu0
      %v3247 = vadd.f32 0.0, %v3246
      %v3248 = vpop.f32.mrb[0].mxu0
      %v3249 = vpop.f32.mrb[0].mxu0
      %v3250 = vadd.f32 0.0, %v3249
      %v3251 = vpop.f32.mrb[0].mxu0
      %3252 = vmatprep.mubr.bf16.mxu0 %v3051
      %3253 = vmatmul.mubr.bf16.gmra.mrb[0].mxu0 %v3050
      %v3254 = vpop.f32.mrb[0].mxu0
      %v3255 = vadd.f32 0.0, %v3254
      %v3256 = vpop.f32.mrb[0].mxu0
      %v3257 = vpop.f32.mrb[0].mxu0
      %v3258 = vadd.f32 0.0, %v3257
      %v3259 = vpop.f32.mrb[0].mxu0
      %3260 = vdwg.mxu0
      %v3261 = vadd.f32 %v2923, %v3199
      %v3262 = vadd.f32 %v2924, %v3202
      %v3263 = vadd.f32 %v2925, %v3207
      %v3264 = vadd.f32 %v2926, %v3210
      %v3265 = vadd.f32 %v2927, %v3215
      %v3266 = vadd.f32 %v2928, %v3218
      %v3267 = vadd.f32 %v2929, %v3223
      %v3268 = vadd.f32 %v2930, %v3226
      %v3269 = vadd.f32 %v2931, %v3231
      %v3270 = vadd.f32 %v2932, %v3234
      %v3271 = vadd.f32 %v2933, %v3239
      %v3272 = vadd.f32 %v2934, %v3242
      %v3273 = vadd.f32 %v2935, %v3247
      %v3274 = vadd.f32 %v2936, %v3250
      %v3275 = vadd.f32 %v2937, %v3255
      %v3276 = vadd.f32 %v2938, %v3258
      %v3277 = vld [vmem:[%s2] sm:$0x1]
      %v3279 = vlaneseq
      %v3280 = vshrl.u32 %v3279, 7
      %v3281 = vsub.s32 0, %v3280
      %v3282 = vrot.slane %v3277, %v3281
      %v3284 = vadd.f32 %v3261, %v3282
      %v3285 = vadd.f32 %v3262, %v3282
      %v3286 = vadd.f32 %v3263, %v3282
      %v3287 = vadd.f32 %v3264, %v3282
      %v3288 = vadd.f32 %v3265, %v3282
      %v3289 = vadd.f32 %v3266, %v3282
      %v3290 = vadd.f32 %v3267, %v3282
      %v3291 = vadd.f32 %v3268, %v3282
      %v3292 = vadd.f32 %v3269, %v3282
      %v3293 = vadd.f32 %v3270, %v3282
      %v3294 = vadd.f32 %v3271, %v3282
      %v3295 = vadd.f32 %v3272, %v3282
      %v3296 = vadd.f32 %v3273, %v3282
      %v3297 = vadd.f32 %v3274, %v3282
      %v3298 = vadd.f32 %v3275, %v3282
      %v3299 = vadd.f32 %v3276, %v3282
      %v3300 = vld [vmem:[%s254] sm:$0xff]
      %v3301 = vld [vmem:[%s254 + $0x8] sm:$0xff]
      %v3302 = vld [vmem:[%s254 + $0x10] sm:$0xff]
      %v3303 = vld [vmem:[%s254 + $0x18] sm:$0xff]
      %v3304 = vld [vmem:[%s254 + $0x20] sm:$0xff]
      %v3305 = vld [vmem:[%s254 + $0x28] sm:$0xff]
      %v3306 = vld [vmem:[%s254 + $0x30] sm:$0xff]
      %v3307 = vld [vmem:[%s254 + $0x38] sm:$0xff]
      %v3308 = vld [vmem:[%s254 + $0x40] sm:$0xff]
      %v3309 = vld [vmem:[%s254 + $0x48] sm:$0xff]
      %v3310 = vld [vmem:[%s254 + $0x50] sm:$0xff]
      %v3311 = vld [vmem:[%s254 + $0x58] sm:$0xff]
      %v3312 = vld [vmem:[%s254 + $0x60] sm:$0xff]
      %v3313 = vld [vmem:[%s254 + $0x68] sm:$0xff]
      %v3314 = vld [vmem:[%s254 + $0x70] sm:$0xff]
      %v3315 = vld [vmem:[%s254 + $0x78] sm:$0xff]
      %v3316 = vld [vmem:[%s259] sm:$0xff]
      %v3317 = vld [vmem:[%s259 + $0x8] sm:$0xff]
      %v3318 = vld [vmem:[%s259 + $0x10] sm:$0xff]
      %v3319 = vld [vmem:[%s259 + $0x18] sm:$0xff]
      %v3320 = vld [vmem:[%s259 + $0x20] sm:$0xff]
      %v3321 = vld [vmem:[%s259 + $0x28] sm:$0xff]
      %v3322 = vld [vmem:[%s259 + $0x30] sm:$0xff]
      %v3323 = vld [vmem:[%s259 + $0x38] sm:$0xff]
      %v3324 = vld [vmem:[%s259 + $0x40] sm:$0xff]
      %v3325 = vld [vmem:[%s259 + $0x48] sm:$0xff]
      %v3326 = vld [vmem:[%s259 + $0x50] sm:$0xff]
      %v3327 = vld [vmem:[%s259 + $0x58] sm:$0xff]
      %v3328 = vld [vmem:[%s259 + $0x60] sm:$0xff]
      %v3329 = vld [vmem:[%s259 + $0x68] sm:$0xff]
      %v3330 = vld [vmem:[%s259 + $0x70] sm:$0xff]
      %v3331 = vld [vmem:[%s259 + $0x78] sm:$0xff]
      %3333 = vset.pattern.permute.xlu0 0
      %3334 = vperm.xlu0 %3333, %v3316
      %v3335 = vpop.permute.xlu0 %3334
      %3338 = vset.pattern.permute.xlu0 0
      %3339 = vperm.xlu0 %3338, %v3317
      %v3340 = vpop.permute.xlu0 %3339
      %3343 = vset.pattern.permute.xlu0 0
      %3344 = vperm.xlu0 %3343, %v3318
      %v3345 = vpop.permute.xlu0 %3344
      %3348 = vset.pattern.permute.xlu0 0
      %3349 = vperm.xlu0 %3348, %v3319
      %v3350 = vpop.permute.xlu0 %3349
      %3353 = vset.pattern.permute.xlu0 0
      %3354 = vperm.xlu0 %3353, %v3320
      %v3355 = vpop.permute.xlu0 %3354
      %3358 = vset.pattern.permute.xlu0 0
      %3359 = vperm.xlu0 %3358, %v3321
      %v3360 = vpop.permute.xlu0 %3359
      %3363 = vset.pattern.permute.xlu0 0
      %3364 = vperm.xlu0 %3363, %v3322
      %v3365 = vpop.permute.xlu0 %3364
      %3368 = vset.pattern.permute.xlu0 0
      %3369 = vperm.xlu0 %3368, %v3323
      %v3370 = vpop.permute.xlu0 %3369
      %3373 = vset.pattern.permute.xlu0 0
      %3374 = vperm.xlu0 %3373, %v3324
      %v3375 = vpop.permute.xlu0 %3374
      %3378 = vset.pattern.permute.xlu0 0
      %3379 = vperm.xlu0 %3378, %v3325
      %v3380 = vpop.permute.xlu0 %3379
      %3383 = vset.pattern.permute.xlu0 0
      %3384 = vperm.xlu0 %3383, %v3326
      %v3385 = vpop.permute.xlu0 %3384
      %3388 = vset.pattern.permute.xlu0 0
      %3389 = vperm.xlu0 %3388, %v3327
      %v3390 = vpop.permute.xlu0 %3389
      %3393 = vset.pattern.permute.xlu0 0
      %3394 = vperm.xlu0 %3393, %v3328
      %v3395 = vpop.permute.xlu0 %3394
      %3398 = vset.pattern.permute.xlu0 0
      %3399 = vperm.xlu0 %3398, %v3329
      %v3400 = vpop.permute.xlu0 %3399
      %3403 = vset.pattern.permute.xlu0 0
      %3404 = vperm.xlu0 %3403, %v3330
      %v3405 = vpop.permute.xlu0 %3404
      %3408 = vset.pattern.permute.xlu0 0
      %3409 = vperm.xlu0 %3408, %v3331
      %v3410 = vpop.permute.xlu0 %3409
      %v3412 = vmul.f32 %v3284, %v3335
      %v3413 = vmul.f32 %v3285, %v3340
      %v3414 = vmul.f32 %v3286, %v3345
      %v3415 = vmul.f32 %v3287, %v3350
      %v3416 = vmul.f32 %v3288, %v3355
      %v3417 = vmul.f32 %v3289, %v3360
      %v3418 = vmul.f32 %v3290, %v3365
      %v3419 = vmul.f32 %v3291, %v3370
      %v3420 = vmul.f32 %v3292, %v3375
      %v3421 = vmul.f32 %v3293, %v3380
      %v3422 = vmul.f32 %v3294, %v3385
      %v3423 = vmul.f32 %v3295, %v3390
      %v3424 = vmul.f32 %v3296, %v3395
      %v3425 = vmul.f32 %v3297, %v3400
      %v3426 = vmul.f32 %v3298, %v3405
      %v3427 = vmul.f32 %v3299, %v3410
      %v3428 = vadd.f32 %v3300, %v3412
      %v3429 = vadd.f32 %v3301, %v3413
      %v3430 = vadd.f32 %v3302, %v3414
      %v3431 = vadd.f32 %v3303, %v3415
      %v3432 = vadd.f32 %v3304, %v3416
      %v3433 = vadd.f32 %v3305, %v3417
      %v3434 = vadd.f32 %v3306, %v3418
      %v3435 = vadd.f32 %v3307, %v3419
      %v3436 = vadd.f32 %v3308, %v3420
      %v3437 = vadd.f32 %v3309, %v3421
      %v3438 = vadd.f32 %v3310, %v3422
      %v3439 = vadd.f32 %v3311, %v3423
      %v3440 = vadd.f32 %v3312, %v3424
      %v3441 = vadd.f32 %v3313, %v3425
      %v3442 = vadd.f32 %v3314, %v3426
      %v3443 = vadd.f32 %v3315, %v3427
      %3444 = vst [vmem:[%s264] sm:$0xff] %v3428
      %3445 = vst [vmem:[%s264 + $0x8] sm:$0xff] %v3429
      %3446 = vst [vmem:[%s264 + $0x10] sm:$0xff] %v3430
      %3447 = vst [vmem:[%s264 + $0x18] sm:$0xff] %v3431
      %3448 = vst [vmem:[%s264 + $0x20] sm:$0xff] %v3432
      %3449 = vst [vmem:[%s264 + $0x28] sm:$0xff] %v3433
      %3450 = vst [vmem:[%s264 + $0x30] sm:$0xff] %v3434
      %3451 = vst [vmem:[%s264 + $0x38] sm:$0xff] %v3435
      %3452 = vst [vmem:[%s264 + $0x40] sm:$0xff] %v3436
      %3453 = vst [vmem:[%s264 + $0x48] sm:$0xff] %v3437
      %3454 = vst [vmem:[%s264 + $0x50] sm:$0xff] %v3438
      %3455 = vst [vmem:[%s264 + $0x58] sm:$0xff] %v3439
      %3456 = vst [vmem:[%s264 + $0x60] sm:$0xff] %v3440
      %3457 = vst [vmem:[%s264 + $0x68] sm:$0xff] %v3441
      %3458 = vst [vmem:[%s264 + $0x70] sm:$0xff] %v3442
      %3459 = vst [vmem:[%s264 + $0x78] sm:$0xff] %v3443
      %p3460 = scmp.lt.s32.totalorder %s16, 1
      %s3461 = scalar_select %p3460, %s16, 1
      %s3462 = smul.addr %s3461, 16
      %s3463 = smul.addr %s3462, 8
      %s3464 = scalar_lea.vmem %s5, %s3463
      // Predicated region
      $region41: #{forward_with_aux.3} parent=39 // pred_check
        %p3465 = pneg %p154
      $region42: #{forward_with_aux.3} parent=39 // pred_check_branch
        %3467 = sbr.rel (%p3465) target = $region44
      $region43: #{forward_with_aux.3} parent=39 // pred_region
        _
      $region44: #{forward_with_aux.3} parent=39 // pred_fallthru
        _
    $region40: #{forward_with_aux.3} parent=5 // pred_fallthru
      _
    %p3468 = scmp.le.s32.totalorder 2, %s11
    // Predicated region
    $region45: #{forward_with_aux.3} parent=5 // pred_check
      %p3469 = pneg %p3468
    $region46: #{forward_with_aux.3} parent=5 // pred_check_branch
      %3471 = sbr.rel (%p3469) target = $region48
    $region47: #{forward_with_aux.3} parent=5 // pred_region
      %s3472 = ssub.s32 %s11, 2
      // Predicated region
      $region49: #{forward_with_aux.3} parent=47 // pred_check
        %p3473 = pneg %p160
      $region50: #{forward_with_aux.3} parent=47 // pred_check_branch
        %3475 = sbr.rel (%p3473) target = $region52
      $region51: #{forward_with_aux.3} parent=47 // pred_region
        %p3476 = scmp.lt.s32.totalorder %s17, 1
        %s3477 = scalar_select %p3476, %s17, 1
        %s3478 = smul.addr %s3477, 16
        %s3479 = smul.addr %s3478, 8
        %s3480 = scalar_lea.vmem %s5, %s3479
      $region52: #{forward_with_aux.3} parent=47 // pred_fallthru
        _
    $region48: #{forward_with_aux.3} parent=5 // pred_fallthru
      _
  $region6: #{forward_with_aux.3} parent=0 // loop_footer
    %s15 = sadd.s32 1, %s11
  $region7: #{forward_with_aux.3} parent=0 // loop_footer_branch
    %10 = sbr.rel target = $region3
  $region8: #{forward_with_aux.3} parent=0 // loop_exit
    _

</llo_original>
